<compile_context>
chip_gen: v7x
topology: tpu7x:2x2x1
jax: 0.10.0
libtpu: 0.0.40
codegen_flags: <defaults>
</compile_context>

<pallas_src>
import numpy as np
from math import factorial

import jax
import jax.numpy as jnp
from jax import lax
from jax.experimental import pallas as pl
from jax.experimental.pallas import tpu as pltpu


NS = 8  # padded state width (>= filter order, full f32 sublane tile)


# -----------------------------------------------------------------------------
# Deterministic filter design (host-side, no learnable params).
# Mirrors scipy.signal.bessel(N, cutoff_hz, fs=fs, norm='mag').
# -----------------------------------------------------------------------------
def bessel_ba(order: int, cutoff_hz: float, fs: float):
    N = order
    theta = np.array(
        [factorial(2 * N - k) / (2.0 ** (N - k) * factorial(k) * factorial(N - k))
         for k in range(N, -1, -1)],
        dtype=np.float64,
    )
    poles = np.roots(theta)                      # 'delay'-normalized analog poles
    k_gain = np.real(np.prod(-poles))            # H(0) = 1

    def mag2(w):
        return (k_gain ** 2) / np.abs(np.prod(1j * w - poles)) ** 2

    lo, hi = 1e-6, 2.0
    while mag2(hi) > 0.5:
        hi *= 2.0
    for _ in range(200):                         # bisection for the -3 dB point
        mid = 0.5 * (lo + hi)
        if mag2(mid) > 0.5:
            lo = mid
        else:
            hi = mid
    w3 = 0.5 * (lo + hi)
    poles = poles / w3                           # norm='mag'

    Wn = 2.0 * cutoff_hz / fs
    fs2 = 2.0
    warped = 2.0 * fs2 * np.tan(np.pi * Wn / fs2)
    p_lp = warped * poles
    k_lp = np.real(np.prod(-p_lp))
    p_d = (2 * fs2 + p_lp) / (2 * fs2 - p_lp)    # bilinear transform
    z_d = -np.ones(N)
    k_d = k_lp / np.real(np.prod(2 * fs2 - p_lp))
    b = k_d * np.real(np.poly(z_d))
    a = np.real(np.poly(p_d))
    return b, a


# -----------------------------------------------------------------------------
# Host-side (float64) construction of the block filtering operators.
# Transposed direct-form-II state space:
#   y[n] = C s[n-1] + D x[n] ,   s[n] = F s[n-1] + G x[n] ,  s[-1] = 0
# Per time block of length L with incoming state sigma0:
#   y_blk   = x_blk @ Tt + sigma0 @ St        (Tt[j,t] = h[t-j], St[i,t]=(C F^t)[i])
#   sigma_L = sigma0 @ Pt + x_blk @ Qt        (Pt = (F^L)^T,  Qt[j] = F^{L-1-j} G)
# -----------------------------------------------------------------------------
def block_filter_operators(b, a, L, ns=NS):
    b = np.asarray(b, dtype=np.float64)
    a = np.asarray(a, dtype=np.float64)
    a0 = a[0]
    b = b / a0
    a = a / a0
    N = len(a) - 1
    assert N <= ns, "filter order exceeds padded state width"
    bb = np.zeros(N + 1, dtype=np.float64)
    bb[: len(b)] = b[: N + 1]

    F = np.zeros((N, N), dtype=np.float64)
    F[:, 0] = -a[1:]
    if N > 1:
        F[: N - 1, 1:] = np.eye(N - 1)
    G = bb[1:] - a[1:] * bb[0]
    C = np.zeros(N, dtype=np.float64)
    C[0] = 1.0
    D = bb[0]

    CFt = np.zeros((L, N), dtype=np.float64)     # row t: C F^t
    FtG = np.zeros((L, N), dtype=np.float64)     # row t: F^t G
    CFt[0] = C
    FtG[0] = G
    for t in range(1, L):
        CFt[t] = CFt[t - 1] @ F
        FtG[t] = F @ FtG[t - 1]
    P = np.linalg.matrix_power(F, L)

    h = np.zeros(L, dtype=np.float64)            # impulse response
    h[0] = D
    if L > 1:
        h[1:] = CFt[: L - 1] @ G                 # h[m] = C F^{m-1} G

    idx = np.arange(L)
    diff = idx[None, :] - idx[:, None]           # [j, t] -> t - j
    Tt = np.where(diff >= 0, h[np.clip(diff, 0, L - 1)], 0.0)   # (L, L)

    St = np.zeros((ns, L), dtype=np.float64)
    St[:N, :] = CFt.T
    Qt = np.zeros((L, ns), dtype=np.float64)
    Qt[:, :N] = FtG[::-1, :]
    Pt = np.zeros((ns, ns), dtype=np.float64)
    Pt[:N, :N] = P.T

    as_f32 = lambda m: jnp.asarray(m, dtype=jnp.float32)
    return as_f32(Tt), as_f32(St), as_f32(Pt), as_f32(Qt)


# -----------------------------------------------------------------------------
# Pallas kernel: per (row block, time block) -> two MXU matmuls + state update.
# -----------------------------------------------------------------------------
def bessel_block_kernel(xmax_ref, x_ref, tt_ref, st_ref, pt_ref, qt_ref,
                        o_ref, state_ref):
    # xmax_ref : SMEM (1,) f32
    # x_ref    : VMEM (RB, L)   rows x time-block (time on lanes)
    # tt_ref   : VMEM (L, L)    in-block impulse-response operator
    # st_ref   : VMEM (NS, L)   carried-state -> output operator
    # pt_ref   : VMEM (NS, NS)  state propagation
    # qt_ref   : VMEM (L, NS)   input -> new-state operator
    # state_ref: VMEM (RB, NS)  persistent scratch across time blocks
    @pl.when(pl.program_id(1) == 0)
    def _():                                     # zero initial conditions
        state_ref[...] = jnp.zeros_like(state_ref)

    x = x_ref[...]
    s = state_ref[...]

    hp = jax.lax.Precision.HIGHEST
    y = jnp.dot(x, tt_ref[...], precision=hp,
                preferred_element_type=jnp.float32)
    y = y + jnp.dot(s, st_ref[...], precision=hp,
                    preferred_element_type=jnp.float32)

    state_ref[...] = (
        jnp.dot(s, pt_ref[...], precision=hp, preferred_element_type=jnp.float32)
        + jnp.dot(x, qt_ref[...], precision=hp, preferred_element_type=jnp.float32)
    )

    # xmax*clamp(lfilter(x/xmax),-1,1) == clip(lfilter(x), -xmax, xmax)
    xmax = xmax_ref[0]
    o_ref[...] = jnp.clip(y, -xmax, xmax).astype(o_ref.dtype)


def bessel_filter_forward(x, b, a, *, block_len=256):
    """x: (B, C, T).  b, a: float64 numpy coefficient vectors."""
    assert block_len % 128 == 0
    B, C, T = x.shape
    R = B * C
    L = int(block_len)

    xr = jnp.reshape(x, (R, T)).astype(jnp.float32)          # time on lanes
    xmax = jnp.reshape(jnp.max(jnp.abs(xr)), (1,)).astype(jnp.float32)

    nt = (T + L - 1) // L
    T_pad = nt * L
    if T_pad != T:                                            # causal -> zero-pad tail
        xr = jnp.pad(xr, ((0, 0), (0, T_pad - T)))

    # Row blocking (rows are embarrassingly parallel; time must stay sequential).
    RB = R
    if R > 256 and R % 8 == 0:
        RB = 256
        while R % RB != 0:
            RB -= 8
    nr = R // RB

    Tt, St, Pt, Qt = block_filter_operators(b, a, L, NS)

    grid_spec = pltpu.PrefetchScalarGridSpec(
        num_scalar_prefetch=0,
        grid=(nr, nt),
        in_specs=[
            pl.BlockSpec(memory_space=pltpu.MemorySpace.SMEM),        # xmax
            pl.BlockSpec((RB, L), lambda r, t: (r, t)),               # x block
            pl.BlockSpec((L, L), lambda r, t: (0, 0)),                # Tt (resident)
            pl.BlockSpec((NS, L), lambda r, t: (0, 0)),               # St
            pl.BlockSpec((NS, NS), lambda r, t: (0, 0)),              # Pt
            pl.BlockSpec((L, NS), lambda r, t: (0, 0)),               # Qt
        ],
        out_specs=pl.BlockSpec((RB, L), lambda r, t: (r, t)),
        scratch_shapes=[pltpu.VMEM((RB, NS), jnp.float32)],
    )

    yr = pl.pallas_call(
        bessel_block_kernel,
        out_shape=jax.ShapeDtypeStruct((R, T_pad), jnp.float32),
        grid_spec=grid_spec,
        compiler_params=pltpu.CompilerParams(
            dimension_semantics=("parallel", "arbitrary"),
            vmem_limit_bytes=32 * 1024 * 1024,
        ),
    )(xmax, xr, Tt, St, Pt, Qt)

    return jnp.reshape(yr[:, :T], (B, C, T)).astype(x.dtype)


# -----------------------------------------------------------------------------
# Pure-numpy float64 reference of the exact forward semantics.
# -----------------------------------------------------------------------------
def ref_forward(x, b, a):
    xmax = np.max(np.abs(x))
    xn = x / xmax
    bn, an = b / a[0], a / a[0]
    T = x.shape[-1]
    order = len(a) - 1
    xf = xn.reshape(-1, T)
    yf = np.zeros_like(xf)
    for n in range(T):
        acc = np.zeros(xf.shape[0], dtype=np.float64)
        for k in range(len(b)):
            if n - k >= 0:
                acc = acc + bn[k] * xf[:, n - k]
        for k in range(1, order + 1):
            if n - k >= 0:
                acc = acc - an[k] * yf[:, n - k]
        yf[:, n] = acc
    y = yf.reshape(x.shape)
    return np.clip(y, -1.0, 1.0) * xmax


if __name__ == "__main__":
    bessel_order, cutoff_hz, fs = 4, 100.0, 1000.0
    b, a = bessel_ba(bessel_order, cutoff_hz, fs)

    key = jax.random.PRNGKey(0)
    B, C, T = 2, 4, 400          # T not a multiple of the block -> exercises padding
    x = 3.0 * jax.random.normal(key, (B, C, T), dtype=jnp.float32)

    y = bessel_filter_forward(x, b, a, block_len=256)
    y = jax.block_until_ready(y)

    y_ref = ref_forward(np.asarray(x, dtype=np.float64), b, a)
    assert y.shape == (B, C, T)
    err = float(np.max(np.abs(np.asarray(y, dtype=np.float64) - y_ref)))
    assert np.allclose(np.asarray(y, dtype=np.float64), y_ref,
                       atol=2e-3, rtol=2e-3), err

    print("KERNEL_OK")
</pallas_src>

<mosaic_0001>
module attributes {stable_mosaic.version = 11 : i64} {
  func.func @bessel_block_kernel(%arg0: i32, %arg1: i32, %arg2: memref<1xf32, #tpu.memory_space<smem>>, %arg3: memref<8x256xf32, #tpu.memory_space<vmem>>, %arg4: memref<256x256xf32, #tpu.memory_space<vmem>>, %arg5: memref<8x256xf32, #tpu.memory_space<vmem>>, %arg6: memref<8x8xf32, #tpu.memory_space<vmem>>, %arg7: memref<256x8xf32, #tpu.memory_space<vmem>>, %arg8: memref<8x256xf32, #tpu.memory_space<vmem>>, %arg9: memref<8x8xf32, #tpu.memory_space<vmem>>) attributes {dimension_semantics = [#tpu.dimension_semantics<parallel>, #tpu.dimension_semantics<arbitrary>], iteration_bounds = array<i64: 1, 2>, scalar_prefetch = 0 : i64, scratch_operands = 1 : i64, tpu.core_type = #tpu.core_type<tc>, window_params = [{transform_indices = @transform_0, window_bounds = array<i64: 1>}, {transform_indices = @transform_1, window_bounds = array<i64: 8, 256>}, {pipeline_mode = #tpu.pipeline_mode<synchronous>, transform_indices = @transform_2, window_bounds = array<i64: 256, 256>}, {pipeline_mode = #tpu.pipeline_mode<synchronous>, transform_indices = @transform_3, window_bounds = array<i64: 8, 256>}, {pipeline_mode = #tpu.pipeline_mode<synchronous>, transform_indices = @transform_4, window_bounds = array<i64: 8, 8>}, {pipeline_mode = #tpu.pipeline_mode<synchronous>, transform_indices = @transform_5, window_bounds = array<i64: 256, 8>}, {transform_indices = @transform_6, window_bounds = array<i64: 8, 256>}]} {
    %c0_i32 = arith.constant 0 : i32
    %0 = arith.cmpi eq, %arg1, %c0_i32 : i32
    %1 = arith.extui %0 : i1 to i32
    %c0_i32_0 = arith.constant 0 : i32
    %2 = arith.cmpi ne, %1, %c0_i32_0 : i32
    scf.if %2 {
      %cst_21 = arith.constant 0.000000e+00 : f32
      %23 = vector.broadcast %cst_21 : f32 to vector<8x8xf32>
      %c0_22 = arith.constant 0 : index
      %c0_23 = arith.constant 0 : index
      %24 = vector.load %arg9[%c0_22, %c0_23] : memref<8x8xf32, #tpu.memory_space<vmem>>, vector<8x8xf32>
      tpu.vector_store %arg9[%c0_22, %c0_23], %23 {strides = array<i32>} : memref<8x8xf32, #tpu.memory_space<vmem>>, vector<8x8xf32>,
    } else {
    }
    %c0 = arith.constant 0 : index
    %c0_1 = arith.constant 0 : index
    %3 = vector.load %arg3[%c0, %c0_1] : memref<8x256xf32, #tpu.memory_space<vmem>>, vector<8x256xf32>
    %c0_2 = arith.constant 0 : index
    %c0_3 = arith.constant 0 : index
    %4 = vector.load %arg9[%c0_2, %c0_3] : memref<8x8xf32, #tpu.memory_space<vmem>>, vector<8x8xf32>
    %c0_4 = arith.constant 0 : index
    %c0_5 = arith.constant 0 : index
    %5 = vector.load %arg4[%c0_4, %c0_5] : memref<256x256xf32, #tpu.memory_space<vmem>>, vector<256x256xf32>
    %cst = arith.constant dense<0.000000e+00> : vector<8x256xf32>
    %6 = tpu.matmul %3, %5, %cst {dimension_numbers = #tpu.dot_dimension_numbers<[1], [0], [0], [1], [0, 0, 1, 1], [], []>, precision = #tpu.contract_precision<fp32>} : vector<8x256xf32>, vector<256x256xf32>, vector<8x256xf32> -> vector<8x256xf32>
    %c0_6 = arith.constant 0 : index
    %c0_7 = arith.constant 0 : index
    %7 = vector.load %arg5[%c0_6, %c0_7] : memref<8x256xf32, #tpu.memory_space<vmem>>, vector<8x256xf32>
    %cst_8 = arith.constant dense<0.000000e+00> : vector<8x256xf32>
    %8 = tpu.matmul %4, %7, %cst_8 {dimension_numbers = #tpu.dot_dimension_numbers<[1], [0], [0], [1], [0, 0, 1, 1], [], []>, precision = #tpu.contract_precision<fp32>} : vector<8x8xf32>, vector<8x256xf32>, vector<8x256xf32> -> vector<8x256xf32>
    %9 = arith.addf %6, %8 : vector<8x256xf32>
    %c0_9 = arith.constant 0 : index
    %c0_10 = arith.constant 0 : index
    %10 = vector.load %arg6[%c0_9, %c0_10] : memref<8x8xf32, #tpu.memory_space<vmem>>, vector<8x8xf32>
    %cst_11 = arith.constant dense<0.000000e+00> : vector<8x8xf32>
    %11 = tpu.matmul %4, %10, %cst_11 {dimension_numbers = #tpu.dot_dimension_numbers<[1], [0], [0], [1], [0, 0, 1, 1], [], []>, precision = #tpu.contract_precision<fp32>} : vector<8x8xf32>, vector<8x8xf32>, vector<8x8xf32> -> vector<8x8xf32>
    %c0_12 = arith.constant 0 : index
    %c0_13 = arith.constant 0 : index
    %12 = vector.load %arg7[%c0_12, %c0_13] : memref<256x8xf32, #tpu.memory_space<vmem>>, vector<256x8xf32>
    %cst_14 = arith.constant dense<0.000000e+00> : vector<8x8xf32>
    %13 = tpu.matmul %3, %12, %cst_14 {dimension_numbers = #tpu.dot_dimension_numbers<[1], [0], [0], [1], [0, 0, 1, 1], [], []>, precision = #tpu.contract_precision<fp32>} : vector<8x256xf32>, vector<256x8xf32>, vector<8x8xf32> -> vector<8x8xf32>
    %14 = arith.addf %11, %13 : vector<8x8xf32>
    %c0_15 = arith.constant 0 : index
    %c0_16 = arith.constant 0 : index
    %15 = vector.load %arg9[%c0_15, %c0_16] : memref<8x8xf32, #tpu.memory_space<vmem>>, vector<8x8xf32>
    tpu.vector_store %arg9[%c0_15, %c0_16], %14 {strides = array<i32>} : memref<8x8xf32, #tpu.memory_space<vmem>>, vector<8x8xf32>,
    %c0_17 = arith.constant 0 : index
    %16 = memref.load %arg2[%c0_17] : memref<1xf32, #tpu.memory_space<smem>>
    %cst_18 = arith.constant 0.000000e+00 : f32
    %17 = arith.subf %cst_18, %16 : f32
    %18 = vector.broadcast %17 : f32 to vector<8x256xf32>
    %19 = arith.maximumf %18, %9 : vector<8x256xf32>
    %20 = vector.broadcast %16 : f32 to vector<8x256xf32>
    %21 = arith.minimumf %20, %19 : vector<8x256xf32>
    %c0_19 = arith.constant 0 : index
    %c0_20 = arith.constant 0 : index
    %22 = vector.load %arg8[%c0_19, %c0_20] : memref<8x256xf32, #tpu.memory_space<vmem>>, vector<8x256xf32>
    tpu.vector_store %arg8[%c0_19, %c0_20], %21 {strides = array<i32>} : memref<8x256xf32, #tpu.memory_space<vmem>>, vector<8x256xf32>,
    return
  }
  func.func @transform_0(%arg0: i32, %arg1: i32) -> i32 {
    %c0_i32 = arith.constant 0 : i32
    %c0_i32_0 = arith.constant 0 : i32
    return %c0_i32 : i32
  }
  func.func @transform_1(%arg0: i32, %arg1: i32) -> (i32, i32) {
    %c0_i32 = arith.constant 0 : i32
    return %arg0, %arg1 : i32, i32
  }
  func.func @transform_2(%arg0: i32, %arg1: i32) -> (i32, i32) {
    %c0_i32 = arith.constant 0 : i32
    %c0_i32_0 = arith.constant 0 : i32
    %c0_i32_1 = arith.constant 0 : i32
    return %c0_i32, %c0_i32_0 : i32, i32
  }
  func.func @transform_3(%arg0: i32, %arg1: i32) -> (i32, i32) {
    %c0_i32 = arith.constant 0 : i32
    %c0_i32_0 = arith.constant 0 : i32
    %c0_i32_1 = arith.constant 0 : i32
    return %c0_i32, %c0_i32_0 : i32, i32
  }
  func.func @transform_4(%arg0: i32, %arg1: i32) -> (i32, i32) {
    %c0_i32 = arith.constant 0 : i32
    %c0_i32_0 = arith.constant 0 : i32
    %c0_i32_1 = arith.constant 0 : i32
    return %c0_i32, %c0_i32_0 : i32, i32
  }
  func.func @transform_5(%arg0: i32, %arg1: i32) -> (i32, i32) {
    %c0_i32 = arith.constant 0 : i32
    %c0_i32_0 = arith.constant 0 : i32
    %c0_i32_1 = arith.constant 0 : i32
    return %c0_i32, %c0_i32_0 : i32, i32
  }
  func.func @transform_6(%arg0: i32, %arg1: i32) -> (i32, i32) {
    %c0_i32 = arith.constant 0 : i32
    return %arg0, %arg1 : i32, i32
  }
}

</mosaic_0001>

<llo_original>
// kernel: tpu_custom_call.1
$region0: #{tpu_custom_call.1}
  #allocation0 [shape = 'u32[]', space=smem, size = 0x4, offset = 0x4, fixed_abs, tag = 'smem constant byte address 0x4 - core index']
  #allocation1 [shape = 'u32[144,128]{1,0:T(1,128)}', space=vmem, size = 0x12000, scoped, tag = 'internal scratch']
  #allocation2 [shape = 'f32[8,8]{1,0:T(8,128)}', space=vmem, size = 0x1000, scoped, tag = 'scratch operand']
  #allocation3 [shape = 'f32[1]{0:T(128)S(6)}', space=smem, size = 0x200, scoped, tag = 'scoped memory for tpu_custom_call.1']
  %s0 = inlined_call_operand.<no memory space> [shape: f32[1], index: 0, kind: input, shape index: {}]
  %s1 = inlined_call_operand.vmem [shape: f32[8,512], index: 1, kind: input, shape index: {}]
  %s2 = inlined_call_operand.hbm [shape: f32[256,256], index: 2, kind: input, shape index: {}]
  %s3 = inlined_call_operand.vmem [shape: f32[8,256], index: 3, kind: input, shape index: {}]
  %s4 = inlined_call_operand.vmem [shape: f32[8,8], index: 4, kind: input, shape index: {}]
  %s5 = inlined_call_operand.vmem [shape: f32[256,8], index: 5, kind: input, shape index: {}]
  %s6 = inlined_call_operand.hbm [shape: f32[8,512], index: 6, kind: output, shape index: {}]
  %s7 = sld [smem:[#allocation0]]
  $region65: #{tpu_custom_call.1} parent=0
    _
  %s9 = ssub.s32 1, %s7
  %s10 = scalar_select 0, %s9, %s7
  %11 = sst [smem:[#allocation3]] %s0
  $region1: #{tpu_custom_call.1} parent=0
    #allocation4 [shape = 'u8[262144]{0}', space=vmem, size = 0x40000, scoped, tag = 'input window, operand 2, single buffered']
    #allocation5 [shape = 's32[2]{0}', space=sflag, size = 0x8, scoped, tag = 'scoped memory for tpu_custom_call.1']
    #allocation6 [shape = 's32[2]{0}', space=sflag, size = 0x8, scoped, tag = 'scoped memory for tpu_custom_call.1']
    #allocation7 [shape = 'u8[16384]{0}', space=vmem, size = 0x4000, scoped, tag = 'output window, operand 0']
    %12 = vsyncpa [#allocation5], 0
    %13 = vsyncpa [#allocation6], 0
    %s14 = scalar_lea.sflag [#allocation6], 1
    %15 = vsyncpa %s14, 0
    loop: start=0, step=1, limit=4
    $region2: #{tpu_custom_call.1} parent=1 // loop_pre_header
      _
    $region3: #{tpu_custom_call.1} parent=1 // loop_header
      %s17 = sphi 0, %s21
      %p18 = scmp.ge.s32.totalorder %s17, 4
      %s24 = sphi 0, %s36
      %s25 = sphi 0, %s32
      %s26 = sphi 0, %s24
      %s27 = sphi 0, %s25
      %s28 = sphi 0, %s26
      %s29 = sphi 0, %s27
      %s37 = sphi 0, %s37
      %s39 = sphi 0, %s37
      %s40 = sphi 0, %s39
      %s54 = sphi 0, %s40
      %s62 = sphi 0, %s64
      %s65 = sphi 0, %s62
      %s66 = sphi 0, %s65
      %s82 = sphi 0, %s66
      %s86 = sphi 0, %s86
      %s88 = sphi 0, %s86
      %s89 = sphi 0, %s88
      %s103 = sphi 0, %s89
      %s107 = sphi 0, %s107
      %s109 = sphi 0, %s107
      %s110 = sphi 0, %s109
      %s124 = sphi 0, %s110
      %s128 = sphi 0, %s128
      %s130 = sphi 0, %s128
      %s131 = sphi 0, %s130
      %s145 = sphi 0, %s131
      %s149 = sphi 0, %s149
      %s151 = sphi 0, %s149
      %s152 = sphi 0, %s151
      %s166 = sphi 0, %s152
      %s174 = sphi 0, %s176
      %s177 = sphi 0, %s174
      %s178 = sphi 0, %s177
      %s194 = sphi 0, %s178
    $region4: #{tpu_custom_call.1} parent=1 // loop_header_branch
      %20 = sbr.rel (%p18) target = $region8
    $region5: #{tpu_custom_call.1} parent=1 // loop_body
      %s22 = ssub.s32 %s17, 1
      %s23 = ssub.s32 %s17, 2
      %s30 = sadd.s32 1, %s25
      %p31 = scmp.ge.s32.totalorder %s30, 2
      %s32 = scalar_select %p31, 0, %s30
      %s33 = sadd.s32 1, %s24
      %s34 = scalar_select %p31, %s33, %s24
      %p35 = scmp.ge.s32.totalorder %s34, 1
      %s36 = scalar_select %p35, 0, %s34
      %s38 = sadd.s32 %s37, 1
      %p41 = scmp.eq.s32.totalorder %s17, 1
      %p42 = scmp.ne.s32.totalorder %s37, %s39
      %p43 = scmp.eq.s32.totalorder %s17, 0
      %p44 = por %p42, %p43
      %p45 = scmp.ne.s32.totalorder %s37, %s39
      %p46 = scmp.eq.s32.totalorder %s22, 1
      %p47 = por %p45, %p46
      %p48 = scmp.ne.s32.totalorder %s39, %s40
      %p49 = scmp.eq.s32.totalorder %s22, 0
      %p50 = por %p48, %p49
      %p51 = scmp.ne.s32.totalorder %s39, %s40
      %p52 = scmp.eq.s32.totalorder %s23, 1
      %p53 = por %p51, %p52
      %p55 = scmp.ne.s32.totalorder %s40, %s54
      %p56 = scmp.eq.s32.totalorder %s23, 0
      %p57 = por %p55, %p56
      %s58 = ssub.s32 %s24, %s36
      %s59 = ssub.s32 %s25, %s32
      %s60 = sor.u32 %s58, %s59
      %p61 = scmp.eq.s32.totalorder %s60, 0
      %s63 = sadd.s32 %s62, 1
      %s64 = scalar_select %p61, %s62, %s63
      %p67 = pneg %p61
      %p68 = scmp.eq.s32.totalorder %s17, 1
      %p69 = por %p67, %p68
      %p70 = scmp.ne.s32.totalorder %s62, %s65
      %p71 = scmp.eq.s32.totalorder %s17, 0
      %p72 = por %p70, %p71
      %p73 = scmp.ne.s32.totalorder %s62, %s65
      %p74 = scmp.eq.s32.totalorder %s22, 1
      %p75 = por %p73, %p74
      %p76 = scmp.ne.s32.totalorder %s65, %s66
      %p77 = scmp.eq.s32.totalorder %s22, 0
      %p78 = por %p76, %p77
      %p79 = scmp.ne.s32.totalorder %s65, %s66
      %p80 = scmp.eq.s32.totalorder %s23, 1
      %p81 = por %p79, %p80
      %p83 = scmp.ne.s32.totalorder %s66, %s82
      %p84 = scmp.eq.s32.totalorder %s23, 0
      %p85 = por %p83, %p84
      %s87 = sadd.s32 %s86, 1
      %p90 = scmp.eq.s32.totalorder %s17, 1
      %p91 = scmp.ne.s32.totalorder %s86, %s88
      %p92 = scmp.eq.s32.totalorder %s17, 0
      %p93 = por %p91, %p92
      %p94 = scmp.ne.s32.totalorder %s86, %s88
      %p95 = scmp.eq.s32.totalorder %s22, 1
      %p96 = por %p94, %p95
      %p97 = scmp.ne.s32.totalorder %s88, %s89
      %p98 = scmp.eq.s32.totalorder %s22, 0
      %p99 = por %p97, %p98
      %p100 = scmp.ne.s32.totalorder %s88, %s89
      %p101 = scmp.eq.s32.totalorder %s23, 1
      %p102 = por %p100, %p101
      %p104 = scmp.ne.s32.totalorder %s89, %s103
      %p105 = scmp.eq.s32.totalorder %s23, 0
      %p106 = por %p104, %p105
      %s108 = sadd.s32 %s107, 1
      %p111 = scmp.eq.s32.totalorder %s17, 1
      %p112 = scmp.ne.s32.totalorder %s107, %s109
      %p113 = scmp.eq.s32.totalorder %s17, 0
      %p114 = por %p112, %p113
      %p115 = scmp.ne.s32.totalorder %s107, %s109
      %p116 = scmp.eq.s32.totalorder %s22, 1
      %p117 = por %p115, %p116
      %p118 = scmp.ne.s32.totalorder %s109, %s110
      %p119 = scmp.eq.s32.totalorder %s22, 0
      %p120 = por %p118, %p119
      %p121 = scmp.ne.s32.totalorder %s109, %s110
      %p122 = scmp.eq.s32.totalorder %s23, 1
      %p123 = por %p121, %p122
      %p125 = scmp.ne.s32.totalorder %s110, %s124
      %p126 = scmp.eq.s32.totalorder %s23, 0
      %p127 = por %p125, %p126
      %s129 = sadd.s32 %s128, 1
      %p132 = scmp.eq.s32.totalorder %s17, 1
      %p133 = scmp.ne.s32.totalorder %s128, %s130
      %p134 = scmp.eq.s32.totalorder %s17, 0
      %p135 = por %p133, %p134
      %p136 = scmp.ne.s32.totalorder %s128, %s130
      %p137 = scmp.eq.s32.totalorder %s22, 1
      %p138 = por %p136, %p137
      %p139 = scmp.ne.s32.totalorder %s130, %s131
      %p140 = scmp.eq.s32.totalorder %s22, 0
      %p141 = por %p139, %p140
      %p142 = scmp.ne.s32.totalorder %s130, %s131
      %p143 = scmp.eq.s32.totalorder %s23, 1
      %p144 = por %p142, %p143
      %p146 = scmp.ne.s32.totalorder %s131, %s145
      %p147 = scmp.eq.s32.totalorder %s23, 0
      %p148 = por %p146, %p147
      %s150 = sadd.s32 %s149, 1
      %p153 = scmp.eq.s32.totalorder %s17, 1
      %p154 = scmp.ne.s32.totalorder %s149, %s151
      %p155 = scmp.eq.s32.totalorder %s17, 0
      %p156 = por %p154, %p155
      %p157 = scmp.ne.s32.totalorder %s149, %s151
      %p158 = scmp.eq.s32.totalorder %s22, 1
      %p159 = por %p157, %p158
      %p160 = scmp.ne.s32.totalorder %s151, %s152
      %p161 = scmp.eq.s32.totalorder %s22, 0
      %p162 = por %p160, %p161
      %p163 = scmp.ne.s32.totalorder %s151, %s152
      %p164 = scmp.eq.s32.totalorder %s23, 1
      %p165 = por %p163, %p164
      %p167 = scmp.ne.s32.totalorder %s152, %s166
      %p168 = scmp.eq.s32.totalorder %s23, 0
      %p169 = por %p167, %p168
      %s170 = ssub.s32 %s24, %s36
      %s171 = ssub.s32 %s25, %s32
      %s172 = sor.u32 %s170, %s171
      %p173 = scmp.eq.s32.totalorder %s172, 0
      %s175 = sadd.s32 %s174, 1
      %s176 = scalar_select %p173, %s174, %s175
      %p179 = pneg %p173
      %p180 = scmp.eq.s32.totalorder %s17, 1
      %p181 = por %p179, %p180
      %p182 = scmp.ne.s32.totalorder %s174, %s177
      %p183 = scmp.eq.s32.totalorder %s17, 0
      %p184 = por %p182, %p183
      %p185 = scmp.ne.s32.totalorder %s174, %s177
      %p186 = scmp.eq.s32.totalorder %s22, 1
      %p187 = por %p185, %p186
      %p188 = scmp.ne.s32.totalorder %s177, %s178
      %p189 = scmp.eq.s32.totalorder %s22, 0
      %p190 = por %p188, %p189
      %p191 = scmp.ne.s32.totalorder %s177, %s178
      %p192 = scmp.eq.s32.totalorder %s23, 1
      %p193 = por %p191, %p192
      %p195 = scmp.ne.s32.totalorder %s178, %s194
      %p196 = scmp.eq.s32.totalorder %s23, 0
      %p197 = por %p195, %p196
      %p198 = scmp.le.s32.totalorder 1, %s17
      %p199 = scmp.lt.s32.totalorder %s17, 3
      %p200 = pnand %p198, %p199
      %p201 = pneg %p200
      // Predicated region
      $region9: #{tpu_custom_call.1} parent=5 // pred_check
        _
      $region10: #{tpu_custom_call.1} parent=5 // pred_check_branch
        %203 = sbr.rel (%p200) target = $region12
      $region11: #{tpu_custom_call.1} parent=5 // pred_region
        %s204 = ssub.s32 %s17, 1
        // Predicated region
        $region13: #{tpu_custom_call.1} parent=11 // pred_check
          %p205 = pneg %p50
        $region14: #{tpu_custom_call.1} parent=11 // pred_check_branch
          %207 = sbr.rel (%p205) target = $region16
        $region15: #{tpu_custom_call.1} parent=11 // pred_region
          _
        $region16: #{tpu_custom_call.1} parent=11 // pred_fallthru
          _
        // Predicated region
        $region17: #{tpu_custom_call.1} parent=11 // pred_check
          %p208 = pneg %p99
        $region18: #{tpu_custom_call.1} parent=11 // pred_check_branch
          %210 = sbr.rel (%p208) target = $region20
        $region19: #{tpu_custom_call.1} parent=11 // pred_region
          %s212 = ssub.s32 8192, 8192
          %213 = vsyncadd [#allocation5], %s212
          %s214 = sshll.u32 [#allocation4], 4
          %s215 = int_to_ptr.vmem [resolvable:$true] %s214
          %220 = dma.hbm_to_vmem [thread:$0]  %s2, 8192, %s215, [#allocation5], 256, 256, 16
        $region20: #{tpu_custom_call.1} parent=11 // pred_fallthru
          _
        // Predicated region
        $region21: #{tpu_custom_call.1} parent=11 // pred_check
          %p221 = pneg %p120
        $region22: #{tpu_custom_call.1} parent=11 // pred_check_branch
          %223 = sbr.rel (%p221) target = $region24
        $region23: #{tpu_custom_call.1} parent=11 // pred_region
          _
        $region24: #{tpu_custom_call.1} parent=11 // pred_fallthru
          _
        // Predicated region
        $region25: #{tpu_custom_call.1} parent=11 // pred_check
          %p224 = pneg %p141
        $region26: #{tpu_custom_call.1} parent=11 // pred_check_branch
          %226 = sbr.rel (%p224) target = $region28
        $region27: #{tpu_custom_call.1} parent=11 // pred_region
          _
        $region28: #{tpu_custom_call.1} parent=11 // pred_fallthru
          _
        // Predicated region
        $region29: #{tpu_custom_call.1} parent=11 // pred_check
          %p227 = pneg %p162
        $region30: #{tpu_custom_call.1} parent=11 // pred_check_branch
          %229 = sbr.rel (%p227) target = $region32
        $region31: #{tpu_custom_call.1} parent=11 // pred_region
          _
        $region32: #{tpu_custom_call.1} parent=11 // pred_fallthru
          _
      $region12: #{tpu_custom_call.1} parent=5 // pred_fallthru
        _
      %p230 = scmp.lt.s32.totalorder %s17, 2
      // Predicated region
      $region33: #{tpu_custom_call.1} parent=5 // pred_check
        %p231 = pneg %p230
      $region34: #{tpu_custom_call.1} parent=5 // pred_check_branch
        %233 = sbr.rel (%p231) target = $region36
      $region35: #{tpu_custom_call.1} parent=5 // pred_region
        // Predicated region
        $region37: #{tpu_custom_call.1} parent=35 // pred_check
          %p234 = pneg %p72
        $region38: #{tpu_custom_call.1} parent=35 // pred_check_branch
          %236 = sbr.rel (%p234) target = $region40
        $region39: #{tpu_custom_call.1} parent=35 // pred_region
          %s237 = smul.u32 2, %s25
          %p238 = scmp.lt.s32.totalorder %s24, 0
          %s239 = scalar_select %p238, %s24, 0
          %p240 = scmp.lt.s32.totalorder %s237, 3
          %s241 = scalar_select %p240, %s237, 3
          %s242 = smul.addr %s239, 4
          %s243 = sadd.s32 %s241, %s242
          %s244 = smul.addr %s243, 8
          %s245 = scalar_lea.vmem %s1, %s244
          %s246 = smul.u32 2, %s25
        $region40: #{tpu_custom_call.1} parent=35 // pred_fallthru
          _
      $region36: #{tpu_custom_call.1} parent=5 // pred_fallthru
        _
      %p247 = scmp.le.s32.totalorder 1, %s17
      %p248 = scmp.lt.s32.totalorder %s17, 3
      %p249 = pnand %p247, %p248
      %p250 = pneg %p249
      // Predicated region
      $region41: #{tpu_custom_call.1} parent=5 // pred_check
        _
      $region42: #{tpu_custom_call.1} parent=5 // pred_check_branch
        %252 = sbr.rel (%p249) target = $region44
      $region43: #{tpu_custom_call.1} parent=5 // pred_region
        %s253 = ssub.s32 %s17, 1
        // Predicated region
        $region45: #{tpu_custom_call.1} parent=43 // pred_check
          %p254 = pneg %p99
        $region46: #{tpu_custom_call.1} parent=43 // pred_check_branch
          %256 = sbr.rel (%p254) target = $region48
        $region47: #{tpu_custom_call.1} parent=43 // pred_region
          %257 = dma.done [#allocation5], 8192
        $region48: #{tpu_custom_call.1} parent=43 // pred_fallthru
          _
        %p258 = pneg %p50
        %p259 = pneg %p47
        %s260 = smul.u32 2, %s27
        %p261 = scmp.lt.s32.totalorder %s26, 0
        %s262 = scalar_select %p261, %s26, 0
        %p263 = scmp.lt.s32.totalorder %s260, 3
        %s264 = scalar_select %p263, %s260, 3
        %s265 = smul.addr %s262, 4
        %s266 = sadd.s32 %s264, %s265
        %s267 = smul.addr %s266, 8
        %s268 = scalar_lea.vmem %s1, %s267
        %p269 = pneg %p78
        %p270 = pneg %p75
        %p271 = pneg %p99
        %p272 = pneg %p96
        %p273 = pneg %p120
        %p274 = pneg %p117
        %p275 = pneg %p141
        %p276 = pneg %p138
        %p277 = pneg %p162
        %p278 = pneg %p159
        %p279 = pneg %p190
        %p280 = pneg %p187
        %s281 = sand.u32 %s177, 1
        %s282 = scalar_lea.sflag [#allocation6], %s281
        %s283 = sand.u32 %s177, 1
        %s284 = smul.addr %s283, 16
        %s285 = scalar_lea.vmem [#allocation7], %s284
        %s286 = smul.u32 2, %s27
        %p287 = scmp.lt.s32.totalorder %s26, 0
        %s288 = scalar_select %p287, %s26, 0
        %p289 = scmp.lt.s32.totalorder %s286, 3
        %s290 = scalar_select %p289, %s286, 3
        %s291 = smul.addr %s288, 4
        %s292 = sadd.s32 %s290, %s291
        %s293 = smul.addr %s292, 8
        %s294 = scalar_lea.vmem %s1, %s293
        %s295 = smul.u32 2, %s27
        %s296 = smul.u32 2, %s27
        %p297 = scmp.eq.s32.totalorder %s27, 0
        // Predicated region
        $region49: #{tpu_custom_call.1} parent=43 // pred_check
          %p298 = pneg %p297
        $region50: #{tpu_custom_call.1} parent=43 // pred_check_branch
          %300 = sbr.rel (%p298) target = $region52
        $region51: #{tpu_custom_call.1} parent=43 // pred_region
          %vm301 = vcmask 64512
          %302 = vst.msk [vmem:[#allocation2] sm:$0xff] %vm301, 0.0
        $region52: #{tpu_custom_call.1} parent=43 // pred_fallthru
          _
        %v303 = vld [vmem:[%s294] sm:$0xff]
        %v304 = vld [vmem:[%s294 + $0x8] sm:$0xff]
        %v305 = vld [vmem:[#allocation2] sm:$0xff]
        %v306 = vld [vmem:[#allocation4] sm:$0xff]
        %v307 = vld [vmem:[#allocation4 + $0x8] sm:$0xff]
        %v308 = vld [vmem:[#allocation4 + $0x10] sm:$0xff]
        %v309 = vld [vmem:[#allocation4 + $0x18] sm:$0xff]
        %v310 = vld [vmem:[#allocation4 + $0x20] sm:$0xff]
        %v311 = vld [vmem:[#allocation4 + $0x28] sm:$0xff]
        %v312 = vld [vmem:[#allocation4 + $0x30] sm:$0xff]
        %v313 = vld [vmem:[#allocation4 + $0x38] sm:$0xff]
        %v314 = vld [vmem:[#allocation4 + $0x40] sm:$0xff]
        %v315 = vld [vmem:[#allocation4 + $0x48] sm:$0xff]
        %v316 = vld [vmem:[#allocation4 + $0x50] sm:$0xff]
        %v317 = vld [vmem:[#allocation4 + $0x58] sm:$0xff]
        %v318 = vld [vmem:[#allocation4 + $0x60] sm:$0xff]
        %v319 = vld [vmem:[#allocation4 + $0x68] sm:$0xff]
        %v320 = vld [vmem:[#allocation4 + $0x70] sm:$0xff]
        %v321 = vld [vmem:[#allocation4 + $0x78] sm:$0xff]
        %v322 = vld [vmem:[#allocation4 + $0x80] sm:$0xff]
        %v323 = vld [vmem:[#allocation4 + $0x88] sm:$0xff]
        %v324 = vld [vmem:[#allocation4 + $0x90] sm:$0xff]
        %v325 = vld [vmem:[#allocation4 + $0x98] sm:$0xff]
        %v326 = vld [vmem:[#allocation4 + $0xa0] sm:$0xff]
        %v327 = vld [vmem:[#allocation4 + $0xa8] sm:$0xff]
        %v328 = vld [vmem:[#allocation4 + $0xb0] sm:$0xff]
        %v329 = vld [vmem:[#allocation4 + $0xb8] sm:$0xff]
        %v330 = vld [vmem:[#allocation4 + $0xc0] sm:$0xff]
        %v331 = vld [vmem:[#allocation4 + $0xc8] sm:$0xff]
        %v332 = vld [vmem:[#allocation4 + $0xd0] sm:$0xff]
        %v333 = vld [vmem:[#allocation4 + $0xd8] sm:$0xff]
        %v334 = vld [vmem:[#allocation4 + $0xe0] sm:$0xff]
        %v335 = vld [vmem:[#allocation4 + $0xe8] sm:$0xff]
        %v336 = vld [vmem:[#allocation4 + $0xf0] sm:$0xff]
        %v337 = vld [vmem:[#allocation4 + $0xf8] sm:$0xff]
        %v338 = vld [vmem:[#allocation4 + $0x100] sm:$0xff]
        %v339 = vld [vmem:[#allocation4 + $0x108] sm:$0xff]
        %v340 = vld [vmem:[#allocation4 + $0x110] sm:$0xff]
        %v341 = vld [vmem:[#allocation4 + $0x118] sm:$0xff]
        %v342 = vld [vmem:[#allocation4 + $0x120] sm:$0xff]
        %v343 = vld [vmem:[#allocation4 + $0x128] sm:$0xff]
        %v344 = vld [vmem:[#allocation4 + $0x130] sm:$0xff]
        %v345 = vld [vmem:[#allocation4 + $0x138] sm:$0xff]
        %v346 = vld [vmem:[#allocation4 + $0x140] sm:$0xff]
        %v347 = vld [vmem:[#allocation4 + $0x148] sm:$0xff]
        %v348 = vld [vmem:[#allocation4 + $0x150] sm:$0xff]
        %v349 = vld [vmem:[#allocation4 + $0x158] sm:$0xff]
        %v350 = vld [vmem:[#allocation4 + $0x160] sm:$0xff]
        %v351 = vld [vmem:[#allocation4 + $0x168] sm:$0xff]
        %v352 = vld [vmem:[#allocation4 + $0x170] sm:$0xff]
        %v353 = vld [vmem:[#allocation4 + $0x178] sm:$0xff]
        %v354 = vld [vmem:[#allocation4 + $0x180] sm:$0xff]
        %v355 = vld [vmem:[#allocation4 + $0x188] sm:$0xff]
        %v356 = vld [vmem:[#allocation4 + $0x190] sm:$0xff]
        %v357 = vld [vmem:[#allocation4 + $0x198] sm:$0xff]
        %v358 = vld [vmem:[#allocation4 + $0x1a0] sm:$0xff]
        %v359 = vld [vmem:[#allocation4 + $0x1a8] sm:$0xff]
        %v360 = vld [vmem:[#allocation4 + $0x1b0] sm:$0xff]
        %v361 = vld [vmem:[#allocation4 + $0x1b8] sm:$0xff]
        %v362 = vld [vmem:[#allocation4 + $0x1c0] sm:$0xff]
        %v363 = vld [vmem:[#allocation4 + $0x1c8] sm:$0xff]
        %v364 = vld [vmem:[#allocation4 + $0x1d0] sm:$0xff]
        %v365 = vld [vmem:[#allocation4 + $0x1d8] sm:$0xff]
        %v366 = vld [vmem:[#allocation4 + $0x1e0] sm:$0xff]
        %v367 = vld [vmem:[#allocation4 + $0x1e8] sm:$0xff]
        %v368 = vld [vmem:[#allocation4 + $0x1f0] sm:$0xff]
        %v369 = vld [vmem:[#allocation4 + $0x1f8] sm:$0xff]
        %v370 = vld [vmem:[%s3] sm:$0xff]
        %v371 = vld [vmem:[%s3 + $0x8] sm:$0xff]
        %vm372 = vcmask 64512
        %v374 = vsel %vm372, %v305, 0
        %v376 = vand.u32 %v371, 4294901760
        %377 = vmatprep.subr.mxu0 %v376
        %v378 = vand.u32 %v370, 4294901760
        %379 = vmatpush1.msra.mxu0 %v378
        %380 = vmatprep.subr.mxu0 0.0
        %381 = vmatpush1.msra.mxu0 0.0
        %382 = vmatprep.subr.mxu0 0.0
        %383 = vmatpush1.msra.mxu0 0.0
        %384 = vmatprep.subr.mxu0 0.0
        %385 = vmatpush1.msra.mxu0 0.0
        %386 = vmatprep.subr.mxu0 0.0
        %387 = vmatpush1.msra.mxu0 0.0
        %388 = vmatprep.subr.mxu0 0.0
        %389 = vmatpush1.msra.mxu0 0.0
        %390 = vmatprep.subr.mxu0 0.0
        %391 = vmatpush1.msra.mxu0 0.0
        %392 = vmatprep.subr.mxu0 0.0
        %393 = vmatpush1.msra.mxu0 0.0
        %394 = vmatprep.subr.mxu0 0.0
        %395 = vmatpush1.msra.mxu0 0.0
        %396 = vmatprep.subr.mxu0 0.0
        %397 = vmatpush1.msra.mxu0 0.0
        %398 = vmatprep.subr.mxu0 0.0
        %399 = vmatpush1.msra.mxu0 0.0
        %400 = vmatprep.subr.mxu0 0.0
        %401 = vmatpush1.msra.mxu0 0.0
        %402 = vmatprep.subr.mxu0 0.0
        %403 = vmatpush1.msra.mxu0 0.0
        %404 = vmatprep.subr.mxu0 0.0
        %405 = vmatpush1.msra.mxu0 0.0
        %406 = vmatprep.subr.mxu0 0.0
        %407 = vmatpush1.msra.mxu0 0.0
        %408 = vmatprep.subr.mxu0 0.0
        %409 = vmatpush1.msra.mxu0 0.0
        %410 = vmatprep.subr.mxu0 0.0
        %411 = vmatpush1.msra.mxu0 0.0
        %412 = vmatprep.subr.mxu0 0.0
        %413 = vmatpush1.msra.mxu0 0.0
        %414 = vmatprep.subr.mxu0 0.0
        %415 = vmatpush1.msra.mxu0 0.0
        %416 = vmatprep.subr.mxu0 0.0
        %417 = vmatpush1.msra.mxu0 0.0
        %418 = vmatprep.subr.mxu0 0.0
        %419 = vmatpush1.msra.mxu0 0.0
        %420 = vmatprep.subr.mxu0 0.0
        %421 = vmatpush1.msra.mxu0 0.0
        %422 = vmatprep.subr.mxu0 0.0
        %423 = vmatpush1.msra.mxu0 0.0
        %424 = vmatprep.subr.mxu0 0.0
        %425 = vmatpush1.msra.mxu0 0.0
        %426 = vmatprep.subr.mxu0 0.0
        %427 = vmatpush1.msra.mxu0 0.0
        %428 = vmatprep.subr.mxu0 0.0
        %429 = vmatpush1.msra.mxu0 0.0
        %430 = vmatprep.subr.mxu0 0.0
        %431 = vmatpush1.msra.mxu0 0.0
        %432 = vmatprep.subr.mxu0 0.0
        %433 = vmatpush1.msra.mxu0 0.0
        %434 = vmatprep.subr.mxu0 0.0
        %435 = vmatpush1.msra.mxu0 0.0
        %436 = vmatprep.subr.mxu0 0.0
        %437 = vmatpush1.msra.mxu0 0.0
        %438 = vmatprep.subr.mxu0 0.0
        %439 = vmatpush1.msra.mxu0 0.0
        %440 = vmatprep.subr.mxu0 0.0
        %441 = vmatpush1.msra.mxu0 0.0
        %442 = vmatprep.mubr.f32.mxu0 0.0
        %v443 = vand.u32 %v374, 4294901760
        %v444 = vsub.f32 %v374, %v443
        %v445 = vand.u32 %v444, 4294901760
        %v446 = vsub.f32 %v444, %v445
        %v447 = vand.u32 %v446, 4294901760
        %448 = vmatmul.mubr.f32.gmra.mrb[0].mxu0 %v447
        %v449 = vpop.f32.mrb[0].mxu0
        %v450 = vadd.f32 0.0, %v449
        %v451 = vpop.f32.mrb[0].mxu0
        %v452 = vadd.f32 0.0, %v451
        %453 = vdwg.mxu0
        %v454 = vand.u32 %v371, 4294901760
        %v455 = vsub.f32 %v371, %v454
        %v456 = vand.u32 %v455, 4294901760
        %v457 = vsub.f32 %v455, %v456
        %v458 = vand.u32 %v457, 4294901760
        %459 = vmatprep.subr.mxu0 %v458
        %v460 = vand.u32 %v370, 4294901760
        %v461 = vsub.f32 %v370, %v460
        %v462 = vand.u32 %v461, 4294901760
        %v463 = vsub.f32 %v461, %v462
        %v464 = vand.u32 %v463, 4294901760
        %465 = vmatpush1.msra.mxu0 %v464
        %466 = vmatprep.subr.mxu0 0.0
        %467 = vmatpush1.msra.mxu0 0.0
        %468 = vmatprep.subr.mxu0 0.0
        %469 = vmatpush1.msra.mxu0 0.0
        %470 = vmatprep.subr.mxu0 0.0
        %471 = vmatpush1.msra.mxu0 0.0
        %472 = vmatprep.subr.mxu0 0.0
        %473 = vmatpush1.msra.mxu0 0.0
        %474 = vmatprep.subr.mxu0 0.0
        %475 = vmatpush1.msra.mxu0 0.0
        %476 = vmatprep.subr.mxu0 0.0
        %477 = vmatpush1.msra.mxu0 0.0
        %478 = vmatprep.subr.mxu0 0.0
        %479 = vmatpush1.msra.mxu0 0.0
        %480 = vmatprep.subr.mxu0 0.0
        %481 = vmatpush1.msra.mxu0 0.0
        %482 = vmatprep.subr.mxu0 0.0
        %483 = vmatpush1.msra.mxu0 0.0
        %484 = vmatprep.subr.mxu0 0.0
        %485 = vmatpush1.msra.mxu0 0.0
        %486 = vmatprep.subr.mxu0 0.0
        %487 = vmatpush1.msra.mxu0 0.0
        %488 = vmatprep.subr.mxu0 0.0
        %489 = vmatpush1.msra.mxu0 0.0
        %490 = vmatprep.subr.mxu0 0.0
        %491 = vmatpush1.msra.mxu0 0.0
        %492 = vmatprep.subr.mxu0 0.0
        %493 = vmatpush1.msra.mxu0 0.0
        %494 = vmatprep.subr.mxu0 0.0
        %495 = vmatpush1.msra.mxu0 0.0
        %496 = vmatprep.subr.mxu0 0.0
        %497 = vmatpush1.msra.mxu0 0.0
        %498 = vmatprep.subr.mxu0 0.0
        %499 = vmatpush1.msra.mxu0 0.0
        %500 = vmatprep.subr.mxu0 0.0
        %501 = vmatpush1.msra.mxu0 0.0
        %502 = vmatprep.subr.mxu0 0.0
        %503 = vmatpush1.msra.mxu0 0.0
        %504 = vmatprep.subr.mxu0 0.0
        %505 = vmatpush1.msra.mxu0 0.0
        %506 = vmatprep.subr.mxu0 0.0
        %507 = vmatpush1.msra.mxu0 0.0
        %508 = vmatprep.subr.mxu0 0.0
        %509 = vmatpush1.msra.mxu0 0.0
        %510 = vmatprep.subr.mxu0 0.0
        %511 = vmatpush1.msra.mxu0 0.0
        %512 = vmatprep.subr.mxu0 0.0
        %513 = vmatpush1.msra.mxu0 0.0
        %514 = vmatprep.subr.mxu0 0.0
        %515 = vmatpush1.msra.mxu0 0.0
        %516 = vmatprep.subr.mxu0 0.0
        %517 = vmatpush1.msra.mxu0 0.0
        %518 = vmatprep.subr.mxu0 0.0
        %519 = vmatpush1.msra.mxu0 0.0
        %520 = vmatprep.subr.mxu0 0.0
        %521 = vmatpush1.msra.mxu0 0.0
        %522 = vmatprep.subr.mxu0 0.0
        %523 = vmatpush1.msra.mxu0 0.0
        %524 = vmatprep.subr.mxu0 0.0
        %525 = vmatpush1.msra.mxu0 0.0
        %526 = vmatprep.subr.mxu0 0.0
        %527 = vmatpush1.msra.mxu0 0.0
        %528 = vmatprep.mubr.f32.mxu0 0.0
        %v529 = vand.u32 %v374, 4294901760
        %530 = vmatmul.mubr.f32.gmra.mrb[0].mxu0 %v529
        %v531 = vpop.f32.mrb[0].mxu0
        %v532 = vadd.f32 %v450, %v531
        %v533 = vpop.f32.mrb[0].mxu0
        %v534 = vadd.f32 %v452, %v533
        %535 = vdwg.mxu0
        %v536 = vand.u32 %v371, 4294901760
        %v537 = vsub.f32 %v371, %v536
        %538 = vmatprep.subr.mxu0 %v537
        %v539 = vand.u32 %v370, 4294901760
        %v540 = vsub.f32 %v370, %v539
        %541 = vmatpush1.msra.mxu0 %v540
        %542 = vmatprep.subr.mxu0 0.0
        %543 = vmatpush1.msra.mxu0 0.0
        %544 = vmatprep.subr.mxu0 0.0
        %545 = vmatpush1.msra.mxu0 0.0
        %546 = vmatprep.subr.mxu0 0.0
        %547 = vmatpush1.msra.mxu0 0.0
        %548 = vmatprep.subr.mxu0 0.0
        %549 = vmatpush1.msra.mxu0 0.0
        %550 = vmatprep.subr.mxu0 0.0
        %551 = vmatpush1.msra.mxu0 0.0
        %552 = vmatprep.subr.mxu0 0.0
        %553 = vmatpush1.msra.mxu0 0.0
        %554 = vmatprep.subr.mxu0 0.0
        %555 = vmatpush1.msra.mxu0 0.0
        %556 = vmatprep.subr.mxu0 0.0
        %557 = vmatpush1.msra.mxu0 0.0
        %558 = vmatprep.subr.mxu0 0.0
        %559 = vmatpush1.msra.mxu0 0.0
        %560 = vmatprep.subr.mxu0 0.0
        %561 = vmatpush1.msra.mxu0 0.0
        %562 = vmatprep.subr.mxu0 0.0
        %563 = vmatpush1.msra.mxu0 0.0
        %564 = vmatprep.subr.mxu0 0.0
        %565 = vmatpush1.msra.mxu0 0.0
        %566 = vmatprep.subr.mxu0 0.0
        %567 = vmatpush1.msra.mxu0 0.0
        %568 = vmatprep.subr.mxu0 0.0
        %569 = vmatpush1.msra.mxu0 0.0
        %570 = vmatprep.subr.mxu0 0.0
        %571 = vmatpush1.msra.mxu0 0.0
        %572 = vmatprep.subr.mxu0 0.0
        %573 = vmatpush1.msra.mxu0 0.0
        %574 = vmatprep.subr.mxu0 0.0
        %575 = vmatpush1.msra.mxu0 0.0
        %576 = vmatprep.subr.mxu0 0.0
        %577 = vmatpush1.msra.mxu0 0.0
        %578 = vmatprep.subr.mxu0 0.0
        %579 = vmatpush1.msra.mxu0 0.0
        %580 = vmatprep.subr.mxu0 0.0
        %581 = vmatpush1.msra.mxu0 0.0
        %582 = vmatprep.subr.mxu0 0.0
        %583 = vmatpush1.msra.mxu0 0.0
        %584 = vmatprep.subr.mxu0 0.0
        %585 = vmatpush1.msra.mxu0 0.0
        %586 = vmatprep.subr.mxu0 0.0
        %587 = vmatpush1.msra.mxu0 0.0
        %588 = vmatprep.subr.mxu0 0.0
        %589 = vmatpush1.msra.mxu0 0.0
        %590 = vmatprep.subr.mxu0 0.0
        %591 = vmatpush1.msra.mxu0 0.0
        %592 = vmatprep.subr.mxu0 0.0
        %593 = vmatpush1.msra.mxu0 0.0
        %594 = vmatprep.subr.mxu0 0.0
        %595 = vmatpush1.msra.mxu0 0.0
        %596 = vmatprep.subr.mxu0 0.0
        %597 = vmatpush1.msra.mxu0 0.0
        %598 = vmatprep.subr.mxu0 0.0
        %599 = vmatpush1.msra.mxu0 0.0
        %600 = vmatprep.subr.mxu0 0.0
        %601 = vmatpush1.msra.mxu0 0.0
        %602 = vmatprep.subr.mxu0 0.0
        %603 = vmatpush1.msra.mxu0 0.0
        %604 = vmatprep.mubr.f32.mxu0 0.0
        %v605 = vand.u32 %v374, 4294901760
        %v606 = vsub.f32 %v374, %v605
        %607 = vmatmul.mubr.f32.gmra.mrb[0].mxu0 %v606
        %v608 = vpop.f32.mrb[0].mxu0
        %v609 = vadd.f32 %v532, %v608
        %v610 = vpop.f32.mrb[0].mxu0
        %v611 = vadd.f32 %v534, %v610
        %612 = vdwg.mxu0
        %v613 = vand.u32 %v371, 4294901760
        %614 = vmatprep.subr.mxu0 %v613
        %v615 = vand.u32 %v370, 4294901760
        %616 = vmatpush1.msra.mxu0 %v615
        %617 = vmatprep.subr.mxu0 0.0
        %618 = vmatpush1.msra.mxu0 0.0
        %619 = vmatprep.subr.mxu0 0.0
        %620 = vmatpush1.msra.mxu0 0.0
        %621 = vmatprep.subr.mxu0 0.0
        %622 = vmatpush1.msra.mxu0 0.0
        %623 = vmatprep.subr.mxu0 0.0
        %624 = vmatpush1.msra.mxu0 0.0
        %625 = vmatprep.subr.mxu0 0.0
        %626 = vmatpush1.msra.mxu0 0.0
        %627 = vmatprep.subr.mxu0 0.0
        %628 = vmatpush1.msra.mxu0 0.0
        %629 = vmatprep.subr.mxu0 0.0
        %630 = vmatpush1.msra.mxu0 0.0
        %631 = vmatprep.subr.mxu0 0.0
        %632 = vmatpush1.msra.mxu0 0.0
        %633 = vmatprep.subr.mxu0 0.0
        %634 = vmatpush1.msra.mxu0 0.0
        %635 = vmatprep.subr.mxu0 0.0
        %636 = vmatpush1.msra.mxu0 0.0
        %637 = vmatprep.subr.mxu0 0.0
        %638 = vmatpush1.msra.mxu0 0.0
        %639 = vmatprep.subr.mxu0 0.0
        %640 = vmatpush1.msra.mxu0 0.0
        %641 = vmatprep.subr.mxu0 0.0
        %642 = vmatpush1.msra.mxu0 0.0
        %643 = vmatprep.subr.mxu0 0.0
        %644 = vmatpush1.msra.mxu0 0.0
        %645 = vmatprep.subr.mxu0 0.0
        %646 = vmatpush1.msra.mxu0 0.0
        %647 = vmatprep.subr.mxu0 0.0
        %648 = vmatpush1.msra.mxu0 0.0
        %649 = vmatprep.subr.mxu0 0.0
        %650 = vmatpush1.msra.mxu0 0.0
        %651 = vmatprep.subr.mxu0 0.0
        %652 = vmatpush1.msra.mxu0 0.0
        %653 = vmatprep.subr.mxu0 0.0
        %654 = vmatpush1.msra.mxu0 0.0
        %655 = vmatprep.subr.mxu0 0.0
        %656 = vmatpush1.msra.mxu0 0.0
        %657 = vmatprep.subr.mxu0 0.0
        %658 = vmatpush1.msra.mxu0 0.0
        %659 = vmatprep.subr.mxu0 0.0
        %660 = vmatpush1.msra.mxu0 0.0
        %661 = vmatprep.subr.mxu0 0.0
        %662 = vmatpush1.msra.mxu0 0.0
        %663 = vmatprep.subr.mxu0 0.0
        %664 = vmatpush1.msra.mxu0 0.0
        %665 = vmatprep.subr.mxu0 0.0
        %666 = vmatpush1.msra.mxu0 0.0
        %667 = vmatprep.subr.mxu0 0.0
        %668 = vmatpush1.msra.mxu0 0.0
        %669 = vmatprep.subr.mxu0 0.0
        %670 = vmatpush1.msra.mxu0 0.0
        %671 = vmatprep.subr.mxu0 0.0
        %672 = vmatpush1.msra.mxu0 0.0
        %673 = vmatprep.subr.mxu0 0.0
        %674 = vmatpush1.msra.mxu0 0.0
        %675 = vmatprep.subr.mxu0 0.0
        %676 = vmatpush1.msra.mxu0 0.0
        %677 = vmatprep.subr.mxu0 0.0
        %678 = vmatpush1.msra.mxu0 0.0
        %679 = vmatprep.mubr.f32.mxu0 0.0
        %v680 = vand.u32 %v374, 4294901760
        %v681 = vsub.f32 %v374, %v680
        %v682 = vand.u32 %v681, 4294901760
        %683 = vmatmul.mubr.f32.gmra.mrb[0].mxu0 %v682
        %v684 = vpop.f32.mrb[0].mxu0
        %v685 = vadd.f32 %v609, %v684
        %v686 = vpop.f32.mrb[0].mxu0
        %v687 = vadd.f32 %v611, %v686
        %688 = vdwg.mxu0
        %v689 = vand.u32 %v371, 4294901760
        %v690 = vsub.f32 %v371, %v689
        %v691 = vand.u32 %v690, 4294901760
        %692 = vmatprep.subr.mxu0 %v691
        %v693 = vand.u32 %v370, 4294901760
        %v694 = vsub.f32 %v370, %v693
        %v695 = vand.u32 %v694, 4294901760
        %696 = vmatpush1.msra.mxu0 %v695
        %697 = vmatprep.subr.mxu0 0.0
        %698 = vmatpush1.msra.mxu0 0.0
        %699 = vmatprep.subr.mxu0 0.0
        %700 = vmatpush1.msra.mxu0 0.0
        %701 = vmatprep.subr.mxu0 0.0
        %702 = vmatpush1.msra.mxu0 0.0
        %703 = vmatprep.subr.mxu0 0.0
        %704 = vmatpush1.msra.mxu0 0.0
        %705 = vmatprep.subr.mxu0 0.0
        %706 = vmatpush1.msra.mxu0 0.0
        %707 = vmatprep.subr.mxu0 0.0
        %708 = vmatpush1.msra.mxu0 0.0
        %709 = vmatprep.subr.mxu0 0.0
        %710 = vmatpush1.msra.mxu0 0.0
        %711 = vmatprep.subr.mxu0 0.0
        %712 = vmatpush1.msra.mxu0 0.0
        %713 = vmatprep.subr.mxu0 0.0
        %714 = vmatpush1.msra.mxu0 0.0
        %715 = vmatprep.subr.mxu0 0.0
        %716 = vmatpush1.msra.mxu0 0.0
        %717 = vmatprep.subr.mxu0 0.0
        %718 = vmatpush1.msra.mxu0 0.0
        %719 = vmatprep.subr.mxu0 0.0
        %720 = vmatpush1.msra.mxu0 0.0
        %721 = vmatprep.subr.mxu0 0.0
        %722 = vmatpush1.msra.mxu0 0.0
        %723 = vmatprep.subr.mxu0 0.0
        %724 = vmatpush1.msra.mxu0 0.0
        %725 = vmatprep.subr.mxu0 0.0
        %726 = vmatpush1.msra.mxu0 0.0
        %727 = vmatprep.subr.mxu0 0.0
        %728 = vmatpush1.msra.mxu0 0.0
        %729 = vmatprep.subr.mxu0 0.0
        %730 = vmatpush1.msra.mxu0 0.0
        %731 = vmatprep.subr.mxu0 0.0
        %732 = vmatpush1.msra.mxu0 0.0
        %733 = vmatprep.subr.mxu0 0.0
        %734 = vmatpush1.msra.mxu0 0.0
        %735 = vmatprep.subr.mxu0 0.0
        %736 = vmatpush1.msra.mxu0 0.0
        %737 = vmatprep.subr.mxu0 0.0
        %738 = vmatpush1.msra.mxu0 0.0
        %739 = vmatprep.subr.mxu0 0.0
        %740 = vmatpush1.msra.mxu0 0.0
        %741 = vmatprep.subr.mxu0 0.0
        %742 = vmatpush1.msra.mxu0 0.0
        %743 = vmatprep.subr.mxu0 0.0
        %744 = vmatpush1.msra.mxu0 0.0
        %745 = vmatprep.subr.mxu0 0.0
        %746 = vmatpush1.msra.mxu0 0.0
        %747 = vmatprep.subr.mxu0 0.0
        %748 = vmatpush1.msra.mxu0 0.0
        %749 = vmatprep.subr.mxu0 0.0
        %750 = vmatpush1.msra.mxu0 0.0
        %751 = vmatprep.subr.mxu0 0.0
        %752 = vmatpush1.msra.mxu0 0.0
        %753 = vmatprep.subr.mxu0 0.0
        %754 = vmatpush1.msra.mxu0 0.0
        %755 = vmatprep.subr.mxu0 0.0
        %756 = vmatpush1.msra.mxu0 0.0
        %757 = vmatprep.subr.mxu0 0.0
        %758 = vmatpush1.msra.mxu0 0.0
        %759 = vmatprep.mubr.f32.mxu0 0.0
        %v760 = vand.u32 %v374, 4294901760
        %761 = vmatmul.mubr.f32.gmra.mrb[0].mxu0 %v760
        %v762 = vpop.f32.mrb[0].mxu0
        %v763 = vadd.f32 %v685, %v762
        %v764 = vpop.f32.mrb[0].mxu0
        %v765 = vadd.f32 %v687, %v764
        %766 = vdwg.mxu0
        %v767 = vand.u32 %v371, 4294901760
        %768 = vmatprep.subr.mxu0 %v767
        %v769 = vand.u32 %v370, 4294901760
        %770 = vmatpush1.msra.mxu0 %v769
        %771 = vmatprep.subr.mxu0 0.0
        %772 = vmatpush1.msra.mxu0 0.0
        %773 = vmatprep.subr.mxu0 0.0
        %774 = vmatpush1.msra.mxu0 0.0
        %775 = vmatprep.subr.mxu0 0.0
        %776 = vmatpush1.msra.mxu0 0.0
        %777 = vmatprep.subr.mxu0 0.0
        %778 = vmatpush1.msra.mxu0 0.0
        %779 = vmatprep.subr.mxu0 0.0
        %780 = vmatpush1.msra.mxu0 0.0
        %781 = vmatprep.subr.mxu0 0.0
        %782 = vmatpush1.msra.mxu0 0.0
        %783 = vmatprep.subr.mxu0 0.0
        %784 = vmatpush1.msra.mxu0 0.0
        %785 = vmatprep.subr.mxu0 0.0
        %786 = vmatpush1.msra.mxu0 0.0
        %787 = vmatprep.subr.mxu0 0.0
        %788 = vmatpush1.msra.mxu0 0.0
        %789 = vmatprep.subr.mxu0 0.0
        %790 = vmatpush1.msra.mxu0 0.0
        %791 = vmatprep.subr.mxu0 0.0
        %792 = vmatpush1.msra.mxu0 0.0
        %793 = vmatprep.subr.mxu0 0.0
        %794 = vmatpush1.msra.mxu0 0.0
        %795 = vmatprep.subr.mxu0 0.0
        %796 = vmatpush1.msra.mxu0 0.0
        %797 = vmatprep.subr.mxu0 0.0
        %798 = vmatpush1.msra.mxu0 0.0
        %799 = vmatprep.subr.mxu0 0.0
        %800 = vmatpush1.msra.mxu0 0.0
        %801 = vmatprep.subr.mxu0 0.0
        %802 = vmatpush1.msra.mxu0 0.0
        %803 = vmatprep.subr.mxu0 0.0
        %804 = vmatpush1.msra.mxu0 0.0
        %805 = vmatprep.subr.mxu0 0.0
        %806 = vmatpush1.msra.mxu0 0.0
        %807 = vmatprep.subr.mxu0 0.0
        %808 = vmatpush1.msra.mxu0 0.0
        %809 = vmatprep.subr.mxu0 0.0
        %810 = vmatpush1.msra.mxu0 0.0
        %811 = vmatprep.subr.mxu0 0.0
        %812 = vmatpush1.msra.mxu0 0.0
        %813 = vmatprep.subr.mxu0 0.0
        %814 = vmatpush1.msra.mxu0 0.0
        %815 = vmatprep.subr.mxu0 0.0
        %816 = vmatpush1.msra.mxu0 0.0
        %817 = vmatprep.subr.mxu0 0.0
        %818 = vmatpush1.msra.mxu0 0.0
        %819 = vmatprep.subr.mxu0 0.0
        %820 = vmatpush1.msra.mxu0 0.0
        %821 = vmatprep.subr.mxu0 0.0
        %822 = vmatpush1.msra.mxu0 0.0
        %823 = vmatprep.subr.mxu0 0.0
        %824 = vmatpush1.msra.mxu0 0.0
        %825 = vmatprep.subr.mxu0 0.0
        %826 = vmatpush1.msra.mxu0 0.0
        %827 = vmatprep.subr.mxu0 0.0
        %828 = vmatpush1.msra.mxu0 0.0
        %829 = vmatprep.subr.mxu0 0.0
        %830 = vmatpush1.msra.mxu0 0.0
        %831 = vmatprep.subr.mxu0 0.0
        %832 = vmatpush1.msra.mxu0 0.0
        %833 = vmatprep.mubr.f32.mxu0 0.0
        %v834 = vand.u32 %v374, 4294901760
        %835 = vmatmul.mubr.f32.gmra.mrb[0].mxu0 %v834
        %v836 = vpop.f32.mrb[0].mxu0
        %v837 = vadd.f32 %v763, %v836
        %v838 = vpop.f32.mrb[0].mxu0
        %v839 = vadd.f32 %v765, %v838
        %840 = vdwg.mxu0
        %v841 = vand.u32 %v307, 4294901760
        %842 = vmatprep.subr.mxu0 %v841
        %v843 = vand.u32 %v306, 4294901760
        %844 = vmatpush1.msra.mxu0 %v843
        %v845 = vand.u32 %v309, 4294901760
        %846 = vmatprep.subr.mxu0 %v845
        %v847 = vand.u32 %v308, 4294901760
        %848 = vmatpush1.msra.mxu0 %v847
        %v849 = vand.u32 %v311, 4294901760
        %850 = vmatprep.subr.mxu0 %v849
        %v851 = vand.u32 %v310, 4294901760
        %852 = vmatpush1.msra.mxu0 %v851
        %v853 = vand.u32 %v313, 4294901760
        %854 = vmatprep.subr.mxu0 %v853
        %v855 = vand.u32 %v312, 4294901760
        %856 = vmatpush1.msra.mxu0 %v855
        %v857 = vand.u32 %v315, 4294901760
        %858 = vmatprep.subr.mxu0 %v857
        %v859 = vand.u32 %v314, 4294901760
        %860 = vmatpush1.msra.mxu0 %v859
        %v861 = vand.u32 %v317, 4294901760
        %862 = vmatprep.subr.mxu0 %v861
        %v863 = vand.u32 %v316, 4294901760
        %864 = vmatpush1.msra.mxu0 %v863
        %v865 = vand.u32 %v319, 4294901760
        %866 = vmatprep.subr.mxu0 %v865
        %v867 = vand.u32 %v318, 4294901760
        %868 = vmatpush1.msra.mxu0 %v867
        %v869 = vand.u32 %v321, 4294901760
        %870 = vmatprep.subr.mxu0 %v869
        %v871 = vand.u32 %v320, 4294901760
        %872 = vmatpush1.msra.mxu0 %v871
        %v873 = vand.u32 %v323, 4294901760
        %874 = vmatprep.subr.mxu0 %v873
        %v875 = vand.u32 %v322, 4294901760
        %876 = vmatpush1.msra.mxu0 %v875
        %v877 = vand.u32 %v325, 4294901760
        %878 = vmatprep.subr.mxu0 %v877
        %v879 = vand.u32 %v324, 4294901760
        %880 = vmatpush1.msra.mxu0 %v879
        %v881 = vand.u32 %v327, 4294901760
        %882 = vmatprep.subr.mxu0 %v881
        %v883 = vand.u32 %v326, 4294901760
        %884 = vmatpush1.msra.mxu0 %v883
        %v885 = vand.u32 %v329, 4294901760
        %886 = vmatprep.subr.mxu0 %v885
        %v887 = vand.u32 %v328, 4294901760
        %888 = vmatpush1.msra.mxu0 %v887
        %v889 = vand.u32 %v331, 4294901760
        %890 = vmatprep.subr.mxu0 %v889
        %v891 = vand.u32 %v330, 4294901760
        %892 = vmatpush1.msra.mxu0 %v891
        %v893 = vand.u32 %v333, 4294901760
        %894 = vmatprep.subr.mxu0 %v893
        %v895 = vand.u32 %v332, 4294901760
        %896 = vmatpush1.msra.mxu0 %v895
        %v897 = vand.u32 %v335, 4294901760
        %898 = vmatprep.subr.mxu0 %v897
        %v899 = vand.u32 %v334, 4294901760
        %900 = vmatpush1.msra.mxu0 %v899
        %v901 = vand.u32 %v337, 4294901760
        %902 = vmatprep.subr.mxu0 %v901
        %v903 = vand.u32 %v336, 4294901760
        %904 = vmatpush1.msra.mxu0 %v903
        %v905 = vand.u32 %v339, 4294901760
        %906 = vmatprep.subr.mxu0 %v905
        %v907 = vand.u32 %v338, 4294901760
        %908 = vmatpush1.msra.mxu0 %v907
        %v909 = vand.u32 %v341, 4294901760
        %910 = vmatprep.subr.mxu0 %v909
        %v911 = vand.u32 %v340, 4294901760
        %912 = vmatpush1.msra.mxu0 %v911
        %v913 = vand.u32 %v343, 4294901760
        %914 = vmatprep.subr.mxu0 %v913
        %v915 = vand.u32 %v342, 4294901760
        %916 = vmatpush1.msra.mxu0 %v915
        %v917 = vand.u32 %v345, 4294901760
        %918 = vmatprep.subr.mxu0 %v917
        %v919 = vand.u32 %v344, 4294901760
        %920 = vmatpush1.msra.mxu0 %v919
        %v921 = vand.u32 %v347, 4294901760
        %922 = vmatprep.subr.mxu0 %v921
        %v923 = vand.u32 %v346, 4294901760
        %924 = vmatpush1.msra.mxu0 %v923
        %v925 = vand.u32 %v349, 4294901760
        %926 = vmatprep.subr.mxu0 %v925
        %v927 = vand.u32 %v348, 4294901760
        %928 = vmatpush1.msra.mxu0 %v927
        %v929 = vand.u32 %v351, 4294901760
        %930 = vmatprep.subr.mxu0 %v929
        %v931 = vand.u32 %v350, 4294901760
        %932 = vmatpush1.msra.mxu0 %v931
        %v933 = vand.u32 %v353, 4294901760
        %934 = vmatprep.subr.mxu0 %v933
        %v935 = vand.u32 %v352, 4294901760
        %936 = vmatpush1.msra.mxu0 %v935
        %v937 = vand.u32 %v355, 4294901760
        %938 = vmatprep.subr.mxu0 %v937
        %v939 = vand.u32 %v354, 4294901760
        %940 = vmatpush1.msra.mxu0 %v939
        %v941 = vand.u32 %v357, 4294901760
        %942 = vmatprep.subr.mxu0 %v941
        %v943 = vand.u32 %v356, 4294901760
        %944 = vmatpush1.msra.mxu0 %v943
        %v945 = vand.u32 %v359, 4294901760
        %946 = vmatprep.subr.mxu0 %v945
        %v947 = vand.u32 %v358, 4294901760
        %948 = vmatpush1.msra.mxu0 %v947
        %v949 = vand.u32 %v361, 4294901760
        %950 = vmatprep.subr.mxu0 %v949
        %v951 = vand.u32 %v360, 4294901760
        %952 = vmatpush1.msra.mxu0 %v951
        %v953 = vand.u32 %v363, 4294901760
        %954 = vmatprep.subr.mxu0 %v953
        %v955 = vand.u32 %v362, 4294901760
        %956 = vmatpush1.msra.mxu0 %v955
        %v957 = vand.u32 %v365, 4294901760
        %958 = vmatprep.subr.mxu0 %v957
        %v959 = vand.u32 %v364, 4294901760
        %960 = vmatpush1.msra.mxu0 %v959
        %v961 = vand.u32 %v367, 4294901760
        %962 = vmatprep.subr.mxu0 %v961
        %v963 = vand.u32 %v366, 4294901760
        %964 = vmatpush1.msra.mxu0 %v963
        %v965 = vand.u32 %v369, 4294901760
        %966 = vmatprep.subr.mxu0 %v965
        %v967 = vand.u32 %v368, 4294901760
        %968 = vmatpush1.msra.mxu0 %v967
        %v969 = vand.u32 %v304, 4294901760
        %v970 = vsub.f32 %v304, %v969
        %v971 = vand.u32 %v970, 4294901760
        %v972 = vsub.f32 %v970, %v971
        %v973 = vand.u32 %v972, 4294901760
        %974 = vmatprep.mubr.f32.mxu0 %v973
        %v975 = vand.u32 %v303, 4294901760
        %v976 = vsub.f32 %v303, %v975
        %v977 = vand.u32 %v976, 4294901760
        %v978 = vsub.f32 %v976, %v977
        %v979 = vand.u32 %v978, 4294901760
        %980 = vmatmul.mubr.f32.gmra.mrb[0].mxu0 %v979
        %v981 = vpop.f32.mrb[0].mxu0
        %v982 = vadd.f32 %v837, %v981
        %v983 = vpop.f32.mrb[0].mxu0
        %v984 = vadd.f32 %v839, %v983
        %985 = vdwg.mxu0
        %v986 = vand.u32 %v307, 4294901760
        %v987 = vsub.f32 %v307, %v986
        %v988 = vand.u32 %v987, 4294901760
        %v989 = vsub.f32 %v987, %v988
        %v990 = vand.u32 %v989, 4294901760
        %991 = vmatprep.subr.mxu0 %v990
        %v992 = vand.u32 %v306, 4294901760
        %v993 = vsub.f32 %v306, %v992
        %v994 = vand.u32 %v993, 4294901760
        %v995 = vsub.f32 %v993, %v994
        %v996 = vand.u32 %v995, 4294901760
        %997 = vmatpush1.msra.mxu0 %v996
        %v998 = vand.u32 %v309, 4294901760
        %v999 = vsub.f32 %v309, %v998
        %v1000 = vand.u32 %v999, 4294901760
        %v1001 = vsub.f32 %v999, %v1000
        %v1002 = vand.u32 %v1001, 4294901760
        %1003 = vmatprep.subr.mxu0 %v1002
        %v1004 = vand.u32 %v308, 4294901760
        %v1005 = vsub.f32 %v308, %v1004
        %v1006 = vand.u32 %v1005, 4294901760
        %v1007 = vsub.f32 %v1005, %v1006
        %v1008 = vand.u32 %v1007, 4294901760
        %1009 = vmatpush1.msra.mxu0 %v1008
        %v1010 = vand.u32 %v311, 4294901760
        %v1011 = vsub.f32 %v311, %v1010
        %v1012 = vand.u32 %v1011, 4294901760
        %v1013 = vsub.f32 %v1011, %v1012
        %v1014 = vand.u32 %v1013, 4294901760
        %1015 = vmatprep.subr.mxu0 %v1014
        %v1016 = vand.u32 %v310, 4294901760
        %v1017 = vsub.f32 %v310, %v1016
        %v1018 = vand.u32 %v1017, 4294901760
        %v1019 = vsub.f32 %v1017, %v1018
        %v1020 = vand.u32 %v1019, 4294901760
        %1021 = vmatpush1.msra.mxu0 %v1020
        %v1022 = vand.u32 %v313, 4294901760
        %v1023 = vsub.f32 %v313, %v1022
        %v1024 = vand.u32 %v1023, 4294901760
        %v1025 = vsub.f32 %v1023, %v1024
        %v1026 = vand.u32 %v1025, 4294901760
        %1027 = vmatprep.subr.mxu0 %v1026
        %v1028 = vand.u32 %v312, 4294901760
        %v1029 = vsub.f32 %v312, %v1028
        %v1030 = vand.u32 %v1029, 4294901760
        %v1031 = vsub.f32 %v1029, %v1030
        %v1032 = vand.u32 %v1031, 4294901760
        %1033 = vmatpush1.msra.mxu0 %v1032
        %v1034 = vand.u32 %v315, 4294901760
        %v1035 = vsub.f32 %v315, %v1034
        %v1036 = vand.u32 %v1035, 4294901760
        %v1037 = vsub.f32 %v1035, %v1036
        %v1038 = vand.u32 %v1037, 4294901760
        %1039 = vmatprep.subr.mxu0 %v1038
        %v1040 = vand.u32 %v314, 4294901760
        %v1041 = vsub.f32 %v314, %v1040
        %v1042 = vand.u32 %v1041, 4294901760
        %v1043 = vsub.f32 %v1041, %v1042
        %v1044 = vand.u32 %v1043, 4294901760
        %1045 = vmatpush1.msra.mxu0 %v1044
        %v1046 = vand.u32 %v317, 4294901760
        %v1047 = vsub.f32 %v317, %v1046
        %v1048 = vand.u32 %v1047, 4294901760
        %v1049 = vsub.f32 %v1047, %v1048
        %v1050 = vand.u32 %v1049, 4294901760
        %1051 = vmatprep.subr.mxu0 %v1050
        %v1052 = vand.u32 %v316, 4294901760
        %v1053 = vsub.f32 %v316, %v1052
        %v1054 = vand.u32 %v1053, 4294901760
        %v1055 = vsub.f32 %v1053, %v1054
        %v1056 = vand.u32 %v1055, 4294901760
        %1057 = vmatpush1.msra.mxu0 %v1056
        %v1058 = vand.u32 %v319, 4294901760
        %v1059 = vsub.f32 %v319, %v1058
        %v1060 = vand.u32 %v1059, 4294901760
        %v1061 = vsub.f32 %v1059, %v1060
        %v1062 = vand.u32 %v1061, 4294901760
        %1063 = vmatprep.subr.mxu0 %v1062
        %v1064 = vand.u32 %v318, 4294901760
        %v1065 = vsub.f32 %v318, %v1064
        %v1066 = vand.u32 %v1065, 4294901760
        %v1067 = vsub.f32 %v1065, %v1066
        %v1068 = vand.u32 %v1067, 4294901760
        %1069 = vmatpush1.msra.mxu0 %v1068
        %v1070 = vand.u32 %v321, 4294901760
        %v1071 = vsub.f32 %v321, %v1070
        %v1072 = vand.u32 %v1071, 4294901760
        %v1073 = vsub.f32 %v1071, %v1072
        %v1074 = vand.u32 %v1073, 4294901760
        %1075 = vmatprep.subr.mxu0 %v1074
        %v1076 = vand.u32 %v320, 4294901760
        %v1077 = vsub.f32 %v320, %v1076
        %v1078 = vand.u32 %v1077, 4294901760
        %v1079 = vsub.f32 %v1077, %v1078
        %v1080 = vand.u32 %v1079, 4294901760
        %1081 = vmatpush1.msra.mxu0 %v1080
        %v1082 = vand.u32 %v323, 4294901760
        %v1083 = vsub.f32 %v323, %v1082
        %v1084 = vand.u32 %v1083, 4294901760
        %v1085 = vsub.f32 %v1083, %v1084
        %v1086 = vand.u32 %v1085, 4294901760
        %1087 = vmatprep.subr.mxu0 %v1086
        %v1088 = vand.u32 %v322, 4294901760
        %v1089 = vsub.f32 %v322, %v1088
        %v1090 = vand.u32 %v1089, 4294901760
        %v1091 = vsub.f32 %v1089, %v1090
        %v1092 = vand.u32 %v1091, 4294901760
        %1093 = vmatpush1.msra.mxu0 %v1092
        %v1094 = vand.u32 %v325, 4294901760
        %v1095 = vsub.f32 %v325, %v1094
        %v1096 = vand.u32 %v1095, 4294901760
        %v1097 = vsub.f32 %v1095, %v1096
        %v1098 = vand.u32 %v1097, 4294901760
        %1099 = vmatprep.subr.mxu0 %v1098
        %v1100 = vand.u32 %v324, 4294901760
        %v1101 = vsub.f32 %v324, %v1100
        %v1102 = vand.u32 %v1101, 4294901760
        %v1103 = vsub.f32 %v1101, %v1102
        %v1104 = vand.u32 %v1103, 4294901760
        %1105 = vmatpush1.msra.mxu0 %v1104
        %v1106 = vand.u32 %v327, 4294901760
        %v1107 = vsub.f32 %v327, %v1106
        %v1108 = vand.u32 %v1107, 4294901760
        %v1109 = vsub.f32 %v1107, %v1108
        %v1110 = vand.u32 %v1109, 4294901760
        %1111 = vmatprep.subr.mxu0 %v1110
        %v1112 = vand.u32 %v326, 4294901760
        %v1113 = vsub.f32 %v326, %v1112
        %v1114 = vand.u32 %v1113, 4294901760
        %v1115 = vsub.f32 %v1113, %v1114
        %v1116 = vand.u32 %v1115, 4294901760
        %1117 = vmatpush1.msra.mxu0 %v1116
        %v1118 = vand.u32 %v329, 4294901760
        %v1119 = vsub.f32 %v329, %v1118
        %v1120 = vand.u32 %v1119, 4294901760
        %v1121 = vsub.f32 %v1119, %v1120
        %v1122 = vand.u32 %v1121, 4294901760
        %1123 = vmatprep.subr.mxu0 %v1122
        %v1124 = vand.u32 %v328, 4294901760
        %v1125 = vsub.f32 %v328, %v1124
        %v1126 = vand.u32 %v1125, 4294901760
        %v1127 = vsub.f32 %v1125, %v1126
        %v1128 = vand.u32 %v1127, 4294901760
        %1129 = vmatpush1.msra.mxu0 %v1128
        %v1130 = vand.u32 %v331, 4294901760
        %v1131 = vsub.f32 %v331, %v1130
        %v1132 = vand.u32 %v1131, 4294901760
        %v1133 = vsub.f32 %v1131, %v1132
        %v1134 = vand.u32 %v1133, 4294901760
        %1135 = vmatprep.subr.mxu0 %v1134
        %v1136 = vand.u32 %v330, 4294901760
        %v1137 = vsub.f32 %v330, %v1136
        %v1138 = vand.u32 %v1137, 4294901760
        %v1139 = vsub.f32 %v1137, %v1138
        %v1140 = vand.u32 %v1139, 4294901760
        %1141 = vmatpush1.msra.mxu0 %v1140
        %v1142 = vand.u32 %v333, 4294901760
        %v1143 = vsub.f32 %v333, %v1142
        %v1144 = vand.u32 %v1143, 4294901760
        %v1145 = vsub.f32 %v1143, %v1144
        %v1146 = vand.u32 %v1145, 4294901760
        %1147 = vmatprep.subr.mxu0 %v1146
        %v1148 = vand.u32 %v332, 4294901760
        %v1149 = vsub.f32 %v332, %v1148
        %v1150 = vand.u32 %v1149, 4294901760
        %v1151 = vsub.f32 %v1149, %v1150
        %v1152 = vand.u32 %v1151, 4294901760
        %1153 = vmatpush1.msra.mxu0 %v1152
        %v1154 = vand.u32 %v335, 4294901760
        %v1155 = vsub.f32 %v335, %v1154
        %v1156 = vand.u32 %v1155, 4294901760
        %v1157 = vsub.f32 %v1155, %v1156
        %v1158 = vand.u32 %v1157, 4294901760
        %1159 = vmatprep.subr.mxu0 %v1158
        %v1160 = vand.u32 %v334, 4294901760
        %v1161 = vsub.f32 %v334, %v1160
        %v1162 = vand.u32 %v1161, 4294901760
        %v1163 = vsub.f32 %v1161, %v1162
        %v1164 = vand.u32 %v1163, 4294901760
        %1165 = vmatpush1.msra.mxu0 %v1164
        %v1166 = vand.u32 %v337, 4294901760
        %v1167 = vsub.f32 %v337, %v1166
        %v1168 = vand.u32 %v1167, 4294901760
        %v1169 = vsub.f32 %v1167, %v1168
        %v1170 = vand.u32 %v1169, 4294901760
        %1171 = vmatprep.subr.mxu0 %v1170
        %v1172 = vand.u32 %v336, 4294901760
        %v1173 = vsub.f32 %v336, %v1172
        %v1174 = vand.u32 %v1173, 4294901760
        %v1175 = vsub.f32 %v1173, %v1174
        %v1176 = vand.u32 %v1175, 4294901760
        %1177 = vmatpush1.msra.mxu0 %v1176
        %v1178 = vand.u32 %v339, 4294901760
        %v1179 = vsub.f32 %v339, %v1178
        %v1180 = vand.u32 %v1179, 4294901760
        %v1181 = vsub.f32 %v1179, %v1180
        %v1182 = vand.u32 %v1181, 4294901760
        %1183 = vmatprep.subr.mxu0 %v1182
        %v1184 = vand.u32 %v338, 4294901760
        %v1185 = vsub.f32 %v338, %v1184
        %v1186 = vand.u32 %v1185, 4294901760
        %v1187 = vsub.f32 %v1185, %v1186
        %v1188 = vand.u32 %v1187, 4294901760
        %1189 = vmatpush1.msra.mxu0 %v1188
        %v1190 = vand.u32 %v341, 4294901760
        %v1191 = vsub.f32 %v341, %v1190
        %v1192 = vand.u32 %v1191, 4294901760
        %v1193 = vsub.f32 %v1191, %v1192
        %v1194 = vand.u32 %v1193, 4294901760
        %1195 = vmatprep.subr.mxu0 %v1194
        %v1196 = vand.u32 %v340, 4294901760
        %v1197 = vsub.f32 %v340, %v1196
        %v1198 = vand.u32 %v1197, 4294901760
        %v1199 = vsub.f32 %v1197, %v1198
        %v1200 = vand.u32 %v1199, 4294901760
        %1201 = vmatpush1.msra.mxu0 %v1200
        %v1202 = vand.u32 %v343, 4294901760
        %v1203 = vsub.f32 %v343, %v1202
        %v1204 = vand.u32 %v1203, 4294901760
        %v1205 = vsub.f32 %v1203, %v1204
        %v1206 = vand.u32 %v1205, 4294901760
        %1207 = vmatprep.subr.mxu0 %v1206
        %v1208 = vand.u32 %v342, 4294901760
        %v1209 = vsub.f32 %v342, %v1208
        %v1210 = vand.u32 %v1209, 4294901760
        %v1211 = vsub.f32 %v1209, %v1210
        %v1212 = vand.u32 %v1211, 4294901760
        %1213 = vmatpush1.msra.mxu0 %v1212
        %v1214 = vand.u32 %v345, 4294901760
        %v1215 = vsub.f32 %v345, %v1214
        %v1216 = vand.u32 %v1215, 4294901760
        %v1217 = vsub.f32 %v1215, %v1216
        %v1218 = vand.u32 %v1217, 4294901760
        %1219 = vmatprep.subr.mxu0 %v1218
        %v1220 = vand.u32 %v344, 4294901760
        %v1221 = vsub.f32 %v344, %v1220
        %v1222 = vand.u32 %v1221, 4294901760
        %v1223 = vsub.f32 %v1221, %v1222
        %v1224 = vand.u32 %v1223, 4294901760
        %1225 = vmatpush1.msra.mxu0 %v1224
        %v1226 = vand.u32 %v347, 4294901760
        %v1227 = vsub.f32 %v347, %v1226
        %v1228 = vand.u32 %v1227, 4294901760
        %v1229 = vsub.f32 %v1227, %v1228
        %v1230 = vand.u32 %v1229, 4294901760
        %1231 = vmatprep.subr.mxu0 %v1230
        %v1232 = vand.u32 %v346, 4294901760
        %v1233 = vsub.f32 %v346, %v1232
        %v1234 = vand.u32 %v1233, 4294901760
        %v1235 = vsub.f32 %v1233, %v1234
        %v1236 = vand.u32 %v1235, 4294901760
        %1237 = vmatpush1.msra.mxu0 %v1236
        %v1238 = vand.u32 %v349, 4294901760
        %v1239 = vsub.f32 %v349, %v1238
        %v1240 = vand.u32 %v1239, 4294901760
        %v1241 = vsub.f32 %v1239, %v1240
        %v1242 = vand.u32 %v1241, 4294901760
        %1243 = vmatprep.subr.mxu0 %v1242
        %v1244 = vand.u32 %v348, 4294901760
        %v1245 = vsub.f32 %v348, %v1244
        %v1246 = vand.u32 %v1245, 4294901760
        %v1247 = vsub.f32 %v1245, %v1246
        %v1248 = vand.u32 %v1247, 4294901760
        %1249 = vmatpush1.msra.mxu0 %v1248
        %v1250 = vand.u32 %v351, 4294901760
        %v1251 = vsub.f32 %v351, %v1250
        %v1252 = vand.u32 %v1251, 4294901760
        %v1253 = vsub.f32 %v1251, %v1252
        %v1254 = vand.u32 %v1253, 4294901760
        %1255 = vmatprep.subr.mxu0 %v1254
        %v1256 = vand.u32 %v350, 4294901760
        %v1257 = vsub.f32 %v350, %v1256
        %v1258 = vand.u32 %v1257, 4294901760
        %v1259 = vsub.f32 %v1257, %v1258
        %v1260 = vand.u32 %v1259, 4294901760
        %1261 = vmatpush1.msra.mxu0 %v1260
        %v1262 = vand.u32 %v353, 4294901760
        %v1263 = vsub.f32 %v353, %v1262
        %v1264 = vand.u32 %v1263, 4294901760
        %v1265 = vsub.f32 %v1263, %v1264
        %v1266 = vand.u32 %v1265, 4294901760
        %1267 = vmatprep.subr.mxu0 %v1266
        %v1268 = vand.u32 %v352, 4294901760
        %v1269 = vsub.f32 %v352, %v1268
        %v1270 = vand.u32 %v1269, 4294901760
        %v1271 = vsub.f32 %v1269, %v1270
        %v1272 = vand.u32 %v1271, 4294901760
        %1273 = vmatpush1.msra.mxu0 %v1272
        %v1274 = vand.u32 %v355, 4294901760
        %v1275 = vsub.f32 %v355, %v1274
        %v1276 = vand.u32 %v1275, 4294901760
        %v1277 = vsub.f32 %v1275, %v1276
        %v1278 = vand.u32 %v1277, 4294901760
        %1279 = vmatprep.subr.mxu0 %v1278
        %v1280 = vand.u32 %v354, 4294901760
        %v1281 = vsub.f32 %v354, %v1280
        %v1282 = vand.u32 %v1281, 4294901760
        %v1283 = vsub.f32 %v1281, %v1282
        %v1284 = vand.u32 %v1283, 4294901760
        %1285 = vmatpush1.msra.mxu0 %v1284
        %v1286 = vand.u32 %v357, 4294901760
        %v1287 = vsub.f32 %v357, %v1286
        %v1288 = vand.u32 %v1287, 4294901760
        %v1289 = vsub.f32 %v1287, %v1288
        %v1290 = vand.u32 %v1289, 4294901760
        %1291 = vmatprep.subr.mxu0 %v1290
        %v1292 = vand.u32 %v356, 4294901760
        %v1293 = vsub.f32 %v356, %v1292
        %v1294 = vand.u32 %v1293, 4294901760
        %v1295 = vsub.f32 %v1293, %v1294
        %v1296 = vand.u32 %v1295, 4294901760
        %1297 = vmatpush1.msra.mxu0 %v1296
        %v1298 = vand.u32 %v359, 4294901760
        %v1299 = vsub.f32 %v359, %v1298
        %v1300 = vand.u32 %v1299, 4294901760
        %v1301 = vsub.f32 %v1299, %v1300
        %v1302 = vand.u32 %v1301, 4294901760
        %1303 = vmatprep.subr.mxu0 %v1302
        %v1304 = vand.u32 %v358, 4294901760
        %v1305 = vsub.f32 %v358, %v1304
        %v1306 = vand.u32 %v1305, 4294901760
        %v1307 = vsub.f32 %v1305, %v1306
        %v1308 = vand.u32 %v1307, 4294901760
        %1309 = vmatpush1.msra.mxu0 %v1308
        %v1310 = vand.u32 %v361, 4294901760
        %v1311 = vsub.f32 %v361, %v1310
        %v1312 = vand.u32 %v1311, 4294901760
        %v1313 = vsub.f32 %v1311, %v1312
        %v1314 = vand.u32 %v1313, 4294901760
        %1315 = vmatprep.subr.mxu0 %v1314
        %v1316 = vand.u32 %v360, 4294901760
        %v1317 = vsub.f32 %v360, %v1316
        %v1318 = vand.u32 %v1317, 4294901760
        %v1319 = vsub.f32 %v1317, %v1318
        %v1320 = vand.u32 %v1319, 4294901760
        %1321 = vmatpush1.msra.mxu0 %v1320
        %v1322 = vand.u32 %v363, 4294901760
        %v1323 = vsub.f32 %v363, %v1322
        %v1324 = vand.u32 %v1323, 4294901760
        %v1325 = vsub.f32 %v1323, %v1324
        %v1326 = vand.u32 %v1325, 4294901760
        %1327 = vmatprep.subr.mxu0 %v1326
        %v1328 = vand.u32 %v362, 4294901760
        %v1329 = vsub.f32 %v362, %v1328
        %v1330 = vand.u32 %v1329, 4294901760
        %v1331 = vsub.f32 %v1329, %v1330
        %v1332 = vand.u32 %v1331, 4294901760
        %1333 = vmatpush1.msra.mxu0 %v1332
        %v1334 = vand.u32 %v365, 4294901760
        %v1335 = vsub.f32 %v365, %v1334
        %v1336 = vand.u32 %v1335, 4294901760
        %v1337 = vsub.f32 %v1335, %v1336
        %v1338 = vand.u32 %v1337, 4294901760
        %1339 = vmatprep.subr.mxu0 %v1338
        %v1340 = vand.u32 %v364, 4294901760
        %v1341 = vsub.f32 %v364, %v1340
        %v1342 = vand.u32 %v1341, 4294901760
        %v1343 = vsub.f32 %v1341, %v1342
        %v1344 = vand.u32 %v1343, 4294901760
        %1345 = vmatpush1.msra.mxu0 %v1344
        %v1346 = vand.u32 %v367, 4294901760
        %v1347 = vsub.f32 %v367, %v1346
        %v1348 = vand.u32 %v1347, 4294901760
        %v1349 = vsub.f32 %v1347, %v1348
        %v1350 = vand.u32 %v1349, 4294901760
        %1351 = vmatprep.subr.mxu0 %v1350
        %v1352 = vand.u32 %v366, 4294901760
        %v1353 = vsub.f32 %v366, %v1352
        %v1354 = vand.u32 %v1353, 4294901760
        %v1355 = vsub.f32 %v1353, %v1354
        %v1356 = vand.u32 %v1355, 4294901760
        %1357 = vmatpush1.msra.mxu0 %v1356
        %v1358 = vand.u32 %v369, 4294901760
        %v1359 = vsub.f32 %v369, %v1358
        %v1360 = vand.u32 %v1359, 4294901760
        %v1361 = vsub.f32 %v1359, %v1360
        %v1362 = vand.u32 %v1361, 4294901760
        %1363 = vmatprep.subr.mxu0 %v1362
        %v1364 = vand.u32 %v368, 4294901760
        %v1365 = vsub.f32 %v368, %v1364
        %v1366 = vand.u32 %v1365, 4294901760
        %v1367 = vsub.f32 %v1365, %v1366
        %v1368 = vand.u32 %v1367, 4294901760
        %1369 = vmatpush1.msra.mxu0 %v1368
        %v1370 = vand.u32 %v304, 4294901760
        %1371 = vmatprep.mubr.f32.mxu0 %v1370
        %v1372 = vand.u32 %v303, 4294901760
        %1373 = vmatmul.mubr.f32.gmra.mrb[0].mxu0 %v1372
        %v1374 = vpop.f32.mrb[0].mxu0
        %v1375 = vadd.f32 %v982, %v1374
        %v1376 = vpop.f32.mrb[0].mxu0
        %v1377 = vadd.f32 %v984, %v1376
        %1378 = vdwg.mxu0
        %v1379 = vand.u32 %v307, 4294901760
        %v1380 = vsub.f32 %v307, %v1379
        %1381 = vmatprep.subr.mxu0 %v1380
        %v1382 = vand.u32 %v306, 4294901760
        %v1383 = vsub.f32 %v306, %v1382
        %1384 = vmatpush1.msra.mxu0 %v1383
        %v1385 = vand.u32 %v309, 4294901760
        %v1386 = vsub.f32 %v309, %v1385
        %1387 = vmatprep.subr.mxu0 %v1386
        %v1388 = vand.u32 %v308, 4294901760
        %v1389 = vsub.f32 %v308, %v1388
        %1390 = vmatpush1.msra.mxu0 %v1389
        %v1391 = vand.u32 %v311, 4294901760
        %v1392 = vsub.f32 %v311, %v1391
        %1393 = vmatprep.subr.mxu0 %v1392
        %v1394 = vand.u32 %v310, 4294901760
        %v1395 = vsub.f32 %v310, %v1394
        %1396 = vmatpush1.msra.mxu0 %v1395
        %v1397 = vand.u32 %v313, 4294901760
        %v1398 = vsub.f32 %v313, %v1397
        %1399 = vmatprep.subr.mxu0 %v1398
        %v1400 = vand.u32 %v312, 4294901760
        %v1401 = vsub.f32 %v312, %v1400
        %1402 = vmatpush1.msra.mxu0 %v1401
        %v1403 = vand.u32 %v315, 4294901760
        %v1404 = vsub.f32 %v315, %v1403
        %1405 = vmatprep.subr.mxu0 %v1404
        %v1406 = vand.u32 %v314, 4294901760
        %v1407 = vsub.f32 %v314, %v1406
        %1408 = vmatpush1.msra.mxu0 %v1407
        %v1409 = vand.u32 %v317, 4294901760
        %v1410 = vsub.f32 %v317, %v1409
        %1411 = vmatprep.subr.mxu0 %v1410
        %v1412 = vand.u32 %v316, 4294901760
        %v1413 = vsub.f32 %v316, %v1412
        %1414 = vmatpush1.msra.mxu0 %v1413
        %v1415 = vand.u32 %v319, 4294901760
        %v1416 = vsub.f32 %v319, %v1415
        %1417 = vmatprep.subr.mxu0 %v1416
        %v1418 = vand.u32 %v318, 4294901760
        %v1419 = vsub.f32 %v318, %v1418
        %1420 = vmatpush1.msra.mxu0 %v1419
        %v1421 = vand.u32 %v321, 4294901760
        %v1422 = vsub.f32 %v321, %v1421
        %1423 = vmatprep.subr.mxu0 %v1422
        %v1424 = vand.u32 %v320, 4294901760
        %v1425 = vsub.f32 %v320, %v1424
        %1426 = vmatpush1.msra.mxu0 %v1425
        %v1427 = vand.u32 %v323, 4294901760
        %v1428 = vsub.f32 %v323, %v1427
        %1429 = vmatprep.subr.mxu0 %v1428
        %v1430 = vand.u32 %v322, 4294901760
        %v1431 = vsub.f32 %v322, %v1430
        %1432 = vmatpush1.msra.mxu0 %v1431
        %v1433 = vand.u32 %v325, 4294901760
        %v1434 = vsub.f32 %v325, %v1433
        %1435 = vmatprep.subr.mxu0 %v1434
        %v1436 = vand.u32 %v324, 4294901760
        %v1437 = vsub.f32 %v324, %v1436
        %1438 = vmatpush1.msra.mxu0 %v1437
        %v1439 = vand.u32 %v327, 4294901760
        %v1440 = vsub.f32 %v327, %v1439
        %1441 = vmatprep.subr.mxu0 %v1440
        %v1442 = vand.u32 %v326, 4294901760
        %v1443 = vsub.f32 %v326, %v1442
        %1444 = vmatpush1.msra.mxu0 %v1443
        %v1445 = vand.u32 %v329, 4294901760
        %v1446 = vsub.f32 %v329, %v1445
        %1447 = vmatprep.subr.mxu0 %v1446
        %v1448 = vand.u32 %v328, 4294901760
        %v1449 = vsub.f32 %v328, %v1448
        %1450 = vmatpush1.msra.mxu0 %v1449
        %v1451 = vand.u32 %v331, 4294901760
        %v1452 = vsub.f32 %v331, %v1451
        %1453 = vmatprep.subr.mxu0 %v1452
        %v1454 = vand.u32 %v330, 4294901760
        %v1455 = vsub.f32 %v330, %v1454
        %1456 = vmatpush1.msra.mxu0 %v1455
        %v1457 = vand.u32 %v333, 4294901760
        %v1458 = vsub.f32 %v333, %v1457
        %1459 = vmatprep.subr.mxu0 %v1458
        %v1460 = vand.u32 %v332, 4294901760
        %v1461 = vsub.f32 %v332, %v1460
        %1462 = vmatpush1.msra.mxu0 %v1461
        %v1463 = vand.u32 %v335, 4294901760
        %v1464 = vsub.f32 %v335, %v1463
        %1465 = vmatprep.subr.mxu0 %v1464
        %v1466 = vand.u32 %v334, 4294901760
        %v1467 = vsub.f32 %v334, %v1466
        %1468 = vmatpush1.msra.mxu0 %v1467
        %v1469 = vand.u32 %v337, 4294901760
        %v1470 = vsub.f32 %v337, %v1469
        %1471 = vmatprep.subr.mxu0 %v1470
        %v1472 = vand.u32 %v336, 4294901760
        %v1473 = vsub.f32 %v336, %v1472
        %1474 = vmatpush1.msra.mxu0 %v1473
        %v1475 = vand.u32 %v339, 4294901760
        %v1476 = vsub.f32 %v339, %v1475
        %1477 = vmatprep.subr.mxu0 %v1476
        %v1478 = vand.u32 %v338, 4294901760
        %v1479 = vsub.f32 %v338, %v1478
        %1480 = vmatpush1.msra.mxu0 %v1479
        %v1481 = vand.u32 %v341, 4294901760
        %v1482 = vsub.f32 %v341, %v1481
        %1483 = vmatprep.subr.mxu0 %v1482
        %v1484 = vand.u32 %v340, 4294901760
        %v1485 = vsub.f32 %v340, %v1484
        %1486 = vmatpush1.msra.mxu0 %v1485
        %v1487 = vand.u32 %v343, 4294901760
        %v1488 = vsub.f32 %v343, %v1487
        %1489 = vmatprep.subr.mxu0 %v1488
        %v1490 = vand.u32 %v342, 4294901760
        %v1491 = vsub.f32 %v342, %v1490
        %1492 = vmatpush1.msra.mxu0 %v1491
        %v1493 = vand.u32 %v345, 4294901760
        %v1494 = vsub.f32 %v345, %v1493
        %1495 = vmatprep.subr.mxu0 %v1494
        %v1496 = vand.u32 %v344, 4294901760
        %v1497 = vsub.f32 %v344, %v1496
        %1498 = vmatpush1.msra.mxu0 %v1497
        %v1499 = vand.u32 %v347, 4294901760
        %v1500 = vsub.f32 %v347, %v1499
        %1501 = vmatprep.subr.mxu0 %v1500
        %v1502 = vand.u32 %v346, 4294901760
        %v1503 = vsub.f32 %v346, %v1502
        %1504 = vmatpush1.msra.mxu0 %v1503
        %v1505 = vand.u32 %v349, 4294901760
        %v1506 = vsub.f32 %v349, %v1505
        %1507 = vmatprep.subr.mxu0 %v1506
        %v1508 = vand.u32 %v348, 4294901760
        %v1509 = vsub.f32 %v348, %v1508
        %1510 = vmatpush1.msra.mxu0 %v1509
        %v1511 = vand.u32 %v351, 4294901760
        %v1512 = vsub.f32 %v351, %v1511
        %1513 = vmatprep.subr.mxu0 %v1512
        %v1514 = vand.u32 %v350, 4294901760
        %v1515 = vsub.f32 %v350, %v1514
        %1516 = vmatpush1.msra.mxu0 %v1515
        %v1517 = vand.u32 %v353, 4294901760
        %v1518 = vsub.f32 %v353, %v1517
        %1519 = vmatprep.subr.mxu0 %v1518
        %v1520 = vand.u32 %v352, 4294901760
        %v1521 = vsub.f32 %v352, %v1520
        %1522 = vmatpush1.msra.mxu0 %v1521
        %v1523 = vand.u32 %v355, 4294901760
        %v1524 = vsub.f32 %v355, %v1523
        %1525 = vmatprep.subr.mxu0 %v1524
        %v1526 = vand.u32 %v354, 4294901760
        %v1527 = vsub.f32 %v354, %v1526
        %1528 = vmatpush1.msra.mxu0 %v1527
        %v1529 = vand.u32 %v357, 4294901760
        %v1530 = vsub.f32 %v357, %v1529
        %1531 = vmatprep.subr.mxu0 %v1530
        %v1532 = vand.u32 %v356, 4294901760
        %v1533 = vsub.f32 %v356, %v1532
        %1534 = vmatpush1.msra.mxu0 %v1533
        %v1535 = vand.u32 %v359, 4294901760
        %v1536 = vsub.f32 %v359, %v1535
        %1537 = vmatprep.subr.mxu0 %v1536
        %v1538 = vand.u32 %v358, 4294901760
        %v1539 = vsub.f32 %v358, %v1538
        %1540 = vmatpush1.msra.mxu0 %v1539
        %v1541 = vand.u32 %v361, 4294901760
        %v1542 = vsub.f32 %v361, %v1541
        %1543 = vmatprep.subr.mxu0 %v1542
        %v1544 = vand.u32 %v360, 4294901760
        %v1545 = vsub.f32 %v360, %v1544
        %1546 = vmatpush1.msra.mxu0 %v1545
        %v1547 = vand.u32 %v363, 4294901760
        %v1548 = vsub.f32 %v363, %v1547
        %1549 = vmatprep.subr.mxu0 %v1548
        %v1550 = vand.u32 %v362, 4294901760
        %v1551 = vsub.f32 %v362, %v1550
        %1552 = vmatpush1.msra.mxu0 %v1551
        %v1553 = vand.u32 %v365, 4294901760
        %v1554 = vsub.f32 %v365, %v1553
        %1555 = vmatprep.subr.mxu0 %v1554
        %v1556 = vand.u32 %v364, 4294901760
        %v1557 = vsub.f32 %v364, %v1556
        %1558 = vmatpush1.msra.mxu0 %v1557
        %v1559 = vand.u32 %v367, 4294901760
        %v1560 = vsub.f32 %v367, %v1559
        %1561 = vmatprep.subr.mxu0 %v1560
        %v1562 = vand.u32 %v366, 4294901760
        %v1563 = vsub.f32 %v366, %v1562
        %1564 = vmatpush1.msra.mxu0 %v1563
        %v1565 = vand.u32 %v369, 4294901760
        %v1566 = vsub.f32 %v369, %v1565
        %1567 = vmatprep.subr.mxu0 %v1566
        %v1568 = vand.u32 %v368, 4294901760
        %v1569 = vsub.f32 %v368, %v1568
        %1570 = vmatpush1.msra.mxu0 %v1569
        %v1571 = vand.u32 %v304, 4294901760
        %v1572 = vsub.f32 %v304, %v1571
        %1573 = vmatprep.mubr.f32.mxu0 %v1572
        %v1574 = vand.u32 %v303, 4294901760
        %v1575 = vsub.f32 %v303, %v1574
        %1576 = vmatmul.mubr.f32.gmra.mrb[0].mxu0 %v1575
        %v1577 = vpop.f32.mrb[0].mxu0
        %v1578 = vadd.f32 %v1375, %v1577
        %v1579 = vpop.f32.mrb[0].mxu0
        %v1580 = vadd.f32 %v1377, %v1579
        %1581 = vdwg.mxu0
        %v1582 = vand.u32 %v307, 4294901760
        %1583 = vmatprep.subr.mxu0 %v1582
        %v1584 = vand.u32 %v306, 4294901760
        %1585 = vmatpush1.msra.mxu0 %v1584
        %v1586 = vand.u32 %v309, 4294901760
        %1587 = vmatprep.subr.mxu0 %v1586
        %v1588 = vand.u32 %v308, 4294901760
        %1589 = vmatpush1.msra.mxu0 %v1588
        %v1590 = vand.u32 %v311, 4294901760
        %1591 = vmatprep.subr.mxu0 %v1590
        %v1592 = vand.u32 %v310, 4294901760
        %1593 = vmatpush1.msra.mxu0 %v1592
        %v1594 = vand.u32 %v313, 4294901760
        %1595 = vmatprep.subr.mxu0 %v1594
        %v1596 = vand.u32 %v312, 4294901760
        %1597 = vmatpush1.msra.mxu0 %v1596
        %v1598 = vand.u32 %v315, 4294901760
        %1599 = vmatprep.subr.mxu0 %v1598
        %v1600 = vand.u32 %v314, 4294901760
        %1601 = vmatpush1.msra.mxu0 %v1600
        %v1602 = vand.u32 %v317, 4294901760
        %1603 = vmatprep.subr.mxu0 %v1602
        %v1604 = vand.u32 %v316, 4294901760
        %1605 = vmatpush1.msra.mxu0 %v1604
        %v1606 = vand.u32 %v319, 4294901760
        %1607 = vmatprep.subr.mxu0 %v1606
        %v1608 = vand.u32 %v318, 4294901760
        %1609 = vmatpush1.msra.mxu0 %v1608
        %v1610 = vand.u32 %v321, 4294901760
        %1611 = vmatprep.subr.mxu0 %v1610
        %v1612 = vand.u32 %v320, 4294901760
        %1613 = vmatpush1.msra.mxu0 %v1612
        %v1614 = vand.u32 %v323, 4294901760
        %1615 = vmatprep.subr.mxu0 %v1614
        %v1616 = vand.u32 %v322, 4294901760
        %1617 = vmatpush1.msra.mxu0 %v1616
        %v1618 = vand.u32 %v325, 4294901760
        %1619 = vmatprep.subr.mxu0 %v1618
        %v1620 = vand.u32 %v324, 4294901760
        %1621 = vmatpush1.msra.mxu0 %v1620
        %v1622 = vand.u32 %v327, 4294901760
        %1623 = vmatprep.subr.mxu0 %v1622
        %v1624 = vand.u32 %v326, 4294901760
        %1625 = vmatpush1.msra.mxu0 %v1624
        %v1626 = vand.u32 %v329, 4294901760
        %1627 = vmatprep.subr.mxu0 %v1626
        %v1628 = vand.u32 %v328, 4294901760
        %1629 = vmatpush1.msra.mxu0 %v1628
        %v1630 = vand.u32 %v331, 4294901760
        %1631 = vmatprep.subr.mxu0 %v1630
        %v1632 = vand.u32 %v330, 4294901760
        %1633 = vmatpush1.msra.mxu0 %v1632
        %v1634 = vand.u32 %v333, 4294901760
        %1635 = vmatprep.subr.mxu0 %v1634
        %v1636 = vand.u32 %v332, 4294901760
        %1637 = vmatpush1.msra.mxu0 %v1636
        %v1638 = vand.u32 %v335, 4294901760
        %1639 = vmatprep.subr.mxu0 %v1638
        %v1640 = vand.u32 %v334, 4294901760
        %1641 = vmatpush1.msra.mxu0 %v1640
        %v1642 = vand.u32 %v337, 4294901760
        %1643 = vmatprep.subr.mxu0 %v1642
        %v1644 = vand.u32 %v336, 4294901760
        %1645 = vmatpush1.msra.mxu0 %v1644
        %v1646 = vand.u32 %v339, 4294901760
        %1647 = vmatprep.subr.mxu0 %v1646
        %v1648 = vand.u32 %v338, 4294901760
        %1649 = vmatpush1.msra.mxu0 %v1648
        %v1650 = vand.u32 %v341, 4294901760
        %1651 = vmatprep.subr.mxu0 %v1650
        %v1652 = vand.u32 %v340, 4294901760
        %1653 = vmatpush1.msra.mxu0 %v1652
        %v1654 = vand.u32 %v343, 4294901760
        %1655 = vmatprep.subr.mxu0 %v1654
        %v1656 = vand.u32 %v342, 4294901760
        %1657 = vmatpush1.msra.mxu0 %v1656
        %v1658 = vand.u32 %v345, 4294901760
        %1659 = vmatprep.subr.mxu0 %v1658
        %v1660 = vand.u32 %v344, 4294901760
        %1661 = vmatpush1.msra.mxu0 %v1660
        %v1662 = vand.u32 %v347, 4294901760
        %1663 = vmatprep.subr.mxu0 %v1662
        %v1664 = vand.u32 %v346, 4294901760
        %1665 = vmatpush1.msra.mxu0 %v1664
        %v1666 = vand.u32 %v349, 4294901760
        %1667 = vmatprep.subr.mxu0 %v1666
        %v1668 = vand.u32 %v348, 4294901760
        %1669 = vmatpush1.msra.mxu0 %v1668
        %v1670 = vand.u32 %v351, 4294901760
        %1671 = vmatprep.subr.mxu0 %v1670
        %v1672 = vand.u32 %v350, 4294901760
        %1673 = vmatpush1.msra.mxu0 %v1672
        %v1674 = vand.u32 %v353, 4294901760
        %1675 = vmatprep.subr.mxu0 %v1674
        %v1676 = vand.u32 %v352, 4294901760
        %1677 = vmatpush1.msra.mxu0 %v1676
        %v1678 = vand.u32 %v355, 4294901760
        %1679 = vmatprep.subr.mxu0 %v1678
        %v1680 = vand.u32 %v354, 4294901760
        %1681 = vmatpush1.msra.mxu0 %v1680
        %v1682 = vand.u32 %v357, 4294901760
        %1683 = vmatprep.subr.mxu0 %v1682
        %v1684 = vand.u32 %v356, 4294901760
        %1685 = vmatpush1.msra.mxu0 %v1684
        %v1686 = vand.u32 %v359, 4294901760
        %1687 = vmatprep.subr.mxu0 %v1686
        %v1688 = vand.u32 %v358, 4294901760
        %1689 = vmatpush1.msra.mxu0 %v1688
        %v1690 = vand.u32 %v361, 4294901760
        %1691 = vmatprep.subr.mxu0 %v1690
        %v1692 = vand.u32 %v360, 4294901760
        %1693 = vmatpush1.msra.mxu0 %v1692
        %v1694 = vand.u32 %v363, 4294901760
        %1695 = vmatprep.subr.mxu0 %v1694
        %v1696 = vand.u32 %v362, 4294901760
        %1697 = vmatpush1.msra.mxu0 %v1696
        %v1698 = vand.u32 %v365, 4294901760
        %1699 = vmatprep.subr.mxu0 %v1698
        %v1700 = vand.u32 %v364, 4294901760
        %1701 = vmatpush1.msra.mxu0 %v1700
        %v1702 = vand.u32 %v367, 4294901760
        %1703 = vmatprep.subr.mxu0 %v1702
        %v1704 = vand.u32 %v366, 4294901760
        %1705 = vmatpush1.msra.mxu0 %v1704
        %v1706 = vand.u32 %v369, 4294901760
        %1707 = vmatprep.subr.mxu0 %v1706
        %v1708 = vand.u32 %v368, 4294901760
        %1709 = vmatpush1.msra.mxu0 %v1708
        %v1710 = vand.u32 %v304, 4294901760
        %v1711 = vsub.f32 %v304, %v1710
        %v1712 = vand.u32 %v1711, 4294901760
        %1713 = vmatprep.mubr.f32.mxu0 %v1712
        %v1714 = vand.u32 %v303, 4294901760
        %v1715 = vsub.f32 %v303, %v1714
        %v1716 = vand.u32 %v1715, 4294901760
        %1717 = vmatmul.mubr.f32.gmra.mrb[0].mxu0 %v1716
        %v1718 = vpop.f32.mrb[0].mxu0
        %v1719 = vadd.f32 %v1578, %v1718
        %v1720 = vpop.f32.mrb[0].mxu0
        %v1721 = vadd.f32 %v1580, %v1720
        %1722 = vdwg.mxu0
        %v1723 = vand.u32 %v307, 4294901760
        %v1724 = vsub.f32 %v307, %v1723
        %v1725 = vand.u32 %v1724, 4294901760
        %1726 = vmatprep.subr.mxu0 %v1725
        %v1727 = vand.u32 %v306, 4294901760
        %v1728 = vsub.f32 %v306, %v1727
        %v1729 = vand.u32 %v1728, 4294901760
        %1730 = vmatpush1.msra.mxu0 %v1729
        %v1731 = vand.u32 %v309, 4294901760
        %v1732 = vsub.f32 %v309, %v1731
        %v1733 = vand.u32 %v1732, 4294901760
        %1734 = vmatprep.subr.mxu0 %v1733
        %v1735 = vand.u32 %v308, 4294901760
        %v1736 = vsub.f32 %v308, %v1735
        %v1737 = vand.u32 %v1736, 4294901760
        %1738 = vmatpush1.msra.mxu0 %v1737
        %v1739 = vand.u32 %v311, 4294901760
        %v1740 = vsub.f32 %v311, %v1739
        %v1741 = vand.u32 %v1740, 4294901760
        %1742 = vmatprep.subr.mxu0 %v1741
        %v1743 = vand.u32 %v310, 4294901760
        %v1744 = vsub.f32 %v310, %v1743
        %v1745 = vand.u32 %v1744, 4294901760
        %1746 = vmatpush1.msra.mxu0 %v1745
        %v1747 = vand.u32 %v313, 4294901760
        %v1748 = vsub.f32 %v313, %v1747
        %v1749 = vand.u32 %v1748, 4294901760
        %1750 = vmatprep.subr.mxu0 %v1749
        %v1751 = vand.u32 %v312, 4294901760
        %v1752 = vsub.f32 %v312, %v1751
        %v1753 = vand.u32 %v1752, 4294901760
        %1754 = vmatpush1.msra.mxu0 %v1753
        %v1755 = vand.u32 %v315, 4294901760
        %v1756 = vsub.f32 %v315, %v1755
        %v1757 = vand.u32 %v1756, 4294901760
        %1758 = vmatprep.subr.mxu0 %v1757
        %v1759 = vand.u32 %v314, 4294901760
        %v1760 = vsub.f32 %v314, %v1759
        %v1761 = vand.u32 %v1760, 4294901760
        %1762 = vmatpush1.msra.mxu0 %v1761
        %v1763 = vand.u32 %v317, 4294901760
        %v1764 = vsub.f32 %v317, %v1763
        %v1765 = vand.u32 %v1764, 4294901760
        %1766 = vmatprep.subr.mxu0 %v1765
        %v1767 = vand.u32 %v316, 4294901760
        %v1768 = vsub.f32 %v316, %v1767
        %v1769 = vand.u32 %v1768, 4294901760
        %1770 = vmatpush1.msra.mxu0 %v1769
        %v1771 = vand.u32 %v319, 4294901760
        %v1772 = vsub.f32 %v319, %v1771
        %v1773 = vand.u32 %v1772, 4294901760
        %1774 = vmatprep.subr.mxu0 %v1773
        %v1775 = vand.u32 %v318, 4294901760
        %v1776 = vsub.f32 %v318, %v1775
        %v1777 = vand.u32 %v1776, 4294901760
        %1778 = vmatpush1.msra.mxu0 %v1777
        %v1779 = vand.u32 %v321, 4294901760
        %v1780 = vsub.f32 %v321, %v1779
        %v1781 = vand.u32 %v1780, 4294901760
        %1782 = vmatprep.subr.mxu0 %v1781
        %v1783 = vand.u32 %v320, 4294901760
        %v1784 = vsub.f32 %v320, %v1783
        %v1785 = vand.u32 %v1784, 4294901760
        %1786 = vmatpush1.msra.mxu0 %v1785
        %v1787 = vand.u32 %v323, 4294901760
        %v1788 = vsub.f32 %v323, %v1787
        %v1789 = vand.u32 %v1788, 4294901760
        %1790 = vmatprep.subr.mxu0 %v1789
        %v1791 = vand.u32 %v322, 4294901760
        %v1792 = vsub.f32 %v322, %v1791
        %v1793 = vand.u32 %v1792, 4294901760
        %1794 = vmatpush1.msra.mxu0 %v1793
        %v1795 = vand.u32 %v325, 4294901760
        %v1796 = vsub.f32 %v325, %v1795
        %v1797 = vand.u32 %v1796, 4294901760
        %1798 = vmatprep.subr.mxu0 %v1797
        %v1799 = vand.u32 %v324, 4294901760
        %v1800 = vsub.f32 %v324, %v1799
        %v1801 = vand.u32 %v1800, 4294901760
        %1802 = vmatpush1.msra.mxu0 %v1801
        %v1803 = vand.u32 %v327, 4294901760
        %v1804 = vsub.f32 %v327, %v1803
        %v1805 = vand.u32 %v1804, 4294901760
        %1806 = vmatprep.subr.mxu0 %v1805
        %v1807 = vand.u32 %v326, 4294901760
        %v1808 = vsub.f32 %v326, %v1807
        %v1809 = vand.u32 %v1808, 4294901760
        %1810 = vmatpush1.msra.mxu0 %v1809
        %v1811 = vand.u32 %v329, 4294901760
        %v1812 = vsub.f32 %v329, %v1811
        %v1813 = vand.u32 %v1812, 4294901760
        %1814 = vmatprep.subr.mxu0 %v1813
        %v1815 = vand.u32 %v328, 4294901760
        %v1816 = vsub.f32 %v328, %v1815
        %v1817 = vand.u32 %v1816, 4294901760
        %1818 = vmatpush1.msra.mxu0 %v1817
        %v1819 = vand.u32 %v331, 4294901760
        %v1820 = vsub.f32 %v331, %v1819
        %v1821 = vand.u32 %v1820, 4294901760
        %1822 = vmatprep.subr.mxu0 %v1821
        %v1823 = vand.u32 %v330, 4294901760
        %v1824 = vsub.f32 %v330, %v1823
        %v1825 = vand.u32 %v1824, 4294901760
        %1826 = vmatpush1.msra.mxu0 %v1825
        %v1827 = vand.u32 %v333, 4294901760
        %v1828 = vsub.f32 %v333, %v1827
        %v1829 = vand.u32 %v1828, 4294901760
        %1830 = vmatprep.subr.mxu0 %v1829
        %v1831 = vand.u32 %v332, 4294901760
        %v1832 = vsub.f32 %v332, %v1831
        %v1833 = vand.u32 %v1832, 4294901760
        %1834 = vmatpush1.msra.mxu0 %v1833
        %v1835 = vand.u32 %v335, 4294901760
        %v1836 = vsub.f32 %v335, %v1835
        %v1837 = vand.u32 %v1836, 4294901760
        %1838 = vmatprep.subr.mxu0 %v1837
        %v1839 = vand.u32 %v334, 4294901760
        %v1840 = vsub.f32 %v334, %v1839
        %v1841 = vand.u32 %v1840, 4294901760
        %1842 = vmatpush1.msra.mxu0 %v1841
        %v1843 = vand.u32 %v337, 4294901760
        %v1844 = vsub.f32 %v337, %v1843
        %v1845 = vand.u32 %v1844, 4294901760
        %1846 = vmatprep.subr.mxu0 %v1845
        %v1847 = vand.u32 %v336, 4294901760
        %v1848 = vsub.f32 %v336, %v1847
        %v1849 = vand.u32 %v1848, 4294901760
        %1850 = vmatpush1.msra.mxu0 %v1849
        %v1851 = vand.u32 %v339, 4294901760
        %v1852 = vsub.f32 %v339, %v1851
        %v1853 = vand.u32 %v1852, 4294901760
        %1854 = vmatprep.subr.mxu0 %v1853
        %v1855 = vand.u32 %v338, 4294901760
        %v1856 = vsub.f32 %v338, %v1855
        %v1857 = vand.u32 %v1856, 4294901760
        %1858 = vmatpush1.msra.mxu0 %v1857
        %v1859 = vand.u32 %v341, 4294901760
        %v1860 = vsub.f32 %v341, %v1859
        %v1861 = vand.u32 %v1860, 4294901760
        %1862 = vmatprep.subr.mxu0 %v1861
        %v1863 = vand.u32 %v340, 4294901760
        %v1864 = vsub.f32 %v340, %v1863
        %v1865 = vand.u32 %v1864, 4294901760
        %1866 = vmatpush1.msra.mxu0 %v1865
        %v1867 = vand.u32 %v343, 4294901760
        %v1868 = vsub.f32 %v343, %v1867
        %v1869 = vand.u32 %v1868, 4294901760
        %1870 = vmatprep.subr.mxu0 %v1869
        %v1871 = vand.u32 %v342, 4294901760
        %v1872 = vsub.f32 %v342, %v1871
        %v1873 = vand.u32 %v1872, 4294901760
        %1874 = vmatpush1.msra.mxu0 %v1873
        %v1875 = vand.u32 %v345, 4294901760
        %v1876 = vsub.f32 %v345, %v1875
        %v1877 = vand.u32 %v1876, 4294901760
        %1878 = vmatprep.subr.mxu0 %v1877
        %v1879 = vand.u32 %v344, 4294901760
        %v1880 = vsub.f32 %v344, %v1879
        %v1881 = vand.u32 %v1880, 4294901760
        %1882 = vmatpush1.msra.mxu0 %v1881
        %v1883 = vand.u32 %v347, 4294901760
        %v1884 = vsub.f32 %v347, %v1883
        %v1885 = vand.u32 %v1884, 4294901760
        %1886 = vmatprep.subr.mxu0 %v1885
        %v1887 = vand.u32 %v346, 4294901760
        %v1888 = vsub.f32 %v346, %v1887
        %v1889 = vand.u32 %v1888, 4294901760
        %1890 = vmatpush1.msra.mxu0 %v1889
        %v1891 = vand.u32 %v349, 4294901760
        %v1892 = vsub.f32 %v349, %v1891
        %v1893 = vand.u32 %v1892, 4294901760
        %1894 = vmatprep.subr.mxu0 %v1893
        %v1895 = vand.u32 %v348, 4294901760
        %v1896 = vsub.f32 %v348, %v1895
        %v1897 = vand.u32 %v1896, 4294901760
        %1898 = vmatpush1.msra.mxu0 %v1897
        %v1899 = vand.u32 %v351, 4294901760
        %v1900 = vsub.f32 %v351, %v1899
        %v1901 = vand.u32 %v1900, 4294901760
        %1902 = vmatprep.subr.mxu0 %v1901
        %v1903 = vand.u32 %v350, 4294901760
        %v1904 = vsub.f32 %v350, %v1903
        %v1905 = vand.u32 %v1904, 4294901760
        %1906 = vmatpush1.msra.mxu0 %v1905
        %v1907 = vand.u32 %v353, 4294901760
        %v1908 = vsub.f32 %v353, %v1907
        %v1909 = vand.u32 %v1908, 4294901760
        %1910 = vmatprep.subr.mxu0 %v1909
        %v1911 = vand.u32 %v352, 4294901760
        %v1912 = vsub.f32 %v352, %v1911
        %v1913 = vand.u32 %v1912, 4294901760
        %1914 = vmatpush1.msra.mxu0 %v1913
        %v1915 = vand.u32 %v355, 4294901760
        %v1916 = vsub.f32 %v355, %v1915
        %v1917 = vand.u32 %v1916, 4294901760
        %1918 = vmatprep.subr.mxu0 %v1917
        %v1919 = vand.u32 %v354, 4294901760
        %v1920 = vsub.f32 %v354, %v1919
        %v1921 = vand.u32 %v1920, 4294901760
        %1922 = vmatpush1.msra.mxu0 %v1921
        %v1923 = vand.u32 %v357, 4294901760
        %v1924 = vsub.f32 %v357, %v1923
        %v1925 = vand.u32 %v1924, 4294901760
        %1926 = vmatprep.subr.mxu0 %v1925
        %v1927 = vand.u32 %v356, 4294901760
        %v1928 = vsub.f32 %v356, %v1927
        %v1929 = vand.u32 %v1928, 4294901760
        %1930 = vmatpush1.msra.mxu0 %v1929
        %v1931 = vand.u32 %v359, 4294901760
        %v1932 = vsub.f32 %v359, %v1931
        %v1933 = vand.u32 %v1932, 4294901760
        %1934 = vmatprep.subr.mxu0 %v1933
        %v1935 = vand.u32 %v358, 4294901760
        %v1936 = vsub.f32 %v358, %v1935
        %v1937 = vand.u32 %v1936, 4294901760
        %1938 = vmatpush1.msra.mxu0 %v1937
        %v1939 = vand.u32 %v361, 4294901760
        %v1940 = vsub.f32 %v361, %v1939
        %v1941 = vand.u32 %v1940, 4294901760
        %1942 = vmatprep.subr.mxu0 %v1941
        %v1943 = vand.u32 %v360, 4294901760
        %v1944 = vsub.f32 %v360, %v1943
        %v1945 = vand.u32 %v1944, 4294901760
        %1946 = vmatpush1.msra.mxu0 %v1945
        %v1947 = vand.u32 %v363, 4294901760
        %v1948 = vsub.f32 %v363, %v1947
        %v1949 = vand.u32 %v1948, 4294901760
        %1950 = vmatprep.subr.mxu0 %v1949
        %v1951 = vand.u32 %v362, 4294901760
        %v1952 = vsub.f32 %v362, %v1951
        %v1953 = vand.u32 %v1952, 4294901760
        %1954 = vmatpush1.msra.mxu0 %v1953
        %v1955 = vand.u32 %v365, 4294901760
        %v1956 = vsub.f32 %v365, %v1955
        %v1957 = vand.u32 %v1956, 4294901760
        %1958 = vmatprep.subr.mxu0 %v1957
        %v1959 = vand.u32 %v364, 4294901760
        %v1960 = vsub.f32 %v364, %v1959
        %v1961 = vand.u32 %v1960, 4294901760
        %1962 = vmatpush1.msra.mxu0 %v1961
        %v1963 = vand.u32 %v367, 4294901760
        %v1964 = vsub.f32 %v367, %v1963
        %v1965 = vand.u32 %v1964, 4294901760
        %1966 = vmatprep.subr.mxu0 %v1965
        %v1967 = vand.u32 %v366, 4294901760
        %v1968 = vsub.f32 %v366, %v1967
        %v1969 = vand.u32 %v1968, 4294901760
        %1970 = vmatpush1.msra.mxu0 %v1969
        %v1971 = vand.u32 %v369, 4294901760
        %v1972 = vsub.f32 %v369, %v1971
        %v1973 = vand.u32 %v1972, 4294901760
        %1974 = vmatprep.subr.mxu0 %v1973
        %v1975 = vand.u32 %v368, 4294901760
        %v1976 = vsub.f32 %v368, %v1975
        %v1977 = vand.u32 %v1976, 4294901760
        %1978 = vmatpush1.msra.mxu0 %v1977
        %v1979 = vand.u32 %v304, 4294901760
        %1980 = vmatprep.mubr.f32.mxu0 %v1979
        %v1981 = vand.u32 %v303, 4294901760
        %1982 = vmatmul.mubr.f32.gmra.mrb[0].mxu0 %v1981
        %v1983 = vpop.f32.mrb[0].mxu0
        %v1984 = vadd.f32 %v1719, %v1983
        %v1985 = vpop.f32.mrb[0].mxu0
        %v1986 = vadd.f32 %v1721, %v1985
        %1987 = vdwg.mxu0
        %v1988 = vand.u32 %v307, 4294901760
        %1989 = vmatprep.subr.mxu0 %v1988
        %v1990 = vand.u32 %v306, 4294901760
        %1991 = vmatpush1.msra.mxu0 %v1990
        %v1992 = vand.u32 %v309, 4294901760
        %1993 = vmatprep.subr.mxu0 %v1992
        %v1994 = vand.u32 %v308, 4294901760
        %1995 = vmatpush1.msra.mxu0 %v1994
        %v1996 = vand.u32 %v311, 4294901760
        %1997 = vmatprep.subr.mxu0 %v1996
        %v1998 = vand.u32 %v310, 4294901760
        %1999 = vmatpush1.msra.mxu0 %v1998
        %v2000 = vand.u32 %v313, 4294901760
        %2001 = vmatprep.subr.mxu0 %v2000
        %v2002 = vand.u32 %v312, 4294901760
        %2003 = vmatpush1.msra.mxu0 %v2002
        %v2004 = vand.u32 %v315, 4294901760
        %2005 = vmatprep.subr.mxu0 %v2004
        %v2006 = vand.u32 %v314, 4294901760
        %2007 = vmatpush1.msra.mxu0 %v2006
        %v2008 = vand.u32 %v317, 4294901760
        %2009 = vmatprep.subr.mxu0 %v2008
        %v2010 = vand.u32 %v316, 4294901760
        %2011 = vmatpush1.msra.mxu0 %v2010
        %v2012 = vand.u32 %v319, 4294901760
        %2013 = vmatprep.subr.mxu0 %v2012
        %v2014 = vand.u32 %v318, 4294901760
        %2015 = vmatpush1.msra.mxu0 %v2014
        %v2016 = vand.u32 %v321, 4294901760
        %2017 = vmatprep.subr.mxu0 %v2016
        %v2018 = vand.u32 %v320, 4294901760
        %2019 = vmatpush1.msra.mxu0 %v2018
        %v2020 = vand.u32 %v323, 4294901760
        %2021 = vmatprep.subr.mxu0 %v2020
        %v2022 = vand.u32 %v322, 4294901760
        %2023 = vmatpush1.msra.mxu0 %v2022
        %v2024 = vand.u32 %v325, 4294901760
        %2025 = vmatprep.subr.mxu0 %v2024
        %v2026 = vand.u32 %v324, 4294901760
        %2027 = vmatpush1.msra.mxu0 %v2026
        %v2028 = vand.u32 %v327, 4294901760
        %2029 = vmatprep.subr.mxu0 %v2028
        %v2030 = vand.u32 %v326, 4294901760
        %2031 = vmatpush1.msra.mxu0 %v2030
        %v2032 = vand.u32 %v329, 4294901760
        %2033 = vmatprep.subr.mxu0 %v2032
        %v2034 = vand.u32 %v328, 4294901760
        %2035 = vmatpush1.msra.mxu0 %v2034
        %v2036 = vand.u32 %v331, 4294901760
        %2037 = vmatprep.subr.mxu0 %v2036
        %v2038 = vand.u32 %v330, 4294901760
        %2039 = vmatpush1.msra.mxu0 %v2038
        %v2040 = vand.u32 %v333, 4294901760
        %2041 = vmatprep.subr.mxu0 %v2040
        %v2042 = vand.u32 %v332, 4294901760
        %2043 = vmatpush1.msra.mxu0 %v2042
        %v2044 = vand.u32 %v335, 4294901760
        %2045 = vmatprep.subr.mxu0 %v2044
        %v2046 = vand.u32 %v334, 4294901760
        %2047 = vmatpush1.msra.mxu0 %v2046
        %v2048 = vand.u32 %v337, 4294901760
        %2049 = vmatprep.subr.mxu0 %v2048
        %v2050 = vand.u32 %v336, 4294901760
        %2051 = vmatpush1.msra.mxu0 %v2050
        %v2052 = vand.u32 %v339, 4294901760
        %2053 = vmatprep.subr.mxu0 %v2052
        %v2054 = vand.u32 %v338, 4294901760
        %2055 = vmatpush1.msra.mxu0 %v2054
        %v2056 = vand.u32 %v341, 4294901760
        %2057 = vmatprep.subr.mxu0 %v2056
        %v2058 = vand.u32 %v340, 4294901760
        %2059 = vmatpush1.msra.mxu0 %v2058
        %v2060 = vand.u32 %v343, 4294901760
        %2061 = vmatprep.subr.mxu0 %v2060
        %v2062 = vand.u32 %v342, 4294901760
        %2063 = vmatpush1.msra.mxu0 %v2062
        %v2064 = vand.u32 %v345, 4294901760
        %2065 = vmatprep.subr.mxu0 %v2064
        %v2066 = vand.u32 %v344, 4294901760
        %2067 = vmatpush1.msra.mxu0 %v2066
        %v2068 = vand.u32 %v347, 4294901760
        %2069 = vmatprep.subr.mxu0 %v2068
        %v2070 = vand.u32 %v346, 4294901760
        %2071 = vmatpush1.msra.mxu0 %v2070
        %v2072 = vand.u32 %v349, 4294901760
        %2073 = vmatprep.subr.mxu0 %v2072
        %v2074 = vand.u32 %v348, 4294901760
        %2075 = vmatpush1.msra.mxu0 %v2074
        %v2076 = vand.u32 %v351, 4294901760
        %2077 = vmatprep.subr.mxu0 %v2076
        %v2078 = vand.u32 %v350, 4294901760
        %2079 = vmatpush1.msra.mxu0 %v2078
        %v2080 = vand.u32 %v353, 4294901760
        %2081 = vmatprep.subr.mxu0 %v2080
        %v2082 = vand.u32 %v352, 4294901760
        %2083 = vmatpush1.msra.mxu0 %v2082
        %v2084 = vand.u32 %v355, 4294901760
        %2085 = vmatprep.subr.mxu0 %v2084
        %v2086 = vand.u32 %v354, 4294901760
        %2087 = vmatpush1.msra.mxu0 %v2086
        %v2088 = vand.u32 %v357, 4294901760
        %2089 = vmatprep.subr.mxu0 %v2088
        %v2090 = vand.u32 %v356, 4294901760
        %2091 = vmatpush1.msra.mxu0 %v2090
        %v2092 = vand.u32 %v359, 4294901760
        %2093 = vmatprep.subr.mxu0 %v2092
        %v2094 = vand.u32 %v358, 4294901760
        %2095 = vmatpush1.msra.mxu0 %v2094
        %v2096 = vand.u32 %v361, 4294901760
        %2097 = vmatprep.subr.mxu0 %v2096
        %v2098 = vand.u32 %v360, 4294901760
        %2099 = vmatpush1.msra.mxu0 %v2098
        %v2100 = vand.u32 %v363, 4294901760
        %2101 = vmatprep.subr.mxu0 %v2100
        %v2102 = vand.u32 %v362, 4294901760
        %2103 = vmatpush1.msra.mxu0 %v2102
        %v2104 = vand.u32 %v365, 4294901760
        %2105 = vmatprep.subr.mxu0 %v2104
        %v2106 = vand.u32 %v364, 4294901760
        %2107 = vmatpush1.msra.mxu0 %v2106
        %v2108 = vand.u32 %v367, 4294901760
        %2109 = vmatprep.subr.mxu0 %v2108
        %v2110 = vand.u32 %v366, 4294901760
        %2111 = vmatpush1.msra.mxu0 %v2110
        %v2112 = vand.u32 %v369, 4294901760
        %2113 = vmatprep.subr.mxu0 %v2112
        %v2114 = vand.u32 %v368, 4294901760
        %2115 = vmatpush1.msra.mxu0 %v2114
        %v2116 = vand.u32 %v304, 4294901760
        %2117 = vmatprep.mubr.f32.mxu0 %v2116
        %v2118 = vand.u32 %v303, 4294901760
        %2119 = vmatmul.mubr.f32.gmra.mrb[0].mxu0 %v2118
        %v2120 = vpop.f32.mrb[0].mxu0
        %v2121 = vadd.f32 %v1984, %v2120
        %v2122 = vpop.f32.mrb[0].mxu0
        %v2123 = vadd.f32 %v1986, %v2122
        %2124 = vdwg.mxu0
        %v2125 = vld [vmem:[%s4] sm:$0xff]
        %v2126 = vld [vmem:[%s5] sm:$0xff]
        %v2127 = vld [vmem:[%s5 + $0x8] sm:$0xff]
        %v2128 = vld [vmem:[%s5 + $0x10] sm:$0xff]
        %v2129 = vld [vmem:[%s5 + $0x18] sm:$0xff]
        %v2130 = vld [vmem:[%s5 + $0x20] sm:$0xff]
        %v2131 = vld [vmem:[%s5 + $0x28] sm:$0xff]
        %v2132 = vld [vmem:[%s5 + $0x30] sm:$0xff]
        %v2133 = vld [vmem:[%s5 + $0x38] sm:$0xff]
        %v2134 = vld [vmem:[%s5 + $0x40] sm:$0xff]
        %v2135 = vld [vmem:[%s5 + $0x48] sm:$0xff]
        %v2136 = vld [vmem:[%s5 + $0x50] sm:$0xff]
        %v2137 = vld [vmem:[%s5 + $0x58] sm:$0xff]
        %v2138 = vld [vmem:[%s5 + $0x60] sm:$0xff]
        %v2139 = vld [vmem:[%s5 + $0x68] sm:$0xff]
        %v2140 = vld [vmem:[%s5 + $0x70] sm:$0xff]
        %v2141 = vld [vmem:[%s5 + $0x78] sm:$0xff]
        %v2142 = vld [vmem:[%s5 + $0x80] sm:$0xff]
        %v2143 = vld [vmem:[%s5 + $0x88] sm:$0xff]
        %v2144 = vld [vmem:[%s5 + $0x90] sm:$0xff]
        %v2145 = vld [vmem:[%s5 + $0x98] sm:$0xff]
        %v2146 = vld [vmem:[%s5 + $0xa0] sm:$0xff]
        %v2147 = vld [vmem:[%s5 + $0xa8] sm:$0xff]
        %v2148 = vld [vmem:[%s5 + $0xb0] sm:$0xff]
        %v2149 = vld [vmem:[%s5 + $0xb8] sm:$0xff]
        %v2150 = vld [vmem:[%s5 + $0xc0] sm:$0xff]
        %v2151 = vld [vmem:[%s5 + $0xc8] sm:$0xff]
        %v2152 = vld [vmem:[%s5 + $0xd0] sm:$0xff]
        %v2153 = vld [vmem:[%s5 + $0xd8] sm:$0xff]
        %v2154 = vld [vmem:[%s5 + $0xe0] sm:$0xff]
        %v2155 = vld [vmem:[%s5 + $0xe8] sm:$0xff]
        %v2156 = vld [vmem:[%s5 + $0xf0] sm:$0xff]
        %v2157 = vld [vmem:[%s5 + $0xf8] sm:$0xff]
        %2158 = vmatprep.subr.mxu0 0.0
        %v2159 = vand.u32 %v2126, 4294901760
        %2160 = vmatpush1.msra.mxu0 %v2159
        %2161 = vmatprep.subr.mxu0 0.0
        %v2162 = vand.u32 %v2127, 4294901760
        %2163 = vmatpush1.msra.mxu0 %v2162
        %2164 = vmatprep.subr.mxu0 0.0
        %v2165 = vand.u32 %v2128, 4294901760
        %2166 = vmatpush1.msra.mxu0 %v2165
        %2167 = vmatprep.subr.mxu0 0.0
        %v2168 = vand.u32 %v2129, 4294901760
        %2169 = vmatpush1.msra.mxu0 %v2168
        %2170 = vmatprep.subr.mxu0 0.0
        %v2171 = vand.u32 %v2130, 4294901760
        %2172 = vmatpush1.msra.mxu0 %v2171
        %2173 = vmatprep.subr.mxu0 0.0
        %v2174 = vand.u32 %v2131, 4294901760
        %2175 = vmatpush1.msra.mxu0 %v2174
        %2176 = vmatprep.subr.mxu0 0.0
        %v2177 = vand.u32 %v2132, 4294901760
        %2178 = vmatpush1.msra.mxu0 %v2177
        %2179 = vmatprep.subr.mxu0 0.0
        %v2180 = vand.u32 %v2133, 4294901760
        %2181 = vmatpush1.msra.mxu0 %v2180
        %2182 = vmatprep.subr.mxu0 0.0
        %v2183 = vand.u32 %v2134, 4294901760
        %2184 = vmatpush1.msra.mxu0 %v2183
        %2185 = vmatprep.subr.mxu0 0.0
        %v2186 = vand.u32 %v2135, 4294901760
        %2187 = vmatpush1.msra.mxu0 %v2186
        %2188 = vmatprep.subr.mxu0 0.0
        %v2189 = vand.u32 %v2136, 4294901760
        %2190 = vmatpush1.msra.mxu0 %v2189
        %2191 = vmatprep.subr.mxu0 0.0
        %v2192 = vand.u32 %v2137, 4294901760
        %2193 = vmatpush1.msra.mxu0 %v2192
        %2194 = vmatprep.subr.mxu0 0.0
        %v2195 = vand.u32 %v2138, 4294901760
        %2196 = vmatpush1.msra.mxu0 %v2195
        %2197 = vmatprep.subr.mxu0 0.0
        %v2198 = vand.u32 %v2139, 4294901760
        %2199 = vmatpush1.msra.mxu0 %v2198
        %2200 = vmatprep.subr.mxu0 0.0
        %v2201 = vand.u32 %v2140, 4294901760
        %2202 = vmatpush1.msra.mxu0 %v2201
        %2203 = vmatprep.subr.mxu0 0.0
        %v2204 = vand.u32 %v2141, 4294901760
        %2205 = vmatpush1.msra.mxu0 %v2204
        %2206 = vmatprep.subr.mxu0 0.0
        %v2207 = vand.u32 %v2142, 4294901760
        %2208 = vmatpush1.msra.mxu0 %v2207
        %2209 = vmatprep.subr.mxu0 0.0
        %v2210 = vand.u32 %v2143, 4294901760
        %2211 = vmatpush1.msra.mxu0 %v2210
        %2212 = vmatprep.subr.mxu0 0.0
        %v2213 = vand.u32 %v2144, 4294901760
        %2214 = vmatpush1.msra.mxu0 %v2213
        %2215 = vmatprep.subr.mxu0 0.0
        %v2216 = vand.u32 %v2145, 4294901760
        %2217 = vmatpush1.msra.mxu0 %v2216
        %2218 = vmatprep.subr.mxu0 0.0
        %v2219 = vand.u32 %v2146, 4294901760
        %2220 = vmatpush1.msra.mxu0 %v2219
        %2221 = vmatprep.subr.mxu0 0.0
        %v2222 = vand.u32 %v2147, 4294901760
        %2223 = vmatpush1.msra.mxu0 %v2222
        %2224 = vmatprep.subr.mxu0 0.0
        %v2225 = vand.u32 %v2148, 4294901760
        %2226 = vmatpush1.msra.mxu0 %v2225
        %2227 = vmatprep.subr.mxu0 0.0
        %v2228 = vand.u32 %v2149, 4294901760
        %2229 = vmatpush1.msra.mxu0 %v2228
        %2230 = vmatprep.subr.mxu0 0.0
        %v2231 = vand.u32 %v2150, 4294901760
        %2232 = vmatpush1.msra.mxu0 %v2231
        %2233 = vmatprep.subr.mxu0 0.0
        %v2234 = vand.u32 %v2151, 4294901760
        %2235 = vmatpush1.msra.mxu0 %v2234
        %2236 = vmatprep.subr.mxu0 0.0
        %v2237 = vand.u32 %v2152, 4294901760
        %2238 = vmatpush1.msra.mxu0 %v2237
        %2239 = vmatprep.subr.mxu0 0.0
        %v2240 = vand.u32 %v2153, 4294901760
        %2241 = vmatpush1.msra.mxu0 %v2240
        %2242 = vmatprep.subr.mxu0 0.0
        %v2243 = vand.u32 %v2154, 4294901760
        %2244 = vmatpush1.msra.mxu0 %v2243
        %2245 = vmatprep.subr.mxu0 0.0
        %v2246 = vand.u32 %v2155, 4294901760
        %2247 = vmatpush1.msra.mxu0 %v2246
        %2248 = vmatprep.subr.mxu0 0.0
        %v2249 = vand.u32 %v2156, 4294901760
        %2250 = vmatpush1.msra.mxu0 %v2249
        %2251 = vmatprep.subr.mxu0 0.0
        %v2252 = vand.u32 %v2157, 4294901760
        %2253 = vmatpush1.msra.mxu0 %v2252
        %v2254 = vand.u32 %v304, 4294901760
        %v2255 = vsub.f32 %v304, %v2254
        %v2256 = vand.u32 %v2255, 4294901760
        %v2257 = vsub.f32 %v2255, %v2256
        %v2258 = vand.u32 %v2257, 4294901760
        %2259 = vmatprep.mubr.f32.mxu0 %v2258
        %v2260 = vand.u32 %v303, 4294901760
        %v2261 = vsub.f32 %v303, %v2260
        %v2262 = vand.u32 %v2261, 4294901760
        %v2263 = vsub.f32 %v2261, %v2262
        %v2264 = vand.u32 %v2263, 4294901760
        %2265 = vmatmul.mubr.f32.gmra.mrb[0].mxu0 %v2264
        %v2266 = vpop.f32.mrb[0].mxu0
        %v2267 = vadd.f32 0.0, %v2266
        %v2268 = vpop.f32.mrb[0].mxu0
        %2269 = vdwg.mxu0
        %2270 = vmatprep.subr.mxu0 0.0
        %v2271 = vand.u32 %v2126, 4294901760
        %v2272 = vsub.f32 %v2126, %v2271
        %v2273 = vand.u32 %v2272, 4294901760
        %v2274 = vsub.f32 %v2272, %v2273
        %v2275 = vand.u32 %v2274, 4294901760
        %2276 = vmatpush1.msra.mxu0 %v2275
        %2277 = vmatprep.subr.mxu0 0.0
        %v2278 = vand.u32 %v2127, 4294901760
        %v2279 = vsub.f32 %v2127, %v2278
        %v2280 = vand.u32 %v2279, 4294901760
        %v2281 = vsub.f32 %v2279, %v2280
        %v2282 = vand.u32 %v2281, 4294901760
        %2283 = vmatpush1.msra.mxu0 %v2282
        %2284 = vmatprep.subr.mxu0 0.0
        %v2285 = vand.u32 %v2128, 4294901760
        %v2286 = vsub.f32 %v2128, %v2285
        %v2287 = vand.u32 %v2286, 4294901760
        %v2288 = vsub.f32 %v2286, %v2287
        %v2289 = vand.u32 %v2288, 4294901760
        %2290 = vmatpush1.msra.mxu0 %v2289
        %2291 = vmatprep.subr.mxu0 0.0
        %v2292 = vand.u32 %v2129, 4294901760
        %v2293 = vsub.f32 %v2129, %v2292
        %v2294 = vand.u32 %v2293, 4294901760
        %v2295 = vsub.f32 %v2293, %v2294
        %v2296 = vand.u32 %v2295, 4294901760
        %2297 = vmatpush1.msra.mxu0 %v2296
        %2298 = vmatprep.subr.mxu0 0.0
        %v2299 = vand.u32 %v2130, 4294901760
        %v2300 = vsub.f32 %v2130, %v2299
        %v2301 = vand.u32 %v2300, 4294901760
        %v2302 = vsub.f32 %v2300, %v2301
        %v2303 = vand.u32 %v2302, 4294901760
        %2304 = vmatpush1.msra.mxu0 %v2303
        %2305 = vmatprep.subr.mxu0 0.0
        %v2306 = vand.u32 %v2131, 4294901760
        %v2307 = vsub.f32 %v2131, %v2306
        %v2308 = vand.u32 %v2307, 4294901760
        %v2309 = vsub.f32 %v2307, %v2308
        %v2310 = vand.u32 %v2309, 4294901760
        %2311 = vmatpush1.msra.mxu0 %v2310
        %2312 = vmatprep.subr.mxu0 0.0
        %v2313 = vand.u32 %v2132, 4294901760
        %v2314 = vsub.f32 %v2132, %v2313
        %v2315 = vand.u32 %v2314, 4294901760
        %v2316 = vsub.f32 %v2314, %v2315
        %v2317 = vand.u32 %v2316, 4294901760
        %2318 = vmatpush1.msra.mxu0 %v2317
        %2319 = vmatprep.subr.mxu0 0.0
        %v2320 = vand.u32 %v2133, 4294901760
        %v2321 = vsub.f32 %v2133, %v2320
        %v2322 = vand.u32 %v2321, 4294901760
        %v2323 = vsub.f32 %v2321, %v2322
        %v2324 = vand.u32 %v2323, 4294901760
        %2325 = vmatpush1.msra.mxu0 %v2324
        %2326 = vmatprep.subr.mxu0 0.0
        %v2327 = vand.u32 %v2134, 4294901760
        %v2328 = vsub.f32 %v2134, %v2327
        %v2329 = vand.u32 %v2328, 4294901760
        %v2330 = vsub.f32 %v2328, %v2329
        %v2331 = vand.u32 %v2330, 4294901760
        %2332 = vmatpush1.msra.mxu0 %v2331
        %2333 = vmatprep.subr.mxu0 0.0
        %v2334 = vand.u32 %v2135, 4294901760
        %v2335 = vsub.f32 %v2135, %v2334
        %v2336 = vand.u32 %v2335, 4294901760
        %v2337 = vsub.f32 %v2335, %v2336
        %v2338 = vand.u32 %v2337, 4294901760
        %2339 = vmatpush1.msra.mxu0 %v2338
        %2340 = vmatprep.subr.mxu0 0.0
        %v2341 = vand.u32 %v2136, 4294901760
        %v2342 = vsub.f32 %v2136, %v2341
        %v2343 = vand.u32 %v2342, 4294901760
        %v2344 = vsub.f32 %v2342, %v2343
        %v2345 = vand.u32 %v2344, 4294901760
        %2346 = vmatpush1.msra.mxu0 %v2345
        %2347 = vmatprep.subr.mxu0 0.0
        %v2348 = vand.u32 %v2137, 4294901760
        %v2349 = vsub.f32 %v2137, %v2348
        %v2350 = vand.u32 %v2349, 4294901760
        %v2351 = vsub.f32 %v2349, %v2350
        %v2352 = vand.u32 %v2351, 4294901760
        %2353 = vmatpush1.msra.mxu0 %v2352
        %2354 = vmatprep.subr.mxu0 0.0
        %v2355 = vand.u32 %v2138, 4294901760
        %v2356 = vsub.f32 %v2138, %v2355
        %v2357 = vand.u32 %v2356, 4294901760
        %v2358 = vsub.f32 %v2356, %v2357
        %v2359 = vand.u32 %v2358, 4294901760
        %2360 = vmatpush1.msra.mxu0 %v2359
        %2361 = vmatprep.subr.mxu0 0.0
        %v2362 = vand.u32 %v2139, 4294901760
        %v2363 = vsub.f32 %v2139, %v2362
        %v2364 = vand.u32 %v2363, 4294901760
        %v2365 = vsub.f32 %v2363, %v2364
        %v2366 = vand.u32 %v2365, 4294901760
        %2367 = vmatpush1.msra.mxu0 %v2366
        %2368 = vmatprep.subr.mxu0 0.0
        %v2369 = vand.u32 %v2140, 4294901760
        %v2370 = vsub.f32 %v2140, %v2369
        %v2371 = vand.u32 %v2370, 4294901760
        %v2372 = vsub.f32 %v2370, %v2371
        %v2373 = vand.u32 %v2372, 4294901760
        %2374 = vmatpush1.msra.mxu0 %v2373
        %2375 = vmatprep.subr.mxu0 0.0
        %v2376 = vand.u32 %v2141, 4294901760
        %v2377 = vsub.f32 %v2141, %v2376
        %v2378 = vand.u32 %v2377, 4294901760
        %v2379 = vsub.f32 %v2377, %v2378
        %v2380 = vand.u32 %v2379, 4294901760
        %2381 = vmatpush1.msra.mxu0 %v2380
        %2382 = vmatprep.subr.mxu0 0.0
        %v2383 = vand.u32 %v2142, 4294901760
        %v2384 = vsub.f32 %v2142, %v2383
        %v2385 = vand.u32 %v2384, 4294901760
        %v2386 = vsub.f32 %v2384, %v2385
        %v2387 = vand.u32 %v2386, 4294901760
        %2388 = vmatpush1.msra.mxu0 %v2387
        %2389 = vmatprep.subr.mxu0 0.0
        %v2390 = vand.u32 %v2143, 4294901760
        %v2391 = vsub.f32 %v2143, %v2390
        %v2392 = vand.u32 %v2391, 4294901760
        %v2393 = vsub.f32 %v2391, %v2392
        %v2394 = vand.u32 %v2393, 4294901760
        %2395 = vmatpush1.msra.mxu0 %v2394
        %2396 = vmatprep.subr.mxu0 0.0
        %v2397 = vand.u32 %v2144, 4294901760
        %v2398 = vsub.f32 %v2144, %v2397
        %v2399 = vand.u32 %v2398, 4294901760
        %v2400 = vsub.f32 %v2398, %v2399
        %v2401 = vand.u32 %v2400, 4294901760
        %2402 = vmatpush1.msra.mxu0 %v2401
        %2403 = vmatprep.subr.mxu0 0.0
        %v2404 = vand.u32 %v2145, 4294901760
        %v2405 = vsub.f32 %v2145, %v2404
        %v2406 = vand.u32 %v2405, 4294901760
        %v2407 = vsub.f32 %v2405, %v2406
        %v2408 = vand.u32 %v2407, 4294901760
        %2409 = vmatpush1.msra.mxu0 %v2408
        %2410 = vmatprep.subr.mxu0 0.0
        %v2411 = vand.u32 %v2146, 4294901760
        %v2412 = vsub.f32 %v2146, %v2411
        %v2413 = vand.u32 %v2412, 4294901760
        %v2414 = vsub.f32 %v2412, %v2413
        %v2415 = vand.u32 %v2414, 4294901760
        %2416 = vmatpush1.msra.mxu0 %v2415
        %2417 = vmatprep.subr.mxu0 0.0
        %v2418 = vand.u32 %v2147, 4294901760
        %v2419 = vsub.f32 %v2147, %v2418
        %v2420 = vand.u32 %v2419, 4294901760
        %v2421 = vsub.f32 %v2419, %v2420
        %v2422 = vand.u32 %v2421, 4294901760
        %2423 = vmatpush1.msra.mxu0 %v2422
        %2424 = vmatprep.subr.mxu0 0.0
        %v2425 = vand.u32 %v2148, 4294901760
        %v2426 = vsub.f32 %v2148, %v2425
        %v2427 = vand.u32 %v2426, 4294901760
        %v2428 = vsub.f32 %v2426, %v2427
        %v2429 = vand.u32 %v2428, 4294901760
        %2430 = vmatpush1.msra.mxu0 %v2429
        %2431 = vmatprep.subr.mxu0 0.0
        %v2432 = vand.u32 %v2149, 4294901760
        %v2433 = vsub.f32 %v2149, %v2432
        %v2434 = vand.u32 %v2433, 4294901760
        %v2435 = vsub.f32 %v2433, %v2434
        %v2436 = vand.u32 %v2435, 4294901760
        %2437 = vmatpush1.msra.mxu0 %v2436
        %2438 = vmatprep.subr.mxu0 0.0
        %v2439 = vand.u32 %v2150, 4294901760
        %v2440 = vsub.f32 %v2150, %v2439
        %v2441 = vand.u32 %v2440, 4294901760
        %v2442 = vsub.f32 %v2440, %v2441
        %v2443 = vand.u32 %v2442, 4294901760
        %2444 = vmatpush1.msra.mxu0 %v2443
        %2445 = vmatprep.subr.mxu0 0.0
        %v2446 = vand.u32 %v2151, 4294901760
        %v2447 = vsub.f32 %v2151, %v2446
        %v2448 = vand.u32 %v2447, 4294901760
        %v2449 = vsub.f32 %v2447, %v2448
        %v2450 = vand.u32 %v2449, 4294901760
        %2451 = vmatpush1.msra.mxu0 %v2450
        %2452 = vmatprep.subr.mxu0 0.0
        %v2453 = vand.u32 %v2152, 4294901760
        %v2454 = vsub.f32 %v2152, %v2453
        %v2455 = vand.u32 %v2454, 4294901760
        %v2456 = vsub.f32 %v2454, %v2455
        %v2457 = vand.u32 %v2456, 4294901760
        %2458 = vmatpush1.msra.mxu0 %v2457
        %2459 = vmatprep.subr.mxu0 0.0
        %v2460 = vand.u32 %v2153, 4294901760
        %v2461 = vsub.f32 %v2153, %v2460
        %v2462 = vand.u32 %v2461, 4294901760
        %v2463 = vsub.f32 %v2461, %v2462
        %v2464 = vand.u32 %v2463, 4294901760
        %2465 = vmatpush1.msra.mxu0 %v2464
        %2466 = vmatprep.subr.mxu0 0.0
        %v2467 = vand.u32 %v2154, 4294901760
        %v2468 = vsub.f32 %v2154, %v2467
        %v2469 = vand.u32 %v2468, 4294901760
        %v2470 = vsub.f32 %v2468, %v2469
        %v2471 = vand.u32 %v2470, 4294901760
        %2472 = vmatpush1.msra.mxu0 %v2471
        %2473 = vmatprep.subr.mxu0 0.0
        %v2474 = vand.u32 %v2155, 4294901760
        %v2475 = vsub.f32 %v2155, %v2474
        %v2476 = vand.u32 %v2475, 4294901760
        %v2477 = vsub.f32 %v2475, %v2476
        %v2478 = vand.u32 %v2477, 4294901760
        %2479 = vmatpush1.msra.mxu0 %v2478
        %2480 = vmatprep.subr.mxu0 0.0
        %v2481 = vand.u32 %v2156, 4294901760
        %v2482 = vsub.f32 %v2156, %v2481
        %v2483 = vand.u32 %v2482, 4294901760
        %v2484 = vsub.f32 %v2482, %v2483
        %v2485 = vand.u32 %v2484, 4294901760
        %2486 = vmatpush1.msra.mxu0 %v2485
        %2487 = vmatprep.subr.mxu0 0.0
        %v2488 = vand.u32 %v2157, 4294901760
        %v2489 = vsub.f32 %v2157, %v2488
        %v2490 = vand.u32 %v2489, 4294901760
        %v2491 = vsub.f32 %v2489, %v2490
        %v2492 = vand.u32 %v2491, 4294901760
        %2493 = vmatpush1.msra.mxu0 %v2492
        %v2494 = vand.u32 %v304, 4294901760
        %2495 = vmatprep.mubr.f32.mxu0 %v2494
        %v2496 = vand.u32 %v303, 4294901760
        %2497 = vmatmul.mubr.f32.gmra.mrb[0].mxu0 %v2496
        %v2498 = vpop.f32.mrb[0].mxu0
        %v2499 = vadd.f32 %v2267, %v2498
        %v2500 = vpop.f32.mrb[0].mxu0
        %2501 = vdwg.mxu0
        %2502 = vmatprep.subr.mxu0 0.0
        %v2503 = vand.u32 %v2126, 4294901760
        %v2504 = vsub.f32 %v2126, %v2503
        %2505 = vmatpush1.msra.mxu0 %v2504
        %2506 = vmatprep.subr.mxu0 0.0
        %v2507 = vand.u32 %v2127, 4294901760
        %v2508 = vsub.f32 %v2127, %v2507
        %2509 = vmatpush1.msra.mxu0 %v2508
        %2510 = vmatprep.subr.mxu0 0.0
        %v2511 = vand.u32 %v2128, 4294901760
        %v2512 = vsub.f32 %v2128, %v2511
        %2513 = vmatpush1.msra.mxu0 %v2512
        %2514 = vmatprep.subr.mxu0 0.0
        %v2515 = vand.u32 %v2129, 4294901760
        %v2516 = vsub.f32 %v2129, %v2515
        %2517 = vmatpush1.msra.mxu0 %v2516
        %2518 = vmatprep.subr.mxu0 0.0
        %v2519 = vand.u32 %v2130, 4294901760
        %v2520 = vsub.f32 %v2130, %v2519
        %2521 = vmatpush1.msra.mxu0 %v2520
        %2522 = vmatprep.subr.mxu0 0.0
        %v2523 = vand.u32 %v2131, 4294901760
        %v2524 = vsub.f32 %v2131, %v2523
        %2525 = vmatpush1.msra.mxu0 %v2524
        %2526 = vmatprep.subr.mxu0 0.0
        %v2527 = vand.u32 %v2132, 4294901760
        %v2528 = vsub.f32 %v2132, %v2527
        %2529 = vmatpush1.msra.mxu0 %v2528
        %2530 = vmatprep.subr.mxu0 0.0
        %v2531 = vand.u32 %v2133, 4294901760
        %v2532 = vsub.f32 %v2133, %v2531
        %2533 = vmatpush1.msra.mxu0 %v2532
        %2534 = vmatprep.subr.mxu0 0.0
        %v2535 = vand.u32 %v2134, 4294901760
        %v2536 = vsub.f32 %v2134, %v2535
        %2537 = vmatpush1.msra.mxu0 %v2536
        %2538 = vmatprep.subr.mxu0 0.0
        %v2539 = vand.u32 %v2135, 4294901760
        %v2540 = vsub.f32 %v2135, %v2539
        %2541 = vmatpush1.msra.mxu0 %v2540
        %2542 = vmatprep.subr.mxu0 0.0
        %v2543 = vand.u32 %v2136, 4294901760
        %v2544 = vsub.f32 %v2136, %v2543
        %2545 = vmatpush1.msra.mxu0 %v2544
        %2546 = vmatprep.subr.mxu0 0.0
        %v2547 = vand.u32 %v2137, 4294901760
        %v2548 = vsub.f32 %v2137, %v2547
        %2549 = vmatpush1.msra.mxu0 %v2548
        %2550 = vmatprep.subr.mxu0 0.0
        %v2551 = vand.u32 %v2138, 4294901760
        %v2552 = vsub.f32 %v2138, %v2551
        %2553 = vmatpush1.msra.mxu0 %v2552
        %2554 = vmatprep.subr.mxu0 0.0
        %v2555 = vand.u32 %v2139, 4294901760
        %v2556 = vsub.f32 %v2139, %v2555
        %2557 = vmatpush1.msra.mxu0 %v2556
        %2558 = vmatprep.subr.mxu0 0.0
        %v2559 = vand.u32 %v2140, 4294901760
        %v2560 = vsub.f32 %v2140, %v2559
        %2561 = vmatpush1.msra.mxu0 %v2560
        %2562 = vmatprep.subr.mxu0 0.0
        %v2563 = vand.u32 %v2141, 4294901760
        %v2564 = vsub.f32 %v2141, %v2563
        %2565 = vmatpush1.msra.mxu0 %v2564
        %2566 = vmatprep.subr.mxu0 0.0
        %v2567 = vand.u32 %v2142, 4294901760
        %v2568 = vsub.f32 %v2142, %v2567
        %2569 = vmatpush1.msra.mxu0 %v2568
        %2570 = vmatprep.subr.mxu0 0.0
        %v2571 = vand.u32 %v2143, 4294901760
        %v2572 = vsub.f32 %v2143, %v2571
        %2573 = vmatpush1.msra.mxu0 %v2572
        %2574 = vmatprep.subr.mxu0 0.0
        %v2575 = vand.u32 %v2144, 4294901760
        %v2576 = vsub.f32 %v2144, %v2575
        %2577 = vmatpush1.msra.mxu0 %v2576
        %2578 = vmatprep.subr.mxu0 0.0
        %v2579 = vand.u32 %v2145, 4294901760
        %v2580 = vsub.f32 %v2145, %v2579
        %2581 = vmatpush1.msra.mxu0 %v2580
        %2582 = vmatprep.subr.mxu0 0.0
        %v2583 = vand.u32 %v2146, 4294901760
        %v2584 = vsub.f32 %v2146, %v2583
        %2585 = vmatpush1.msra.mxu0 %v2584
        %2586 = vmatprep.subr.mxu0 0.0
        %v2587 = vand.u32 %v2147, 4294901760
        %v2588 = vsub.f32 %v2147, %v2587
        %2589 = vmatpush1.msra.mxu0 %v2588
        %2590 = vmatprep.subr.mxu0 0.0
        %v2591 = vand.u32 %v2148, 4294901760
        %v2592 = vsub.f32 %v2148, %v2591
        %2593 = vmatpush1.msra.mxu0 %v2592
        %2594 = vmatprep.subr.mxu0 0.0
        %v2595 = vand.u32 %v2149, 4294901760
        %v2596 = vsub.f32 %v2149, %v2595
        %2597 = vmatpush1.msra.mxu0 %v2596
        %2598 = vmatprep.subr.mxu0 0.0
        %v2599 = vand.u32 %v2150, 4294901760
        %v2600 = vsub.f32 %v2150, %v2599
        %2601 = vmatpush1.msra.mxu0 %v2600
        %2602 = vmatprep.subr.mxu0 0.0
        %v2603 = vand.u32 %v2151, 4294901760
        %v2604 = vsub.f32 %v2151, %v2603
        %2605 = vmatpush1.msra.mxu0 %v2604
        %2606 = vmatprep.subr.mxu0 0.0
        %v2607 = vand.u32 %v2152, 4294901760
        %v2608 = vsub.f32 %v2152, %v2607
        %2609 = vmatpush1.msra.mxu0 %v2608
        %2610 = vmatprep.subr.mxu0 0.0
        %v2611 = vand.u32 %v2153, 4294901760
        %v2612 = vsub.f32 %v2153, %v2611
        %2613 = vmatpush1.msra.mxu0 %v2612
        %2614 = vmatprep.subr.mxu0 0.0
        %v2615 = vand.u32 %v2154, 4294901760
        %v2616 = vsub.f32 %v2154, %v2615
        %2617 = vmatpush1.msra.mxu0 %v2616
        %2618 = vmatprep.subr.mxu0 0.0
        %v2619 = vand.u32 %v2155, 4294901760
        %v2620 = vsub.f32 %v2155, %v2619
        %2621 = vmatpush1.msra.mxu0 %v2620
        %2622 = vmatprep.subr.mxu0 0.0
        %v2623 = vand.u32 %v2156, 4294901760
        %v2624 = vsub.f32 %v2156, %v2623
        %2625 = vmatpush1.msra.mxu0 %v2624
        %2626 = vmatprep.subr.mxu0 0.0
        %v2627 = vand.u32 %v2157, 4294901760
        %v2628 = vsub.f32 %v2157, %v2627
        %2629 = vmatpush1.msra.mxu0 %v2628
        %v2630 = vand.u32 %v304, 4294901760
        %v2631 = vsub.f32 %v304, %v2630
        %2632 = vmatprep.mubr.f32.mxu0 %v2631
        %v2633 = vand.u32 %v303, 4294901760
        %v2634 = vsub.f32 %v303, %v2633
        %2635 = vmatmul.mubr.f32.gmra.mrb[0].mxu0 %v2634
        %v2636 = vpop.f32.mrb[0].mxu0
        %v2637 = vadd.f32 %v2499, %v2636
        %v2638 = vpop.f32.mrb[0].mxu0
        %2639 = vdwg.mxu0
        %2640 = vmatprep.subr.mxu0 0.0
        %v2641 = vand.u32 %v2126, 4294901760
        %2642 = vmatpush1.msra.mxu0 %v2641
        %2643 = vmatprep.subr.mxu0 0.0
        %v2644 = vand.u32 %v2127, 4294901760
        %2645 = vmatpush1.msra.mxu0 %v2644
        %2646 = vmatprep.subr.mxu0 0.0
        %v2647 = vand.u32 %v2128, 4294901760
        %2648 = vmatpush1.msra.mxu0 %v2647
        %2649 = vmatprep.subr.mxu0 0.0
        %v2650 = vand.u32 %v2129, 4294901760
        %2651 = vmatpush1.msra.mxu0 %v2650
        %2652 = vmatprep.subr.mxu0 0.0
        %v2653 = vand.u32 %v2130, 4294901760
        %2654 = vmatpush1.msra.mxu0 %v2653
        %2655 = vmatprep.subr.mxu0 0.0
        %v2656 = vand.u32 %v2131, 4294901760
        %2657 = vmatpush1.msra.mxu0 %v2656
        %2658 = vmatprep.subr.mxu0 0.0
        %v2659 = vand.u32 %v2132, 4294901760
        %2660 = vmatpush1.msra.mxu0 %v2659
        %2661 = vmatprep.subr.mxu0 0.0
        %v2662 = vand.u32 %v2133, 4294901760
        %2663 = vmatpush1.msra.mxu0 %v2662
        %2664 = vmatprep.subr.mxu0 0.0
        %v2665 = vand.u32 %v2134, 4294901760
        %2666 = vmatpush1.msra.mxu0 %v2665
        %2667 = vmatprep.subr.mxu0 0.0
        %v2668 = vand.u32 %v2135, 4294901760
        %2669 = vmatpush1.msra.mxu0 %v2668
        %2670 = vmatprep.subr.mxu0 0.0
        %v2671 = vand.u32 %v2136, 4294901760
        %2672 = vmatpush1.msra.mxu0 %v2671
        %2673 = vmatprep.subr.mxu0 0.0
        %v2674 = vand.u32 %v2137, 4294901760
        %2675 = vmatpush1.msra.mxu0 %v2674
        %2676 = vmatprep.subr.mxu0 0.0
        %v2677 = vand.u32 %v2138, 4294901760
        %2678 = vmatpush1.msra.mxu0 %v2677
        %2679 = vmatprep.subr.mxu0 0.0
        %v2680 = vand.u32 %v2139, 4294901760
        %2681 = vmatpush1.msra.mxu0 %v2680
        %2682 = vmatprep.subr.mxu0 0.0
        %v2683 = vand.u32 %v2140, 4294901760
        %2684 = vmatpush1.msra.mxu0 %v2683
        %2685 = vmatprep.subr.mxu0 0.0
        %v2686 = vand.u32 %v2141, 4294901760
        %2687 = vmatpush1.msra.mxu0 %v2686
        %2688 = vmatprep.subr.mxu0 0.0
        %v2689 = vand.u32 %v2142, 4294901760
        %2690 = vmatpush1.msra.mxu0 %v2689
        %2691 = vmatprep.subr.mxu0 0.0
        %v2692 = vand.u32 %v2143, 4294901760
        %2693 = vmatpush1.msra.mxu0 %v2692
        %2694 = vmatprep.subr.mxu0 0.0
        %v2695 = vand.u32 %v2144, 4294901760
        %2696 = vmatpush1.msra.mxu0 %v2695
        %2697 = vmatprep.subr.mxu0 0.0
        %v2698 = vand.u32 %v2145, 4294901760
        %2699 = vmatpush1.msra.mxu0 %v2698
        %2700 = vmatprep.subr.mxu0 0.0
        %v2701 = vand.u32 %v2146, 4294901760
        %2702 = vmatpush1.msra.mxu0 %v2701
        %2703 = vmatprep.subr.mxu0 0.0
        %v2704 = vand.u32 %v2147, 4294901760
        %2705 = vmatpush1.msra.mxu0 %v2704
        %2706 = vmatprep.subr.mxu0 0.0
        %v2707 = vand.u32 %v2148, 4294901760
        %2708 = vmatpush1.msra.mxu0 %v2707
        %2709 = vmatprep.subr.mxu0 0.0
        %v2710 = vand.u32 %v2149, 4294901760
        %2711 = vmatpush1.msra.mxu0 %v2710
        %2712 = vmatprep.subr.mxu0 0.0
        %v2713 = vand.u32 %v2150, 4294901760
        %2714 = vmatpush1.msra.mxu0 %v2713
        %2715 = vmatprep.subr.mxu0 0.0
        %v2716 = vand.u32 %v2151, 4294901760
        %2717 = vmatpush1.msra.mxu0 %v2716
        %2718 = vmatprep.subr.mxu0 0.0
        %v2719 = vand.u32 %v2152, 4294901760
        %2720 = vmatpush1.msra.mxu0 %v2719
        %2721 = vmatprep.subr.mxu0 0.0
        %v2722 = vand.u32 %v2153, 4294901760
        %2723 = vmatpush1.msra.mxu0 %v2722
        %2724 = vmatprep.subr.mxu0 0.0
        %v2725 = vand.u32 %v2154, 4294901760
        %2726 = vmatpush1.msra.mxu0 %v2725
        %2727 = vmatprep.subr.mxu0 0.0
        %v2728 = vand.u32 %v2155, 4294901760
        %2729 = vmatpush1.msra.mxu0 %v2728
        %2730 = vmatprep.subr.mxu0 0.0
        %v2731 = vand.u32 %v2156, 4294901760
        %2732 = vmatpush1.msra.mxu0 %v2731
        %2733 = vmatprep.subr.mxu0 0.0
        %v2734 = vand.u32 %v2157, 4294901760
        %2735 = vmatpush1.msra.mxu0 %v2734
        %v2736 = vand.u32 %v304, 4294901760
        %v2737 = vsub.f32 %v304, %v2736
        %v2738 = vand.u32 %v2737, 4294901760
        %2739 = vmatprep.mubr.f32.mxu0 %v2738
        %v2740 = vand.u32 %v303, 4294901760
        %v2741 = vsub.f32 %v303, %v2740
        %v2742 = vand.u32 %v2741, 4294901760
        %2743 = vmatmul.mubr.f32.gmra.mrb[0].mxu0 %v2742
        %v2744 = vpop.f32.mrb[0].mxu0
        %v2745 = vadd.f32 %v2637, %v2744
        %v2746 = vpop.f32.mrb[0].mxu0
        %2747 = vdwg.mxu0
        %2748 = vmatprep.subr.mxu0 0.0
        %v2749 = vand.u32 %v2126, 4294901760
        %v2750 = vsub.f32 %v2126, %v2749
        %v2751 = vand.u32 %v2750, 4294901760
        %2752 = vmatpush1.msra.mxu0 %v2751
        %2753 = vmatprep.subr.mxu0 0.0
        %v2754 = vand.u32 %v2127, 4294901760
        %v2755 = vsub.f32 %v2127, %v2754
        %v2756 = vand.u32 %v2755, 4294901760
        %2757 = vmatpush1.msra.mxu0 %v2756
        %2758 = vmatprep.subr.mxu0 0.0
        %v2759 = vand.u32 %v2128, 4294901760
        %v2760 = vsub.f32 %v2128, %v2759
        %v2761 = vand.u32 %v2760, 4294901760
        %2762 = vmatpush1.msra.mxu0 %v2761
        %2763 = vmatprep.subr.mxu0 0.0
        %v2764 = vand.u32 %v2129, 4294901760
        %v2765 = vsub.f32 %v2129, %v2764
        %v2766 = vand.u32 %v2765, 4294901760
        %2767 = vmatpush1.msra.mxu0 %v2766
        %2768 = vmatprep.subr.mxu0 0.0
        %v2769 = vand.u32 %v2130, 4294901760
        %v2770 = vsub.f32 %v2130, %v2769
        %v2771 = vand.u32 %v2770, 4294901760
        %2772 = vmatpush1.msra.mxu0 %v2771
        %2773 = vmatprep.subr.mxu0 0.0
        %v2774 = vand.u32 %v2131, 4294901760
        %v2775 = vsub.f32 %v2131, %v2774
        %v2776 = vand.u32 %v2775, 4294901760
        %2777 = vmatpush1.msra.mxu0 %v2776
        %2778 = vmatprep.subr.mxu0 0.0
        %v2779 = vand.u32 %v2132, 4294901760
        %v2780 = vsub.f32 %v2132, %v2779
        %v2781 = vand.u32 %v2780, 4294901760
        %2782 = vmatpush1.msra.mxu0 %v2781
        %2783 = vmatprep.subr.mxu0 0.0
        %v2784 = vand.u32 %v2133, 4294901760
        %v2785 = vsub.f32 %v2133, %v2784
        %v2786 = vand.u32 %v2785, 4294901760
        %2787 = vmatpush1.msra.mxu0 %v2786
        %2788 = vmatprep.subr.mxu0 0.0
        %v2789 = vand.u32 %v2134, 4294901760
        %v2790 = vsub.f32 %v2134, %v2789
        %v2791 = vand.u32 %v2790, 4294901760
        %2792 = vmatpush1.msra.mxu0 %v2791
        %2793 = vmatprep.subr.mxu0 0.0
        %v2794 = vand.u32 %v2135, 4294901760
        %v2795 = vsub.f32 %v2135, %v2794
        %v2796 = vand.u32 %v2795, 4294901760
        %2797 = vmatpush1.msra.mxu0 %v2796
        %2798 = vmatprep.subr.mxu0 0.0
        %v2799 = vand.u32 %v2136, 4294901760
        %v2800 = vsub.f32 %v2136, %v2799
        %v2801 = vand.u32 %v2800, 4294901760
        %2802 = vmatpush1.msra.mxu0 %v2801
        %2803 = vmatprep.subr.mxu0 0.0
        %v2804 = vand.u32 %v2137, 4294901760
        %v2805 = vsub.f32 %v2137, %v2804
        %v2806 = vand.u32 %v2805, 4294901760
        %2807 = vmatpush1.msra.mxu0 %v2806
        %2808 = vmatprep.subr.mxu0 0.0
        %v2809 = vand.u32 %v2138, 4294901760
        %v2810 = vsub.f32 %v2138, %v2809
        %v2811 = vand.u32 %v2810, 4294901760
        %2812 = vmatpush1.msra.mxu0 %v2811
        %2813 = vmatprep.subr.mxu0 0.0
        %v2814 = vand.u32 %v2139, 4294901760
        %v2815 = vsub.f32 %v2139, %v2814
        %v2816 = vand.u32 %v2815, 4294901760
        %2817 = vmatpush1.msra.mxu0 %v2816
        %2818 = vmatprep.subr.mxu0 0.0
        %v2819 = vand.u32 %v2140, 4294901760
        %v2820 = vsub.f32 %v2140, %v2819
        %v2821 = vand.u32 %v2820, 4294901760
        %2822 = vmatpush1.msra.mxu0 %v2821
        %2823 = vmatprep.subr.mxu0 0.0
        %v2824 = vand.u32 %v2141, 4294901760
        %v2825 = vsub.f32 %v2141, %v2824
        %v2826 = vand.u32 %v2825, 4294901760
        %2827 = vmatpush1.msra.mxu0 %v2826
        %2828 = vmatprep.subr.mxu0 0.0
        %v2829 = vand.u32 %v2142, 4294901760
        %v2830 = vsub.f32 %v2142, %v2829
        %v2831 = vand.u32 %v2830, 4294901760
        %2832 = vmatpush1.msra.mxu0 %v2831
        %2833 = vmatprep.subr.mxu0 0.0
        %v2834 = vand.u32 %v2143, 4294901760
        %v2835 = vsub.f32 %v2143, %v2834
        %v2836 = vand.u32 %v2835, 4294901760
        %2837 = vmatpush1.msra.mxu0 %v2836
        %2838 = vmatprep.subr.mxu0 0.0
        %v2839 = vand.u32 %v2144, 4294901760
        %v2840 = vsub.f32 %v2144, %v2839
        %v2841 = vand.u32 %v2840, 4294901760
        %2842 = vmatpush1.msra.mxu0 %v2841
        %2843 = vmatprep.subr.mxu0 0.0
        %v2844 = vand.u32 %v2145, 4294901760
        %v2845 = vsub.f32 %v2145, %v2844
        %v2846 = vand.u32 %v2845, 4294901760
        %2847 = vmatpush1.msra.mxu0 %v2846
        %2848 = vmatprep.subr.mxu0 0.0
        %v2849 = vand.u32 %v2146, 4294901760
        %v2850 = vsub.f32 %v2146, %v2849
        %v2851 = vand.u32 %v2850, 4294901760
        %2852 = vmatpush1.msra.mxu0 %v2851
        %2853 = vmatprep.subr.mxu0 0.0
        %v2854 = vand.u32 %v2147, 4294901760
        %v2855 = vsub.f32 %v2147, %v2854
        %v2856 = vand.u32 %v2855, 4294901760
        %2857 = vmatpush1.msra.mxu0 %v2856
        %2858 = vmatprep.subr.mxu0 0.0
        %v2859 = vand.u32 %v2148, 4294901760
        %v2860 = vsub.f32 %v2148, %v2859
        %v2861 = vand.u32 %v2860, 4294901760
        %2862 = vmatpush1.msra.mxu0 %v2861
        %2863 = vmatprep.subr.mxu0 0.0
        %v2864 = vand.u32 %v2149, 4294901760
        %v2865 = vsub.f32 %v2149, %v2864
        %v2866 = vand.u32 %v2865, 4294901760
        %2867 = vmatpush1.msra.mxu0 %v2866
        %2868 = vmatprep.subr.mxu0 0.0
        %v2869 = vand.u32 %v2150, 4294901760
        %v2870 = vsub.f32 %v2150, %v2869
        %v2871 = vand.u32 %v2870, 4294901760
        %2872 = vmatpush1.msra.mxu0 %v2871
        %2873 = vmatprep.subr.mxu0 0.0
        %v2874 = vand.u32 %v2151, 4294901760
        %v2875 = vsub.f32 %v2151, %v2874
        %v2876 = vand.u32 %v2875, 4294901760
        %2877 = vmatpush1.msra.mxu0 %v2876
        %2878 = vmatprep.subr.mxu0 0.0
        %v2879 = vand.u32 %v2152, 4294901760
        %v2880 = vsub.f32 %v2152, %v2879
        %v2881 = vand.u32 %v2880, 4294901760
        %2882 = vmatpush1.msra.mxu0 %v2881
        %2883 = vmatprep.subr.mxu0 0.0
        %v2884 = vand.u32 %v2153, 4294901760
        %v2885 = vsub.f32 %v2153, %v2884
        %v2886 = vand.u32 %v2885, 4294901760
        %2887 = vmatpush1.msra.mxu0 %v2886
        %2888 = vmatprep.subr.mxu0 0.0
        %v2889 = vand.u32 %v2154, 4294901760
        %v2890 = vsub.f32 %v2154, %v2889
        %v2891 = vand.u32 %v2890, 4294901760
        %2892 = vmatpush1.msra.mxu0 %v2891
        %2893 = vmatprep.subr.mxu0 0.0
        %v2894 = vand.u32 %v2155, 4294901760
        %v2895 = vsub.f32 %v2155, %v2894
        %v2896 = vand.u32 %v2895, 4294901760
        %2897 = vmatpush1.msra.mxu0 %v2896
        %2898 = vmatprep.subr.mxu0 0.0
        %v2899 = vand.u32 %v2156, 4294901760
        %v2900 = vsub.f32 %v2156, %v2899
        %v2901 = vand.u32 %v2900, 4294901760
        %2902 = vmatpush1.msra.mxu0 %v2901
        %2903 = vmatprep.subr.mxu0 0.0
        %v2904 = vand.u32 %v2157, 4294901760
        %v2905 = vsub.f32 %v2157, %v2904
        %v2906 = vand.u32 %v2905, 4294901760
        %2907 = vmatpush1.msra.mxu0 %v2906
        %v2908 = vand.u32 %v304, 4294901760
        %2909 = vmatprep.mubr.f32.mxu0 %v2908
        %v2910 = vand.u32 %v303, 4294901760
        %2911 = vmatmul.mubr.f32.gmra.mrb[0].mxu0 %v2910
        %v2912 = vpop.f32.mrb[0].mxu0
        %v2913 = vadd.f32 %v2745, %v2912
        %v2914 = vpop.f32.mrb[0].mxu0
        %2915 = vdwg.mxu0
        %2916 = vmatprep.subr.mxu0 0.0
        %v2917 = vand.u32 %v2126, 4294901760
        %2918 = vmatpush1.msra.mxu0 %v2917
        %2919 = vmatprep.subr.mxu0 0.0
        %v2920 = vand.u32 %v2127, 4294901760
        %2921 = vmatpush1.msra.mxu0 %v2920
        %2922 = vmatprep.subr.mxu0 0.0
        %v2923 = vand.u32 %v2128, 4294901760
        %2924 = vmatpush1.msra.mxu0 %v2923
        %2925 = vmatprep.subr.mxu0 0.0
        %v2926 = vand.u32 %v2129, 4294901760
        %2927 = vmatpush1.msra.mxu0 %v2926
        %2928 = vmatprep.subr.mxu0 0.0
        %v2929 = vand.u32 %v2130, 4294901760
        %2930 = vmatpush1.msra.mxu0 %v2929
        %2931 = vmatprep.subr.mxu0 0.0
        %v2932 = vand.u32 %v2131, 4294901760
        %2933 = vmatpush1.msra.mxu0 %v2932
        %2934 = vmatprep.subr.mxu0 0.0
        %v2935 = vand.u32 %v2132, 4294901760
        %2936 = vmatpush1.msra.mxu0 %v2935
        %2937 = vmatprep.subr.mxu0 0.0
        %v2938 = vand.u32 %v2133, 4294901760
        %2939 = vmatpush1.msra.mxu0 %v2938
        %2940 = vmatprep.subr.mxu0 0.0
        %v2941 = vand.u32 %v2134, 4294901760
        %2942 = vmatpush1.msra.mxu0 %v2941
        %2943 = vmatprep.subr.mxu0 0.0
        %v2944 = vand.u32 %v2135, 4294901760
        %2945 = vmatpush1.msra.mxu0 %v2944
        %2946 = vmatprep.subr.mxu0 0.0
        %v2947 = vand.u32 %v2136, 4294901760
        %2948 = vmatpush1.msra.mxu0 %v2947
        %2949 = vmatprep.subr.mxu0 0.0
        %v2950 = vand.u32 %v2137, 4294901760
        %2951 = vmatpush1.msra.mxu0 %v2950
        %2952 = vmatprep.subr.mxu0 0.0
        %v2953 = vand.u32 %v2138, 4294901760
        %2954 = vmatpush1.msra.mxu0 %v2953
        %2955 = vmatprep.subr.mxu0 0.0
        %v2956 = vand.u32 %v2139, 4294901760
        %2957 = vmatpush1.msra.mxu0 %v2956
        %2958 = vmatprep.subr.mxu0 0.0
        %v2959 = vand.u32 %v2140, 4294901760
        %2960 = vmatpush1.msra.mxu0 %v2959
        %2961 = vmatprep.subr.mxu0 0.0
        %v2962 = vand.u32 %v2141, 4294901760
        %2963 = vmatpush1.msra.mxu0 %v2962
        %2964 = vmatprep.subr.mxu0 0.0
        %v2965 = vand.u32 %v2142, 4294901760
        %2966 = vmatpush1.msra.mxu0 %v2965
        %2967 = vmatprep.subr.mxu0 0.0
        %v2968 = vand.u32 %v2143, 4294901760
        %2969 = vmatpush1.msra.mxu0 %v2968
        %2970 = vmatprep.subr.mxu0 0.0
        %v2971 = vand.u32 %v2144, 4294901760
        %2972 = vmatpush1.msra.mxu0 %v2971
        %2973 = vmatprep.subr.mxu0 0.0
        %v2974 = vand.u32 %v2145, 4294901760
        %2975 = vmatpush1.msra.mxu0 %v2974
        %2976 = vmatprep.subr.mxu0 0.0
        %v2977 = vand.u32 %v2146, 4294901760
        %2978 = vmatpush1.msra.mxu0 %v2977
        %2979 = vmatprep.subr.mxu0 0.0
        %v2980 = vand.u32 %v2147, 4294901760
        %2981 = vmatpush1.msra.mxu0 %v2980
        %2982 = vmatprep.subr.mxu0 0.0
        %v2983 = vand.u32 %v2148, 4294901760
        %2984 = vmatpush1.msra.mxu0 %v2983
        %2985 = vmatprep.subr.mxu0 0.0
        %v2986 = vand.u32 %v2149, 4294901760
        %2987 = vmatpush1.msra.mxu0 %v2986
        %2988 = vmatprep.subr.mxu0 0.0
        %v2989 = vand.u32 %v2150, 4294901760
        %2990 = vmatpush1.msra.mxu0 %v2989
        %2991 = vmatprep.subr.mxu0 0.0
        %v2992 = vand.u32 %v2151, 4294901760
        %2993 = vmatpush1.msra.mxu0 %v2992
        %2994 = vmatprep.subr.mxu0 0.0
        %v2995 = vand.u32 %v2152, 4294901760
        %2996 = vmatpush1.msra.mxu0 %v2995
        %2997 = vmatprep.subr.mxu0 0.0
        %v2998 = vand.u32 %v2153, 4294901760
        %2999 = vmatpush1.msra.mxu0 %v2998
        %3000 = vmatprep.subr.mxu0 0.0
        %v3001 = vand.u32 %v2154, 4294901760
        %3002 = vmatpush1.msra.mxu0 %v3001
        %3003 = vmatprep.subr.mxu0 0.0
        %v3004 = vand.u32 %v2155, 4294901760
        %3005 = vmatpush1.msra.mxu0 %v3004
        %3006 = vmatprep.subr.mxu0 0.0
        %v3007 = vand.u32 %v2156, 4294901760
        %3008 = vmatpush1.msra.mxu0 %v3007
        %3009 = vmatprep.subr.mxu0 0.0
        %v3010 = vand.u32 %v2157, 4294901760
        %3011 = vmatpush1.msra.mxu0 %v3010
        %v3012 = vand.u32 %v304, 4294901760
        %3013 = vmatprep.mubr.f32.mxu0 %v3012
        %v3014 = vand.u32 %v303, 4294901760
        %3015 = vmatmul.mubr.f32.gmra.mrb[0].mxu0 %v3014
        %v3016 = vpop.f32.mrb[0].mxu0
        %v3017 = vadd.f32 %v2913, %v3016
        %v3018 = vpop.f32.mrb[0].mxu0
        %3019 = vdwg.mxu0
        %3020 = vmatprep.subr.mxu0 0.0
        %v3021 = vand.u32 %v2125, 4294901760
        %3022 = vmatpush1.msra.mxu0 %v3021
        %3023 = vmatprep.subr.mxu0 0.0
        %3024 = vmatpush1.msra.mxu0 0.0
        %3025 = vmatprep.subr.mxu0 0.0
        %3026 = vmatpush1.msra.mxu0 0.0
        %3027 = vmatprep.subr.mxu0 0.0
        %3028 = vmatpush1.msra.mxu0 0.0
        %3029 = vmatprep.subr.mxu0 0.0
        %3030 = vmatpush1.msra.mxu0 0.0
        %3031 = vmatprep.subr.mxu0 0.0
        %3032 = vmatpush1.msra.mxu0 0.0
        %3033 = vmatprep.subr.mxu0 0.0
        %3034 = vmatpush1.msra.mxu0 0.0
        %3035 = vmatprep.subr.mxu0 0.0
        %3036 = vmatpush1.msra.mxu0 0.0
        %3037 = vmatprep.subr.mxu0 0.0
        %3038 = vmatpush1.msra.mxu0 0.0
        %3039 = vmatprep.subr.mxu0 0.0
        %3040 = vmatpush1.msra.mxu0 0.0
        %3041 = vmatprep.subr.mxu0 0.0
        %3042 = vmatpush1.msra.mxu0 0.0
        %3043 = vmatprep.subr.mxu0 0.0
        %3044 = vmatpush1.msra.mxu0 0.0
        %3045 = vmatprep.subr.mxu0 0.0
        %3046 = vmatpush1.msra.mxu0 0.0
        %3047 = vmatprep.subr.mxu0 0.0
        %3048 = vmatpush1.msra.mxu0 0.0
        %3049 = vmatprep.subr.mxu0 0.0
        %3050 = vmatpush1.msra.mxu0 0.0
        %3051 = vmatprep.subr.mxu0 0.0
        %3052 = vmatpush1.msra.mxu0 0.0
        %3053 = vmatprep.subr.mxu0 0.0
        %3054 = vmatpush1.msra.mxu0 0.0
        %3055 = vmatprep.subr.mxu0 0.0
        %3056 = vmatpush1.msra.mxu0 0.0
        %3057 = vmatprep.subr.mxu0 0.0
        %3058 = vmatpush1.msra.mxu0 0.0
        %3059 = vmatprep.subr.mxu0 0.0
        %3060 = vmatpush1.msra.mxu0 0.0
        %3061 = vmatprep.subr.mxu0 0.0
        %3062 = vmatpush1.msra.mxu0 0.0
        %3063 = vmatprep.subr.mxu0 0.0
        %3064 = vmatpush1.msra.mxu0 0.0
        %3065 = vmatprep.subr.mxu0 0.0
        %3066 = vmatpush1.msra.mxu0 0.0
        %3067 = vmatprep.subr.mxu0 0.0
        %3068 = vmatpush1.msra.mxu0 0.0
        %3069 = vmatprep.subr.mxu0 0.0
        %3070 = vmatpush1.msra.mxu0 0.0
        %3071 = vmatprep.subr.mxu0 0.0
        %3072 = vmatpush1.msra.mxu0 0.0
        %3073 = vmatprep.subr.mxu0 0.0
        %3074 = vmatpush1.msra.mxu0 0.0
        %3075 = vmatprep.subr.mxu0 0.0
        %3076 = vmatpush1.msra.mxu0 0.0
        %3077 = vmatprep.subr.mxu0 0.0
        %3078 = vmatpush1.msra.mxu0 0.0
        %3079 = vmatprep.subr.mxu0 0.0
        %3080 = vmatpush1.msra.mxu0 0.0
        %3081 = vmatprep.subr.mxu0 0.0
        %3082 = vmatpush1.msra.mxu0 0.0
        %3083 = vmatprep.subr.mxu0 0.0
        %3084 = vmatpush1.msra.mxu0 0.0
        %3085 = vmatprep.mubr.f32.mxu0 0.0
        %v3086 = vand.u32 %v374, 4294901760
        %v3087 = vsub.f32 %v374, %v3086
        %v3088 = vand.u32 %v3087, 4294901760
        %v3089 = vsub.f32 %v3087, %v3088
        %v3090 = vand.u32 %v3089, 4294901760
        %3091 = vmatmul.mubr.f32.gmra.mrb[0].mxu0 %v3090
        %v3092 = vpop.f32.mrb[0].mxu0
        %v3093 = vadd.f32 %v3017, %v3092
        %v3094 = vpop.f32.mrb[0].mxu0
        %3095 = vdwg.mxu0
        %3096 = vmatprep.subr.mxu0 0.0
        %v3097 = vand.u32 %v2125, 4294901760
        %v3098 = vsub.f32 %v2125, %v3097
        %v3099 = vand.u32 %v3098, 4294901760
        %v3100 = vsub.f32 %v3098, %v3099
        %v3101 = vand.u32 %v3100, 4294901760
        %3102 = vmatpush1.msra.mxu0 %v3101
        %3103 = vmatprep.subr.mxu0 0.0
        %3104 = vmatpush1.msra.mxu0 0.0
        %3105 = vmatprep.subr.mxu0 0.0
        %3106 = vmatpush1.msra.mxu0 0.0
        %3107 = vmatprep.subr.mxu0 0.0
        %3108 = vmatpush1.msra.mxu0 0.0
        %3109 = vmatprep.subr.mxu0 0.0
        %3110 = vmatpush1.msra.mxu0 0.0
        %3111 = vmatprep.subr.mxu0 0.0
        %3112 = vmatpush1.msra.mxu0 0.0
        %3113 = vmatprep.subr.mxu0 0.0
        %3114 = vmatpush1.msra.mxu0 0.0
        %3115 = vmatprep.subr.mxu0 0.0
        %3116 = vmatpush1.msra.mxu0 0.0
        %3117 = vmatprep.subr.mxu0 0.0
        %3118 = vmatpush1.msra.mxu0 0.0
        %3119 = vmatprep.subr.mxu0 0.0
        %3120 = vmatpush1.msra.mxu0 0.0
        %3121 = vmatprep.subr.mxu0 0.0
        %3122 = vmatpush1.msra.mxu0 0.0
        %3123 = vmatprep.subr.mxu0 0.0
        %3124 = vmatpush1.msra.mxu0 0.0
        %3125 = vmatprep.subr.mxu0 0.0
        %3126 = vmatpush1.msra.mxu0 0.0
        %3127 = vmatprep.subr.mxu0 0.0
        %3128 = vmatpush1.msra.mxu0 0.0
        %3129 = vmatprep.subr.mxu0 0.0
        %3130 = vmatpush1.msra.mxu0 0.0
        %3131 = vmatprep.subr.mxu0 0.0
        %3132 = vmatpush1.msra.mxu0 0.0
        %3133 = vmatprep.subr.mxu0 0.0
        %3134 = vmatpush1.msra.mxu0 0.0
        %3135 = vmatprep.subr.mxu0 0.0
        %3136 = vmatpush1.msra.mxu0 0.0
        %3137 = vmatprep.subr.mxu0 0.0
        %3138 = vmatpush1.msra.mxu0 0.0
        %3139 = vmatprep.subr.mxu0 0.0
        %3140 = vmatpush1.msra.mxu0 0.0
        %3141 = vmatprep.subr.mxu0 0.0
        %3142 = vmatpush1.msra.mxu0 0.0
        %3143 = vmatprep.subr.mxu0 0.0
        %3144 = vmatpush1.msra.mxu0 0.0
        %3145 = vmatprep.subr.mxu0 0.0
        %3146 = vmatpush1.msra.mxu0 0.0
        %3147 = vmatprep.subr.mxu0 0.0
        %3148 = vmatpush1.msra.mxu0 0.0
        %3149 = vmatprep.subr.mxu0 0.0
        %3150 = vmatpush1.msra.mxu0 0.0
        %3151 = vmatprep.subr.mxu0 0.0
        %3152 = vmatpush1.msra.mxu0 0.0
        %3153 = vmatprep.subr.mxu0 0.0
        %3154 = vmatpush1.msra.mxu0 0.0
        %3155 = vmatprep.subr.mxu0 0.0
        %3156 = vmatpush1.msra.mxu0 0.0
        %3157 = vmatprep.subr.mxu0 0.0
        %3158 = vmatpush1.msra.mxu0 0.0
        %3159 = vmatprep.subr.mxu0 0.0
        %3160 = vmatpush1.msra.mxu0 0.0
        %3161 = vmatprep.subr.mxu0 0.0
        %3162 = vmatpush1.msra.mxu0 0.0
        %3163 = vmatprep.subr.mxu0 0.0
        %3164 = vmatpush1.msra.mxu0 0.0
        %3165 = vmatprep.mubr.f32.mxu0 0.0
        %v3166 = vand.u32 %v374, 4294901760
        %3167 = vmatmul.mubr.f32.gmra.mrb[0].mxu0 %v3166
        %v3168 = vpop.f32.mrb[0].mxu0
        %v3169 = vadd.f32 %v3093, %v3168
        %v3170 = vpop.f32.mrb[0].mxu0
        %3171 = vdwg.mxu0
        %3172 = vmatprep.subr.mxu0 0.0
        %v3173 = vand.u32 %v2125, 4294901760
        %v3174 = vsub.f32 %v2125, %v3173
        %3175 = vmatpush1.msra.mxu0 %v3174
        %3176 = vmatprep.subr.mxu0 0.0
        %3177 = vmatpush1.msra.mxu0 0.0
        %3178 = vmatprep.subr.mxu0 0.0
        %3179 = vmatpush1.msra.mxu0 0.0
        %3180 = vmatprep.subr.mxu0 0.0
        %3181 = vmatpush1.msra.mxu0 0.0
        %3182 = vmatprep.subr.mxu0 0.0
        %3183 = vmatpush1.msra.mxu0 0.0
        %3184 = vmatprep.subr.mxu0 0.0
        %3185 = vmatpush1.msra.mxu0 0.0
        %3186 = vmatprep.subr.mxu0 0.0
        %3187 = vmatpush1.msra.mxu0 0.0
        %3188 = vmatprep.subr.mxu0 0.0
        %3189 = vmatpush1.msra.mxu0 0.0
        %3190 = vmatprep.subr.mxu0 0.0
        %3191 = vmatpush1.msra.mxu0 0.0
        %3192 = vmatprep.subr.mxu0 0.0
        %3193 = vmatpush1.msra.mxu0 0.0
        %3194 = vmatprep.subr.mxu0 0.0
        %3195 = vmatpush1.msra.mxu0 0.0
        %3196 = vmatprep.subr.mxu0 0.0
        %3197 = vmatpush1.msra.mxu0 0.0
        %3198 = vmatprep.subr.mxu0 0.0
        %3199 = vmatpush1.msra.mxu0 0.0
        %3200 = vmatprep.subr.mxu0 0.0
        %3201 = vmatpush1.msra.mxu0 0.0
        %3202 = vmatprep.subr.mxu0 0.0
        %3203 = vmatpush1.msra.mxu0 0.0
        %3204 = vmatprep.subr.mxu0 0.0
        %3205 = vmatpush1.msra.mxu0 0.0
        %3206 = vmatprep.subr.mxu0 0.0
        %3207 = vmatpush1.msra.mxu0 0.0
        %3208 = vmatprep.subr.mxu0 0.0
        %3209 = vmatpush1.msra.mxu0 0.0
        %3210 = vmatprep.subr.mxu0 0.0
        %3211 = vmatpush1.msra.mxu0 0.0
        %3212 = vmatprep.subr.mxu0 0.0
        %3213 = vmatpush1.msra.mxu0 0.0
        %3214 = vmatprep.subr.mxu0 0.0
        %3215 = vmatpush1.msra.mxu0 0.0
        %3216 = vmatprep.subr.mxu0 0.0
        %3217 = vmatpush1.msra.mxu0 0.0
        %3218 = vmatprep.subr.mxu0 0.0
        %3219 = vmatpush1.msra.mxu0 0.0
        %3220 = vmatprep.subr.mxu0 0.0
        %3221 = vmatpush1.msra.mxu0 0.0
        %3222 = vmatprep.subr.mxu0 0.0
        %3223 = vmatpush1.msra.mxu0 0.0
        %3224 = vmatprep.subr.mxu0 0.0
        %3225 = vmatpush1.msra.mxu0 0.0
        %3226 = vmatprep.subr.mxu0 0.0
        %3227 = vmatpush1.msra.mxu0 0.0
        %3228 = vmatprep.subr.mxu0 0.0
        %3229 = vmatpush1.msra.mxu0 0.0
        %3230 = vmatprep.subr.mxu0 0.0
        %3231 = vmatpush1.msra.mxu0 0.0
        %3232 = vmatprep.subr.mxu0 0.0
        %3233 = vmatpush1.msra.mxu0 0.0
        %3234 = vmatprep.subr.mxu0 0.0
        %3235 = vmatpush1.msra.mxu0 0.0
        %3236 = vmatprep.subr.mxu0 0.0
        %3237 = vmatpush1.msra.mxu0 0.0
        %3238 = vmatprep.mubr.f32.mxu0 0.0
        %v3239 = vand.u32 %v374, 4294901760
        %v3240 = vsub.f32 %v374, %v3239
        %3241 = vmatmul.mubr.f32.gmra.mrb[0].mxu0 %v3240
        %v3242 = vpop.f32.mrb[0].mxu0
        %v3243 = vadd.f32 %v3169, %v3242
        %v3244 = vpop.f32.mrb[0].mxu0
        %3245 = vdwg.mxu0
        %3246 = vmatprep.subr.mxu0 0.0
        %v3247 = vand.u32 %v2125, 4294901760
        %3248 = vmatpush1.msra.mxu0 %v3247
        %3249 = vmatprep.subr.mxu0 0.0
        %3250 = vmatpush1.msra.mxu0 0.0
        %3251 = vmatprep.subr.mxu0 0.0
        %3252 = vmatpush1.msra.mxu0 0.0
        %3253 = vmatprep.subr.mxu0 0.0
        %3254 = vmatpush1.msra.mxu0 0.0
        %3255 = vmatprep.subr.mxu0 0.0
        %3256 = vmatpush1.msra.mxu0 0.0
        %3257 = vmatprep.subr.mxu0 0.0
        %3258 = vmatpush1.msra.mxu0 0.0
        %3259 = vmatprep.subr.mxu0 0.0
        %3260 = vmatpush1.msra.mxu0 0.0
        %3261 = vmatprep.subr.mxu0 0.0
        %3262 = vmatpush1.msra.mxu0 0.0
        %3263 = vmatprep.subr.mxu0 0.0
        %3264 = vmatpush1.msra.mxu0 0.0
        %3265 = vmatprep.subr.mxu0 0.0
        %3266 = vmatpush1.msra.mxu0 0.0
        %3267 = vmatprep.subr.mxu0 0.0
        %3268 = vmatpush1.msra.mxu0 0.0
        %3269 = vmatprep.subr.mxu0 0.0
        %3270 = vmatpush1.msra.mxu0 0.0
        %3271 = vmatprep.subr.mxu0 0.0
        %3272 = vmatpush1.msra.mxu0 0.0
        %3273 = vmatprep.subr.mxu0 0.0
        %3274 = vmatpush1.msra.mxu0 0.0
        %3275 = vmatprep.subr.mxu0 0.0
        %3276 = vmatpush1.msra.mxu0 0.0
        %3277 = vmatprep.subr.mxu0 0.0
        %3278 = vmatpush1.msra.mxu0 0.0
        %3279 = vmatprep.subr.mxu0 0.0
        %3280 = vmatpush1.msra.mxu0 0.0
        %3281 = vmatprep.subr.mxu0 0.0
        %3282 = vmatpush1.msra.mxu0 0.0
        %3283 = vmatprep.subr.mxu0 0.0
        %3284 = vmatpush1.msra.mxu0 0.0
        %3285 = vmatprep.subr.mxu0 0.0
        %3286 = vmatpush1.msra.mxu0 0.0
        %3287 = vmatprep.subr.mxu0 0.0
        %3288 = vmatpush1.msra.mxu0 0.0
        %3289 = vmatprep.subr.mxu0 0.0
        %3290 = vmatpush1.msra.mxu0 0.0
        %3291 = vmatprep.subr.mxu0 0.0
        %3292 = vmatpush1.msra.mxu0 0.0
        %3293 = vmatprep.subr.mxu0 0.0
        %3294 = vmatpush1.msra.mxu0 0.0
        %3295 = vmatprep.subr.mxu0 0.0
        %3296 = vmatpush1.msra.mxu0 0.0
        %3297 = vmatprep.subr.mxu0 0.0
        %3298 = vmatpush1.msra.mxu0 0.0
        %3299 = vmatprep.subr.mxu0 0.0
        %3300 = vmatpush1.msra.mxu0 0.0
        %3301 = vmatprep.subr.mxu0 0.0
        %3302 = vmatpush1.msra.mxu0 0.0
        %3303 = vmatprep.subr.mxu0 0.0
        %3304 = vmatpush1.msra.mxu0 0.0
        %3305 = vmatprep.subr.mxu0 0.0
        %3306 = vmatpush1.msra.mxu0 0.0
        %3307 = vmatprep.subr.mxu0 0.0
        %3308 = vmatpush1.msra.mxu0 0.0
        %3309 = vmatprep.subr.mxu0 0.0
        %3310 = vmatpush1.msra.mxu0 0.0
        %3311 = vmatprep.mubr.f32.mxu0 0.0
        %v3312 = vand.u32 %v374, 4294901760
        %v3313 = vsub.f32 %v374, %v3312
        %v3314 = vand.u32 %v3313, 4294901760
        %3315 = vmatmul.mubr.f32.gmra.mrb[0].mxu0 %v3314
        %v3316 = vpop.f32.mrb[0].mxu0
        %v3317 = vadd.f32 %v3243, %v3316
        %v3318 = vpop.f32.mrb[0].mxu0
        %3319 = vdwg.mxu0
        %3320 = vmatprep.subr.mxu0 0.0
        %v3321 = vand.u32 %v2125, 4294901760
        %v3322 = vsub.f32 %v2125, %v3321
        %v3323 = vand.u32 %v3322, 4294901760
        %3324 = vmatpush1.msra.mxu0 %v3323
        %3325 = vmatprep.subr.mxu0 0.0
        %3326 = vmatpush1.msra.mxu0 0.0
        %3327 = vmatprep.subr.mxu0 0.0
        %3328 = vmatpush1.msra.mxu0 0.0
        %3329 = vmatprep.subr.mxu0 0.0
        %3330 = vmatpush1.msra.mxu0 0.0
        %3331 = vmatprep.subr.mxu0 0.0
        %3332 = vmatpush1.msra.mxu0 0.0
        %3333 = vmatprep.subr.mxu0 0.0
        %3334 = vmatpush1.msra.mxu0 0.0
        %3335 = vmatprep.subr.mxu0 0.0
        %3336 = vmatpush1.msra.mxu0 0.0
        %3337 = vmatprep.subr.mxu0 0.0
        %3338 = vmatpush1.msra.mxu0 0.0
        %3339 = vmatprep.subr.mxu0 0.0
        %3340 = vmatpush1.msra.mxu0 0.0
        %3341 = vmatprep.subr.mxu0 0.0
        %3342 = vmatpush1.msra.mxu0 0.0
        %3343 = vmatprep.subr.mxu0 0.0
        %3344 = vmatpush1.msra.mxu0 0.0
        %3345 = vmatprep.subr.mxu0 0.0
        %3346 = vmatpush1.msra.mxu0 0.0
        %3347 = vmatprep.subr.mxu0 0.0
        %3348 = vmatpush1.msra.mxu0 0.0
        %3349 = vmatprep.subr.mxu0 0.0
        %3350 = vmatpush1.msra.mxu0 0.0
        %3351 = vmatprep.subr.mxu0 0.0
        %3352 = vmatpush1.msra.mxu0 0.0
        %3353 = vmatprep.subr.mxu0 0.0
        %3354 = vmatpush1.msra.mxu0 0.0
        %3355 = vmatprep.subr.mxu0 0.0
        %3356 = vmatpush1.msra.mxu0 0.0
        %3357 = vmatprep.subr.mxu0 0.0
        %3358 = vmatpush1.msra.mxu0 0.0
        %3359 = vmatprep.subr.mxu0 0.0
        %3360 = vmatpush1.msra.mxu0 0.0
        %3361 = vmatprep.subr.mxu0 0.0
        %3362 = vmatpush1.msra.mxu0 0.0
        %3363 = vmatprep.subr.mxu0 0.0
        %3364 = vmatpush1.msra.mxu0 0.0
        %3365 = vmatprep.subr.mxu0 0.0
        %3366 = vmatpush1.msra.mxu0 0.0
        %3367 = vmatprep.subr.mxu0 0.0
        %3368 = vmatpush1.msra.mxu0 0.0
        %3369 = vmatprep.subr.mxu0 0.0
        %3370 = vmatpush1.msra.mxu0 0.0
        %3371 = vmatprep.subr.mxu0 0.0
        %3372 = vmatpush1.msra.mxu0 0.0
        %3373 = vmatprep.subr.mxu0 0.0
        %3374 = vmatpush1.msra.mxu0 0.0
        %3375 = vmatprep.subr.mxu0 0.0
        %3376 = vmatpush1.msra.mxu0 0.0
        %3377 = vmatprep.subr.mxu0 0.0
        %3378 = vmatpush1.msra.mxu0 0.0
        %3379 = vmatprep.subr.mxu0 0.0
        %3380 = vmatpush1.msra.mxu0 0.0
        %3381 = vmatprep.subr.mxu0 0.0
        %3382 = vmatpush1.msra.mxu0 0.0
        %3383 = vmatprep.subr.mxu0 0.0
        %3384 = vmatpush1.msra.mxu0 0.0
        %3385 = vmatprep.subr.mxu0 0.0
        %3386 = vmatpush1.msra.mxu0 0.0
        %3387 = vmatprep.mubr.f32.mxu0 0.0
        %v3388 = vand.u32 %v374, 4294901760
        %3389 = vmatmul.mubr.f32.gmra.mrb[0].mxu0 %v3388
        %v3390 = vpop.f32.mrb[0].mxu0
        %v3391 = vadd.f32 %v3317, %v3390
        %v3392 = vpop.f32.mrb[0].mxu0
        %3393 = vdwg.mxu0
        %3394 = vmatprep.subr.mxu0 0.0
        %v3395 = vand.u32 %v2125, 4294901760
        %3396 = vmatpush1.msra.mxu0 %v3395
        %3397 = vmatprep.subr.mxu0 0.0
        %3398 = vmatpush1.msra.mxu0 0.0
        %3399 = vmatprep.subr.mxu0 0.0
        %3400 = vmatpush1.msra.mxu0 0.0
        %3401 = vmatprep.subr.mxu0 0.0
        %3402 = vmatpush1.msra.mxu0 0.0
        %3403 = vmatprep.subr.mxu0 0.0
        %3404 = vmatpush1.msra.mxu0 0.0
        %3405 = vmatprep.subr.mxu0 0.0
        %3406 = vmatpush1.msra.mxu0 0.0
        %3407 = vmatprep.subr.mxu0 0.0
        %3408 = vmatpush1.msra.mxu0 0.0
        %3409 = vmatprep.subr.mxu0 0.0
        %3410 = vmatpush1.msra.mxu0 0.0
        %3411 = vmatprep.subr.mxu0 0.0
        %3412 = vmatpush1.msra.mxu0 0.0
        %3413 = vmatprep.subr.mxu0 0.0
        %3414 = vmatpush1.msra.mxu0 0.0
        %3415 = vmatprep.subr.mxu0 0.0
        %3416 = vmatpush1.msra.mxu0 0.0
        %3417 = vmatprep.subr.mxu0 0.0
        %3418 = vmatpush1.msra.mxu0 0.0
        %3419 = vmatprep.subr.mxu0 0.0
        %3420 = vmatpush1.msra.mxu0 0.0
        %3421 = vmatprep.subr.mxu0 0.0
        %3422 = vmatpush1.msra.mxu0 0.0
        %3423 = vmatprep.subr.mxu0 0.0
        %3424 = vmatpush1.msra.mxu0 0.0
        %3425 = vmatprep.subr.mxu0 0.0
        %3426 = vmatpush1.msra.mxu0 0.0
        %3427 = vmatprep.subr.mxu0 0.0
        %3428 = vmatpush1.msra.mxu0 0.0
        %3429 = vmatprep.subr.mxu0 0.0
        %3430 = vmatpush1.msra.mxu0 0.0
        %3431 = vmatprep.subr.mxu0 0.0
        %3432 = vmatpush1.msra.mxu0 0.0
        %3433 = vmatprep.subr.mxu0 0.0
        %3434 = vmatpush1.msra.mxu0 0.0
        %3435 = vmatprep.subr.mxu0 0.0
        %3436 = vmatpush1.msra.mxu0 0.0
        %3437 = vmatprep.subr.mxu0 0.0
        %3438 = vmatpush1.msra.mxu0 0.0
        %3439 = vmatprep.subr.mxu0 0.0
        %3440 = vmatpush1.msra.mxu0 0.0
        %3441 = vmatprep.subr.mxu0 0.0
        %3442 = vmatpush1.msra.mxu0 0.0
        %3443 = vmatprep.subr.mxu0 0.0
        %3444 = vmatpush1.msra.mxu0 0.0
        %3445 = vmatprep.subr.mxu0 0.0
        %3446 = vmatpush1.msra.mxu0 0.0
        %3447 = vmatprep.subr.mxu0 0.0
        %3448 = vmatpush1.msra.mxu0 0.0
        %3449 = vmatprep.subr.mxu0 0.0
        %3450 = vmatpush1.msra.mxu0 0.0
        %3451 = vmatprep.subr.mxu0 0.0
        %3452 = vmatpush1.msra.mxu0 0.0
        %3453 = vmatprep.subr.mxu0 0.0
        %3454 = vmatpush1.msra.mxu0 0.0
        %3455 = vmatprep.subr.mxu0 0.0
        %3456 = vmatpush1.msra.mxu0 0.0
        %3457 = vmatprep.subr.mxu0 0.0
        %3458 = vmatpush1.msra.mxu0 0.0
        %3459 = vmatprep.mubr.f32.mxu0 0.0
        %v3460 = vand.u32 %v374, 4294901760
        %3461 = vmatmul.mubr.f32.gmra.mrb[0].mxu0 %v3460
        %v3462 = vpop.f32.mrb[0].mxu0
        %v3463 = vadd.f32 %v3391, %v3462
        %v3464 = vpop.f32.mrb[0].mxu0
        %3465 = vdwg.mxu0
        %3466 = vst.msk [vmem:[#allocation2] sm:$0xff] %vm372, %v3463
        %s3467 = sld [smem:[#allocation3]]
        %s3468 = ssub.f32 0.0, %s3467
        %v3469 = vstv %s3468
        %v3470 = vmax.f32 %v3469, %v2121
        %v3471 = vmax.f32 %v3469, %v2123
        %v3472 = vstv %s3467
        %v3473 = vmin.f32 %v3472, %v3470
        %v3474 = vmin.f32 %v3472, %v3471
        %3475 = vst [vmem:[%s285] sm:$0xff] %v3473
        %3476 = vst [vmem:[%s285 + $0x8] sm:$0xff] %v3474
        %s3477 = sand.u32 %s177, 1
        %s3478 = scalar_lea.sflag [#allocation6], %s3477
        %s3479 = sand.u32 %s177, 1
        %s3480 = smul.addr %s3479, 16
        %s3481 = scalar_lea.vmem [#allocation7], %s3480
        // Predicated region
        $region53: #{tpu_custom_call.1} parent=43 // pred_check
          %p3482 = pneg %p187
        $region54: #{tpu_custom_call.1} parent=43 // pred_check_branch
          %3484 = sbr.rel (%p3482) target = $region56
        $region55: #{tpu_custom_call.1} parent=43 // pred_region
          %s3485 = smul.u32 2, %s27
          %s3487 = ssub.s32 256, 256
          %3488 = vsyncadd %s3478, %s3487
          %s3489 = smul.addr %s26, 4
          %s3490 = sadd.s32 %s3485, %s3489
          %s3491 = smul.addr %s3490, 128
          %s3492 = scalar_lea.hbm %s6, %s3491
          %s3494 = sshll.u32 %s3481, 4
          %s3495 = int_to_ptr.vmem [resolvable:$true] %s3494
          %3497 = dma.vmem_to_hbm [thread:$0]  %s3495, 256, %s3492, %s3478
        $region56: #{tpu_custom_call.1} parent=43 // pred_fallthru
          _
      $region44: #{tpu_custom_call.1} parent=5 // pred_fallthru
        _
      %p3498 = scmp.le.s32.totalorder 2, %s17
      // Predicated region
      $region57: #{tpu_custom_call.1} parent=5 // pred_check
        %p3499 = pneg %p3498
      $region58: #{tpu_custom_call.1} parent=5 // pred_check_branch
        %3501 = sbr.rel (%p3499) target = $region60
      $region59: #{tpu_custom_call.1} parent=5 // pred_region
        %s3502 = ssub.s32 %s17, 2
        // Predicated region
        $region61: #{tpu_custom_call.1} parent=59 // pred_check
          %p3503 = pneg %p193
        $region62: #{tpu_custom_call.1} parent=59 // pred_check_branch
          %3505 = sbr.rel (%p3503) target = $region64
        $region63: #{tpu_custom_call.1} parent=59 // pred_region
          %s3506 = sand.u32 %s178, 1
          %s3507 = scalar_lea.sflag [#allocation6], %s3506
          %s3508 = sand.u32 %s178, 1
          %s3509 = smul.addr %s3508, 16
          %s3510 = scalar_lea.vmem [#allocation7], %s3509
          %3511 = dma.done %s3507, 256
        $region64: #{tpu_custom_call.1} parent=59 // pred_fallthru
          _
      $region60: #{tpu_custom_call.1} parent=5 // pred_fallthru
        _
    $region6: #{tpu_custom_call.1} parent=1 // loop_footer
      %s21 = sadd.s32 1, %s17
    $region7: #{tpu_custom_call.1} parent=1 // loop_footer_branch
      %16 = sbr.rel target = $region3
    $region8: #{tpu_custom_call.1} parent=1 // loop_exit
      _
    %3512 = vsyncpa [#allocation5], 1
    %s3513 = scalar_lea.sflag [#allocation5], 1
    %3514 = vsyncpa %s3513, 1
    %3515 = vsyncpa [#allocation6], 1
    %s3516 = scalar_lea.sflag [#allocation6], 1
    %3517 = vsyncpa %s3516, 1

</llo_original>
